<compile_context>
chip_gen: v5e
topology: v5e:2x2
jax: 0.10.0
libtpu: 0.0.40
codegen_flags: <defaults>
</compile_context>

<pallas_src>
import functools

import numpy as np
import jax
import jax.numpy as jnp
from jax.experimental import pallas as pl
from jax.experimental.pallas import tpu as pltpu

# CombinedLoss(...) defaults from the PyTorch module.
DICE_WEIGHT = 1.0
FOCAL_WEIGHT = 0.5
BOUNDARY_WEIGHT = 0.2
SMOOTH = 1e-5
FOCAL_GAMMA = 2.0          # gamma == 2 is hard-coded as a square below
FOCAL_ALPHA = 0.25
LOG_EPS = 1e-7

# ~4 MiB of logits per tile -> <= ~10 MiB with double buffering + scratch: safe on
# v5e/v6e (128 MiB) and v7x (64 MiB physical VMEM).
_LOGITS_BLOCK_BUDGET = 4 * 1024 * 1024


def _choose_d_tile(C, D, HW):
    """Largest multiple-of-8 divisor of D whose logits tile fits the VMEM budget."""
    rows = max(8, _LOGITS_BLOCK_BUDGET // max(1, C * HW * 4))
    if D <= rows or D % 8 != 0:
        return D
    best = D
    for cand in range(8, D, 8):
        if D % cand == 0 and cand <= rows:
            best = cand
    return best


def _make_kernel(C, TD, H, W, HW, PAD, K):
    def kernel(logits_ref, targets_ref, out_ref, carry_p_ref, carry_t_ref,
               ext_p_ref, ext_t_ref):
        # logits_ref: (1, C, TD, HW) f32    targets_ref: (1, TD, HW) i32
        # out_ref:    (1, 1, 1, K)  f32     (per-tile partial sums, reduced in wrapper)
        k = pl.program_id(1)
        n_k = pl.num_programs(1)

        # New batch element's D sweep: reset the D-halo carry and the zero borders of
        # the lane-padded Laplacian staging buffers (borders are never written later).
        @pl.when(k == 0)
        def _():
            carry_p_ref[...] = jnp.zeros_like(carry_p_ref)
            carry_t_ref[...] = jnp.zeros_like(carry_t_ref)
            ext_p_ref[...] = jnp.zeros_like(ext_p_ref)
            ext_t_ref[...] = jnp.zeros_like(ext_t_ref)

        tgt = targets_ref[0]                                    # (TD, HW) int32

        # Softmax statistics; only m / inv_denom stay live across the class loop.
        m = logits_ref[0, 0]
        for c in range(1, C):
            m = jnp.maximum(m, logits_ref[0, c])
        denom = jnp.exp(logits_ref[0, 0] - m)
        for c in range(1, C):
            denom = denom + jnp.exp(logits_ref[0, c] - m)
        inv_denom = pl.reciprocal(denom, approx=True)           # EUP slot, ~2^-12 rel err

        # W-direction seam masks for the flattened H*W lane axis (H direction needs no
        # mask: the staging buffer's zero border already provides the zero padding).
        lane = jax.lax.broadcasted_iota(jnp.int32, (1, HW), 1)
        w_pos = lane % W
        mask_wl = (w_pos > 0).astype(jnp.float32)
        mask_wr = (w_pos < W - 1).astype(jnp.float32)

        def lap_abs(ext_ref, row0, nrows, fwd):
            """|zero-padded 3-D Laplacian| for staging rows [row0, row0+nrows).

            Staging row r <-> global D slice d0 - 2 + r; the flattened H*W data sits at
            lane offset PAD inside a zero border, so all H/W neighbours are static
            shifted slice reads.  `fwd` is the +D neighbour slab (0.0 past the volume).
            """
            center = ext_ref[row0:row0 + nrows, PAD:PAD + HW]
            nbr = ext_ref[row0 - 1:row0 - 1 + nrows, PAD:PAD + HW] + fwd          # D-/D+
            nbr = nbr + ext_ref[row0:row0 + nrows, PAD - W:PAD - W + HW]          # H-
            nbr = nbr + ext_ref[row0:row0 + nrows, PAD + W:PAD + W + HW]          # H+
            nbr = nbr + ext_ref[row0:row0 + nrows, PAD - 1:PAD - 1 + HW] * mask_wl
            nbr = nbr + ext_ref[row0:row0 + nrows, PAD + 1:PAD + 1 + HW] * mask_wr
            return jnp.abs(nbr - 6.0 * center)

        # Laplacian row i of this tile corresponds to global d = d0 - 1 + i; only the
        # non-existent d = -1 row of the very first D tile must be masked out.
        d0 = k * TD
        d_iota = jax.lax.broadcasted_iota(jnp.int32, (TD, 1), 0)
        dmask = ((d0 - 1 + d_iota) >= 0).astype(jnp.float32)
        is_last = k == n_k - 1

        focal_acc = jnp.float32(0.0)
        boundary_acc = jnp.float32(0.0)
        stats = []                                              # K scalars, in order

        for c in range(C):
            p_c = jnp.exp(logits_ref[0, c] - m) * inv_denom     # (TD, HW)
            t_bool = tgt == c
            t_c = t_bool.astype(jnp.float32)

            # Dice partial sums (global reduction over B and D tiles in the wrapper).
            stats.append(jnp.sum(jnp.where(t_bool, p_c, 0.0)))  # intersection
            stats.append(jnp.sum(p_c))
            stats.append(jnp.sum(t_c))

            # Focal: pt folds fg/bg so exactly one log per class per voxel is needed.
            pt = jnp.where(t_bool, p_c, 1.0 - p_c)
            alpha_w = jnp.where(t_bool, FOCAL_ALPHA, 1.0 - FOCAL_ALPHA)
            one_m_pt = 1.0 - pt
            focal_acc = focal_acc + jnp.sum(
                alpha_w * one_m_pt * one_m_pt * (-jnp.log(pt + LOG_EPS)))

            if c >= 1:
                # TODO(synk): the reference F.conv2d call is shape-inconsistent
                # (1-channel slice vs (1,3,3,3) kernel) and would raise in PyTorch; as
                # before we implement its intent: a zero-padded 3-D Laplacian
                # (center -6, six face neighbours) over D, H, W followed by MSE.
                # Stage [2-slice D carry ; current tile] into the padded scratch.
                ext_p_ref[0:2, PAD:PAD + HW] = carry_p_ref[c]
                ext_t_ref[0:2, PAD:PAD + HW] = carry_t_ref[c]
                ext_p_ref[2:TD + 2, PAD:PAD + HW] = p_c
                ext_t_ref[2:TD + 2, PAD:PAD + HW] = t_c
                carry_p_ref[c] = p_c[TD - 2:, :]
                carry_t_ref[c] = t_c[TD - 2:, :]

                # Staging rows 1..TD <-> global slices d0-1 .. d0+TD-2; their +D
                # neighbour slab is exactly the current tile (p_c / t_c).
                lp = lap_abs(ext_p_ref, 1, TD, p_c)
                lt = lap_abs(ext_t_ref, 1, TD, t_c)
                diff = lp - lt
                boundary_acc = boundary_acc + jnp.sum(diff * diff * dmask)

                # The volume's final D slice (+D neighbour is zero padding); computed
                # every tile, counted only on the last D tile.
                lp_e = lap_abs(ext_p_ref, TD + 1, 1, 0.0)
                lt_e = lap_abs(ext_t_ref, TD + 1, 1, 0.0)
                de = lp_e - lt_e
                boundary_acc = boundary_acc + jnp.where(is_last, jnp.sum(de * de), 0.0)

        stats.append(focal_acc)
        stats.append(boundary_acc)

        # Pack the K partial sums into one row and store the whole output block.
        lane_k = jax.lax.broadcasted_iota(jnp.int32, (1, K), 1)
        row = jnp.zeros((1, K), jnp.float32)
        for i, v in enumerate(stats):
            row = row + jnp.where(lane_k == i, v, 0.0)
        out_ref[0, 0] = row

    return kernel


@functools.partial(jax.jit, static_argnames=("d_tile",))
def combined_loss(logits, targets, d_tile=None):
    """logits: (B, C, D, H, W) float; targets: (B, D, H, W) int.

    Returns (total, stats) as JAX scalars (jit-friendly; convert to Python floats
    outside if needed).
    """
    B, C, D, H, W = logits.shape
    HW = H * W
    if D < 2:
        raise ValueError("combined_loss: D must be >= 2")

    # Free reshapes (trailing-dim collapse only) - no transpose, no extra HBM traffic.
    logits4 = logits.astype(jnp.float32).reshape(B, C, D, HW)
    # Targets kept int32 for lowering safety; int8 (and bf16 logits) would cut HBM
    # traffic further on v6e/v7x.
    targets3 = targets.astype(jnp.int32).reshape(B, D, HW)

    TD = _choose_d_tile(C, D, HW) if d_tile is None else int(d_tile)
    if D % TD != 0 or TD < 2 or (TD != D and TD % 8 != 0):
        raise ValueError(f"invalid d_tile={TD} for D={D}: need a divisor of D that is "
                         f"a multiple of 8 (or D itself), >= 2")
    nD = D // TD
    PAD = ((W + 127) // 128) * 128      # zero border width of the Laplacian staging buf
    K = 3 * C + 2

    kernel = _make_kernel(C, TD, H, W, HW, PAD, K)

    partials = pl.pallas_call(
        kernel,
        out_shape=jax.ShapeDtypeStruct((B, nD, 1, K), jnp.float32),
        grid_spec=pltpu.PrefetchScalarGridSpec(
            num_scalar_prefetch=0,
            grid=(B, nD),
            in_specs=[
                pl.BlockSpec((1, C, TD, HW), lambda b, k: (b, 0, k, 0)),
                pl.BlockSpec((1, TD, HW), lambda b, k: (b, k, 0)),
            ],
            out_specs=pl.BlockSpec((1, 1, 1, K), lambda b, k: (b, k, 0, 0)),
            scratch_shapes=[
                pltpu.VMEM((C, 2, HW), jnp.float32),              # prob D-halo carry
                pltpu.VMEM((C, 2, HW), jnp.float32),              # one-hot D-halo carry
                pltpu.VMEM((TD + 2, HW + 2 * PAD), jnp.float32),  # prob staging (padded)
                pltpu.VMEM((TD + 2, HW + 2 * PAD), jnp.float32),  # one-hot staging
            ],
        ),
        compiler_params=pltpu.CompilerParams(
            # B tiles are independent -> megacore-parallel on v7x; the D axis carries
            # the boundary halo and must stay sequential.
            dimension_semantics=("parallel", "arbitrary"),
            vmem_limit_bytes=48 * 1024 * 1024,
        ),
    )(logits4, targets3)

    totals = jnp.sum(partials, axis=(0, 1, 2))                   # (K,)
    inter = totals[0:3 * C:3]
    sum_p = totals[1:3 * C:3]
    sum_t = totals[2:3 * C:3]
    dice_coef = (2.0 * inter + SMOOTH) / (sum_p + sum_t + SMOOTH)
    dice = 1.0 - jnp.mean(dice_coef)

    n_vox = B * D * H * W
    focal = totals[3 * C] / float(C * n_vox)
    if C > 1:
        boundary = totals[3 * C + 1] / float(n_vox * (C - 1))
    else:
        boundary = jnp.float32(0.0)                              # guard C == 1

    combined = DICE_WEIGHT * dice + FOCAL_WEIGHT * focal + BOUNDARY_WEIGHT * boundary
    stats = {"dice_loss": dice, "focal_loss": focal,
             "boundary_loss": boundary, "total_loss": combined}
    return combined, stats


def _reference(logits, targets):
    """Plain-JAX reference of the same math for verification."""
    B, C, D, H, W = logits.shape
    probs = jax.nn.softmax(logits, axis=1)
    onehot = jnp.transpose(jax.nn.one_hot(targets, C, dtype=jnp.float32), (0, 4, 1, 2, 3))

    inter = jnp.sum(probs * onehot, axis=(0, 2, 3, 4))
    card = jnp.sum(probs + onehot, axis=(0, 2, 3, 4))
    dice = 1.0 - jnp.mean((2.0 * inter + SMOOTH) / (card + SMOOTH))

    pt = onehot * probs + (1.0 - onehot) * (1.0 - probs)
    fw = (1.0 - pt) ** 2 * (FOCAL_ALPHA * onehot + (1.0 - FOCAL_ALPHA) * (1.0 - onehot))
    focal = jnp.mean(fw * (-jnp.log(pt + LOG_EPS)))

    def lap(x):  # (B, D, H, W), zero-padded 3-D Laplacian
        xp = jnp.pad(x, ((0, 0), (1, 1), (1, 1), (1, 1)))
        nbr = (xp[:, :-2, 1:-1, 1:-1] + xp[:, 2:, 1:-1, 1:-1]
               + xp[:, 1:-1, :-2, 1:-1] + xp[:, 1:-1, 2:, 1:-1]
               + xp[:, 1:-1, 1:-1, :-2] + xp[:, 1:-1, 1:-1, 2:])
        return jnp.abs(nbr - 6.0 * x)

    bsum = 0.0
    for c in range(1, C):
        pb = lap(probs[:, c])
        tb = lap(onehot[:, c])
        bsum = bsum + jnp.mean((pb - tb) ** 2)
    boundary = bsum / (C - 1)
    return dice, focal, boundary


if __name__ == "__main__":
    key = jax.random.PRNGKey(0)
    B, C, D, H, W = 2, 4, 16, 16, 16
    k1, k2 = jax.random.split(key)
    logits = jax.random.normal(k1, (B, C, D, H, W), dtype=jnp.float32)
    targets = jax.random.randint(k2, (B, D, H, W), 0, C, dtype=jnp.int32)

    rd, rf, rb = _reference(logits, targets)
    ref_total = DICE_WEIGHT * rd + FOCAL_WEIGHT * rf + BOUNDARY_WEIGHT * rb

    # d_tile=8 -> two D tiles: exercises the D-halo carry across tile seams.
    loss, stats = combined_loss(logits, targets, d_tile=8)
    jax.block_until_ready(loss)
    np.testing.assert_allclose(float(stats["dice_loss"]), float(rd), rtol=5e-3, atol=1e-4)
    np.testing.assert_allclose(float(stats["focal_loss"]), float(rf), rtol=5e-3, atol=1e-4)
    np.testing.assert_allclose(float(stats["boundary_loss"]), float(rb), rtol=5e-3, atol=1e-4)
    np.testing.assert_allclose(float(loss), float(ref_total), rtol=5e-3, atol=1e-4)

    # Auto tile selection (single D tile) must give the same answer.
    loss2, stats2 = combined_loss(logits, targets)
    jax.block_until_ready(loss2)
    np.testing.assert_allclose(float(loss2), float(ref_total), rtol=5e-3, atol=1e-4)
    np.testing.assert_allclose(float(stats2["boundary_loss"]), float(rb), rtol=5e-3, atol=1e-4)

    print("KERNEL_OK")
</pallas_src>

<mosaic_0001>
module attributes {stable_mosaic.version = 11 : i64} {
  func.func @kernel(%arg0: i32, %arg1: i32, %arg2: memref<1x4x8x256xf32, #tpu.memory_space<vmem>>, %arg3: memref<1x8x256xi32, #tpu.memory_space<vmem>>, %arg4: memref<1x1x1x14xf32, #tpu.memory_space<vmem>>, %arg5: memref<4x2x256xf32, #tpu.memory_space<vmem>>, %arg6: memref<4x2x256xf32, #tpu.memory_space<vmem>>, %arg7: memref<10x512xf32, #tpu.memory_space<vmem>>, %arg8: memref<10x512xf32, #tpu.memory_space<vmem>>) attributes {dimension_semantics = [#tpu.dimension_semantics<parallel>, #tpu.dimension_semantics<arbitrary>], iteration_bounds = array<i64: 2, 2>, scalar_prefetch = 0 : i64, scratch_operands = 4 : i64, tpu.core_type = #tpu.core_type<tc>, window_params = [{transform_indices = @transform_0, window_bounds = array<i64: 1, 4, 8, 256>}, {transform_indices = @transform_1, window_bounds = array<i64: 1, 8, 256>}, {transform_indices = @transform_2, window_bounds = array<i64: 1, 1, 1, 14>}]} {
    %c0_i32 = arith.constant 0 : i32
    %0 = arith.cmpi eq, %arg1, %c0_i32 : i32
    %1 = arith.extui %0 : i1 to i32
    %c0_i32_0 = arith.constant 0 : i32
    %2 = arith.cmpi ne, %1, %c0_i32_0 : i32
    scf.if %2 {
      %cst_351 = arith.constant 0.000000e+00 : f32
      %657 = vector.broadcast %cst_351 : f32 to vector<4x2x256xf32>
      %c0_352 = arith.constant 0 : index
      %c0_353 = arith.constant 0 : index
      %c0_354 = arith.constant 0 : index
      %658 = vector.load %arg5[%c0_352, %c0_353, %c0_354] : memref<4x2x256xf32, #tpu.memory_space<vmem>>, vector<4x2x256xf32>
      tpu.vector_store %arg5[%c0_352, %c0_353, %c0_354], %657 {strides = array<i32>} : memref<4x2x256xf32, #tpu.memory_space<vmem>>, vector<4x2x256xf32>,
      %cst_355 = arith.constant 0.000000e+00 : f32
      %659 = vector.broadcast %cst_355 : f32 to vector<4x2x256xf32>
      %c0_356 = arith.constant 0 : index
      %c0_357 = arith.constant 0 : index
      %c0_358 = arith.constant 0 : index
      %660 = vector.load %arg6[%c0_356, %c0_357, %c0_358] : memref<4x2x256xf32, #tpu.memory_space<vmem>>, vector<4x2x256xf32>
      tpu.vector_store %arg6[%c0_356, %c0_357, %c0_358], %659 {strides = array<i32>} : memref<4x2x256xf32, #tpu.memory_space<vmem>>, vector<4x2x256xf32>,
      %cst_359 = arith.constant 0.000000e+00 : f32
      %661 = vector.broadcast %cst_359 : f32 to vector<10x512xf32>
      %c0_360 = arith.constant 0 : index
      %c0_361 = arith.constant 0 : index
      %662 = vector.load %arg7[%c0_360, %c0_361] : memref<10x512xf32, #tpu.memory_space<vmem>>, vector<10x512xf32>
      tpu.vector_store %arg7[%c0_360, %c0_361], %661 {strides = array<i32>} : memref<10x512xf32, #tpu.memory_space<vmem>>, vector<10x512xf32>,
      %cst_362 = arith.constant 0.000000e+00 : f32
      %663 = vector.broadcast %cst_362 : f32 to vector<10x512xf32>
      %c0_363 = arith.constant 0 : index
      %c0_364 = arith.constant 0 : index
      %664 = vector.load %arg8[%c0_363, %c0_364] : memref<10x512xf32, #tpu.memory_space<vmem>>, vector<10x512xf32>
      tpu.vector_store %arg8[%c0_363, %c0_364], %663 {strides = array<i32>} : memref<10x512xf32, #tpu.memory_space<vmem>>, vector<10x512xf32>,
    } else {
    }
    %c0 = arith.constant 0 : index
    %c0_1 = arith.constant 0 : index
    %c0_2 = arith.constant 0 : index
    %3 = vector.load %arg3[%c0, %c0_1, %c0_2] : memref<1x8x256xi32, #tpu.memory_space<vmem>>, vector<1x8x256xi32>
    %4 = vector.shape_cast %3 : vector<1x8x256xi32> to vector<8x256xi32>
    %c0_3 = arith.constant 0 : index
    %c0_4 = arith.constant 0 : index
    %c0_5 = arith.constant 0 : index
    %c0_6 = arith.constant 0 : index
    %5 = vector.load %arg2[%c0_3, %c0_4, %c0_5, %c0_6] : memref<1x4x8x256xf32, #tpu.memory_space<vmem>>, vector<1x1x8x256xf32>
    %6 = vector.shape_cast %5 : vector<1x1x8x256xf32> to vector<8x256xf32>
    %c0_7 = arith.constant 0 : index
    %c1 = arith.constant 1 : index
    %c0_8 = arith.constant 0 : index
    %c0_9 = arith.constant 0 : index
    %7 = vector.load %arg2[%c0_7, %c1, %c0_8, %c0_9] : memref<1x4x8x256xf32, #tpu.memory_space<vmem>>, vector<1x1x8x256xf32>
    %8 = vector.shape_cast %7 : vector<1x1x8x256xf32> to vector<8x256xf32>
    %9 = arith.maximumf %6, %8 : vector<8x256xf32>
    %c0_10 = arith.constant 0 : index
    %c2 = arith.constant 2 : index
    %c0_11 = arith.constant 0 : index
    %c0_12 = arith.constant 0 : index
    %10 = vector.load %arg2[%c0_10, %c2, %c0_11, %c0_12] : memref<1x4x8x256xf32, #tpu.memory_space<vmem>>, vector<1x1x8x256xf32>
    %11 = vector.shape_cast %10 : vector<1x1x8x256xf32> to vector<8x256xf32>
    %12 = arith.maximumf %9, %11 : vector<8x256xf32>
    %c0_13 = arith.constant 0 : index
    %c3 = arith.constant 3 : index
    %c0_14 = arith.constant 0 : index
    %c0_15 = arith.constant 0 : index
    %13 = vector.load %arg2[%c0_13, %c3, %c0_14, %c0_15] : memref<1x4x8x256xf32, #tpu.memory_space<vmem>>, vector<1x1x8x256xf32>
    %14 = vector.shape_cast %13 : vector<1x1x8x256xf32> to vector<8x256xf32>
    %15 = arith.maximumf %12, %14 : vector<8x256xf32>
    %c0_16 = arith.constant 0 : index
    %c0_17 = arith.constant 0 : index
    %c0_18 = arith.constant 0 : index
    %c0_19 = arith.constant 0 : index
    %16 = vector.load %arg2[%c0_16, %c0_17, %c0_18, %c0_19] : memref<1x4x8x256xf32, #tpu.memory_space<vmem>>, vector<1x1x8x256xf32>
    %17 = vector.shape_cast %16 : vector<1x1x8x256xf32> to vector<8x256xf32>
    %18 = arith.subf %17, %15 : vector<8x256xf32>
    %19 = math.exp %18 : vector<8x256xf32>
    %c0_20 = arith.constant 0 : index
    %c1_21 = arith.constant 1 : index
    %c0_22 = arith.constant 0 : index
    %c0_23 = arith.constant 0 : index
    %20 = vector.load %arg2[%c0_20, %c1_21, %c0_22, %c0_23] : memref<1x4x8x256xf32, #tpu.memory_space<vmem>>, vector<1x1x8x256xf32>
    %21 = vector.shape_cast %20 : vector<1x1x8x256xf32> to vector<8x256xf32>
    %22 = arith.subf %21, %15 : vector<8x256xf32>
    %23 = math.exp %22 : vector<8x256xf32>
    %24 = arith.addf %19, %23 : vector<8x256xf32>
    %c0_24 = arith.constant 0 : index
    %c2_25 = arith.constant 2 : index
    %c0_26 = arith.constant 0 : index
    %c0_27 = arith.constant 0 : index
    %25 = vector.load %arg2[%c0_24, %c2_25, %c0_26, %c0_27] : memref<1x4x8x256xf32, #tpu.memory_space<vmem>>, vector<1x1x8x256xf32>
    %26 = vector.shape_cast %25 : vector<1x1x8x256xf32> to vector<8x256xf32>
    %27 = arith.subf %26, %15 : vector<8x256xf32>
    %28 = math.exp %27 : vector<8x256xf32>
    %29 = arith.addf %24, %28 : vector<8x256xf32>
    %c0_28 = arith.constant 0 : index
    %c3_29 = arith.constant 3 : index
    %c0_30 = arith.constant 0 : index
    %c0_31 = arith.constant 0 : index
    %30 = vector.load %arg2[%c0_28, %c3_29, %c0_30, %c0_31] : memref<1x4x8x256xf32, #tpu.memory_space<vmem>>, vector<1x1x8x256xf32>
    %31 = vector.shape_cast %30 : vector<1x1x8x256xf32> to vector<8x256xf32>
    %32 = arith.subf %31, %15 : vector<8x256xf32>
    %33 = math.exp %32 : vector<8x256xf32>
    %34 = arith.addf %29, %33 : vector<8x256xf32>
    %35 = tpu.reciprocal %34 {approx = true} : vector<8x256xf32> -> vector<8x256xf32>
    %36 = tpu.iota {dimensions = array<i32: 1>} : vector<1x256xi32>
    %c16_i32 = arith.constant 16 : i32
    %c0_i32_32 = arith.constant 0 : i32
    %37 = arith.cmpi eq, %c16_i32, %c0_i32_32 : i32
    %c1_i32 = arith.constant 1 : i32
    %38 = arith.select %37, %c1_i32, %c16_i32 : i32
    %39 = vector.broadcast %38 : i32 to vector<1x256xi32>
    %40 = arith.remsi %36, %39 : vector<1x256xi32>
    %c0_i32_33 = arith.constant 0 : i32
    %41 = vector.broadcast %c0_i32_33 : i32 to vector<1x256xi32>
    %42 = arith.cmpi ne, %40, %41 : vector<1x256xi32>
    %c0_i32_34 = arith.constant 0 : i32
    %43 = vector.broadcast %c0_i32_34 : i32 to vector<1x256xi32>
    %44 = arith.cmpi slt, %40, %43 : vector<1x256xi32>
    %c0_i32_35 = arith.constant 0 : i32
    %45 = arith.cmpi slt, %38, %c0_i32_35 : i32
    %46 = vector.broadcast %45 : i1 to vector<1x256xi1>
    %47 = vector.broadcast %46 : vector<1x256xi1> to vector<1x256xi1>
    %48 = arith.xori %44, %47 : vector<1x256xi1>
    %49 = arith.andi %48, %42 : vector<1x256xi1>
    %50 = vector.broadcast %38 : i32 to vector<1x256xi32>
    %51 = arith.addi %40, %50 : vector<1x256xi32>
    %52 = arith.select %49, %51, %40 : vector<1x256xi1>, vector<1x256xi32>
    %c0_i32_36 = arith.constant 0 : i32
    %53 = vector.broadcast %c0_i32_36 : i32 to vector<1x256xi32>
    %54 = arith.cmpi sgt, %52, %53 : vector<1x256xi32>
    %55 = arith.extui %54 : vector<1x256xi1> to vector<1x256xi32>
    %56 = arith.sitofp %55 : vector<1x256xi32> to vector<1x256xf32>
    %c15_i32 = arith.constant 15 : i32
    %57 = vector.broadcast %c15_i32 : i32 to vector<1x256xi32>
    %58 = arith.cmpi slt, %52, %57 : vector<1x256xi32>
    %59 = arith.extui %58 : vector<1x256xi1> to vector<1x256xi32>
    %60 = arith.sitofp %59 : vector<1x256xi32> to vector<1x256xf32>
    %c8_i32 = arith.constant 8 : i32
    %61 = arith.muli %arg1, %c8_i32 : i32
    %62 = tpu.iota {dimensions = array<i32: 0>} : vector<8x1xi32>
    %c1_i32_37 = arith.constant 1 : i32
    %63 = arith.subi %61, %c1_i32_37 : i32
    %64 = vector.broadcast %63 : i32 to vector<8x1xi32>
    %65 = arith.addi %64, %62 : vector<8x1xi32>
    %c0_i32_38 = arith.constant 0 : i32
    %66 = vector.broadcast %c0_i32_38 : i32 to vector<8x1xi32>
    %67 = arith.cmpi sge, %65, %66 : vector<8x1xi32>
    %68 = arith.extui %67 : vector<8x1xi1> to vector<8x1xi32>
    %69 = arith.sitofp %68 : vector<8x1xi32> to vector<8x1xf32>
    %c1_i32_39 = arith.constant 1 : i32
    %70 = arith.cmpi eq, %arg1, %c1_i32_39 : i32
    %c0_40 = arith.constant 0 : index
    %c0_41 = arith.constant 0 : index
    %c0_42 = arith.constant 0 : index
    %c0_43 = arith.constant 0 : index
    %71 = vector.load %arg2[%c0_40, %c0_41, %c0_42, %c0_43] : memref<1x4x8x256xf32, #tpu.memory_space<vmem>>, vector<1x1x8x256xf32>
    %72 = vector.shape_cast %71 : vector<1x1x8x256xf32> to vector<8x256xf32>
    %73 = arith.subf %72, %15 : vector<8x256xf32>
    %74 = math.exp %73 : vector<8x256xf32>
    %75 = arith.mulf %74, %35 : vector<8x256xf32>
    %c0_i32_44 = arith.constant 0 : i32
    %76 = vector.broadcast %c0_i32_44 : i32 to vector<8x256xi32>
    %77 = arith.cmpi eq, %4, %76 : vector<8x256xi32>
    %78 = arith.extui %77 : vector<8x256xi1> to vector<8x256xi32>
    %79 = arith.sitofp %78 : vector<8x256xi32> to vector<8x256xf32>
    %cst = arith.constant 0.000000e+00 : f32
    %80 = vector.broadcast %cst : f32 to vector<8x256xf32>
    %81 = arith.select %77, %75, %80 : vector<8x256xi1>, vector<8x256xf32>
    %82 = vector.shape_cast %81 : vector<8x256xf32> to vector<1x8x256xf32>
    %cst_45 = arith.constant dense<0.000000e+00> : vector<1xf32>
    %83 = vector.multi_reduction <add>, %82, %cst_45 [1, 2] : vector<1x8x256xf32> to vector<1xf32>
    %84 = vector.shape_cast %83 : vector<1xf32> to vector<1x1x1xf32>
    %85 = vector.extract %84[0, 0, 0] : f32 from vector<1x1x1xf32>
    %86 = vector.shape_cast %75 : vector<8x256xf32> to vector<1x8x256xf32>
    %cst_46 = arith.constant dense<0.000000e+00> : vector<1xf32>
    %87 = vector.multi_reduction <add>, %86, %cst_46 [1, 2] : vector<1x8x256xf32> to vector<1xf32>
    %88 = vector.shape_cast %87 : vector<1xf32> to vector<1x1x1xf32>
    %89 = vector.extract %88[0, 0, 0] : f32 from vector<1x1x1xf32>
    %90 = vector.shape_cast %79 : vector<8x256xf32> to vector<1x8x256xf32>
    %cst_47 = arith.constant dense<0.000000e+00> : vector<1xf32>
    %91 = vector.multi_reduction <add>, %90, %cst_47 [1, 2] : vector<1x8x256xf32> to vector<1xf32>
    %92 = vector.shape_cast %91 : vector<1xf32> to vector<1x1x1xf32>
    %93 = vector.extract %92[0, 0, 0] : f32 from vector<1x1x1xf32>
    %cst_48 = arith.constant 1.000000e+00 : f32
    %94 = vector.broadcast %cst_48 : f32 to vector<8x256xf32>
    %95 = arith.subf %94, %75 : vector<8x256xf32>
    %96 = arith.select %77, %75, %95 : vector<8x256xi1>, vector<8x256xf32>
    %cst_49 = arith.constant 2.500000e-01 : f32
    %cst_50 = arith.constant 7.500000e-01 : f32
    %97 = vector.broadcast %cst_49 : f32 to vector<8x256xf32>
    %98 = vector.broadcast %cst_50 : f32 to vector<8x256xf32>
    %99 = arith.select %77, %97, %98 : vector<8x256xi1>, vector<8x256xf32>
    %cst_51 = arith.constant 1.000000e+00 : f32
    %100 = vector.broadcast %cst_51 : f32 to vector<8x256xf32>
    %101 = arith.subf %100, %96 : vector<8x256xf32>
    %102 = arith.mulf %99, %101 : vector<8x256xf32>
    %103 = arith.mulf %102, %101 : vector<8x256xf32>
    %cst_52 = arith.constant 1.000000e-07 : f32
    %104 = vector.broadcast %cst_52 : f32 to vector<8x256xf32>
    %105 = arith.addf %96, %104 : vector<8x256xf32>
    %106 = math.log %105 : vector<8x256xf32>
    %cst_53 = arith.constant 0.000000e+00 : f32
    %107 = vector.broadcast %cst_53 : f32 to vector<8x256xf32>
    %108 = arith.subf %107, %106 : vector<8x256xf32>
    %109 = arith.mulf %103, %108 : vector<8x256xf32>
    %110 = vector.shape_cast %109 : vector<8x256xf32> to vector<1x8x256xf32>
    %cst_54 = arith.constant dense<0.000000e+00> : vector<1xf32>
    %111 = vector.multi_reduction <add>, %110, %cst_54 [1, 2] : vector<1x8x256xf32> to vector<1xf32>
    %112 = vector.shape_cast %111 : vector<1xf32> to vector<1x1x1xf32>
    %113 = vector.extract %112[0, 0, 0] : f32 from vector<1x1x1xf32>
    %cst_55 = arith.constant 0.000000e+00 : f32
    %114 = arith.addf %cst_55, %113 : f32
    %c0_56 = arith.constant 0 : index
    %c1_57 = arith.constant 1 : index
    %c0_58 = arith.constant 0 : index
    %c0_59 = arith.constant 0 : index
    %115 = vector.load %arg2[%c0_56, %c1_57, %c0_58, %c0_59] : memref<1x4x8x256xf32, #tpu.memory_space<vmem>>, vector<1x1x8x256xf32>
    %116 = vector.shape_cast %115 : vector<1x1x8x256xf32> to vector<8x256xf32>
    %117 = arith.subf %116, %15 : vector<8x256xf32>
    %118 = math.exp %117 : vector<8x256xf32>
    %119 = arith.mulf %118, %35 : vector<8x256xf32>
    %c1_i32_60 = arith.constant 1 : i32
    %120 = vector.broadcast %c1_i32_60 : i32 to vector<8x256xi32>
    %121 = arith.cmpi eq, %4, %120 : vector<8x256xi32>
    %122 = arith.extui %121 : vector<8x256xi1> to vector<8x256xi32>
    %123 = arith.sitofp %122 : vector<8x256xi32> to vector<8x256xf32>
    %cst_61 = arith.constant 0.000000e+00 : f32
    %124 = vector.broadcast %cst_61 : f32 to vector<8x256xf32>
    %125 = arith.select %121, %119, %124 : vector<8x256xi1>, vector<8x256xf32>
    %126 = vector.shape_cast %125 : vector<8x256xf32> to vector<1x8x256xf32>
    %cst_62 = arith.constant dense<0.000000e+00> : vector<1xf32>
    %127 = vector.multi_reduction <add>, %126, %cst_62 [1, 2] : vector<1x8x256xf32> to vector<1xf32>
    %128 = vector.shape_cast %127 : vector<1xf32> to vector<1x1x1xf32>
    %129 = vector.extract %128[0, 0, 0] : f32 from vector<1x1x1xf32>
    %130 = vector.shape_cast %119 : vector<8x256xf32> to vector<1x8x256xf32>
    %cst_63 = arith.constant dense<0.000000e+00> : vector<1xf32>
    %131 = vector.multi_reduction <add>, %130, %cst_63 [1, 2] : vector<1x8x256xf32> to vector<1xf32>
    %132 = vector.shape_cast %131 : vector<1xf32> to vector<1x1x1xf32>
    %133 = vector.extract %132[0, 0, 0] : f32 from vector<1x1x1xf32>
    %134 = vector.shape_cast %123 : vector<8x256xf32> to vector<1x8x256xf32>
    %cst_64 = arith.constant dense<0.000000e+00> : vector<1xf32>
    %135 = vector.multi_reduction <add>, %134, %cst_64 [1, 2] : vector<1x8x256xf32> to vector<1xf32>
    %136 = vector.shape_cast %135 : vector<1xf32> to vector<1x1x1xf32>
    %137 = vector.extract %136[0, 0, 0] : f32 from vector<1x1x1xf32>
    %cst_65 = arith.constant 1.000000e+00 : f32
    %138 = vector.broadcast %cst_65 : f32 to vector<8x256xf32>
    %139 = arith.subf %138, %119 : vector<8x256xf32>
    %140 = arith.select %121, %119, %139 : vector<8x256xi1>, vector<8x256xf32>
    %cst_66 = arith.constant 2.500000e-01 : f32
    %cst_67 = arith.constant 7.500000e-01 : f32
    %141 = vector.broadcast %cst_66 : f32 to vector<8x256xf32>
    %142 = vector.broadcast %cst_67 : f32 to vector<8x256xf32>
    %143 = arith.select %121, %141, %142 : vector<8x256xi1>, vector<8x256xf32>
    %cst_68 = arith.constant 1.000000e+00 : f32
    %144 = vector.broadcast %cst_68 : f32 to vector<8x256xf32>
    %145 = arith.subf %144, %140 : vector<8x256xf32>
    %146 = arith.mulf %143, %145 : vector<8x256xf32>
    %147 = arith.mulf %146, %145 : vector<8x256xf32>
    %cst_69 = arith.constant 1.000000e-07 : f32
    %148 = vector.broadcast %cst_69 : f32 to vector<8x256xf32>
    %149 = arith.addf %140, %148 : vector<8x256xf32>
    %150 = math.log %149 : vector<8x256xf32>
    %cst_70 = arith.constant 0.000000e+00 : f32
    %151 = vector.broadcast %cst_70 : f32 to vector<8x256xf32>
    %152 = arith.subf %151, %150 : vector<8x256xf32>
    %153 = arith.mulf %147, %152 : vector<8x256xf32>
    %154 = vector.shape_cast %153 : vector<8x256xf32> to vector<1x8x256xf32>
    %cst_71 = arith.constant dense<0.000000e+00> : vector<1xf32>
    %155 = vector.multi_reduction <add>, %154, %cst_71 [1, 2] : vector<1x8x256xf32> to vector<1xf32>
    %156 = vector.shape_cast %155 : vector<1xf32> to vector<1x1x1xf32>
    %157 = vector.extract %156[0, 0, 0] : f32 from vector<1x1x1xf32>
    %158 = arith.addf %114, %157 : f32
    %c1_72 = arith.constant 1 : index
    %c0_73 = arith.constant 0 : index
    %c0_74 = arith.constant 0 : index
    %159 = vector.load %arg5[%c1_72, %c0_73, %c0_74] : memref<4x2x256xf32, #tpu.memory_space<vmem>>, vector<1x2x256xf32>
    %160 = vector.shape_cast %159 : vector<1x2x256xf32> to vector<2x256xf32>
    %c0_75 = arith.constant 0 : index
    %c128 = arith.constant 128 : index
    %161 = vector.load %arg7[%c0_75, %c128] : memref<10x512xf32, #tpu.memory_space<vmem>>, vector<2x256xf32>
    tpu.vector_store %arg7[%c0_75, %c128], %160 {strides = array<i32>} : memref<10x512xf32, #tpu.memory_space<vmem>>, vector<2x256xf32>,
    %c1_76 = arith.constant 1 : index
    %c0_77 = arith.constant 0 : index
    %c0_78 = arith.constant 0 : index
    %162 = vector.load %arg6[%c1_76, %c0_77, %c0_78] : memref<4x2x256xf32, #tpu.memory_space<vmem>>, vector<1x2x256xf32>
    %163 = vector.shape_cast %162 : vector<1x2x256xf32> to vector<2x256xf32>
    %c0_79 = arith.constant 0 : index
    %c128_80 = arith.constant 128 : index
    %164 = vector.load %arg8[%c0_79, %c128_80] : memref<10x512xf32, #tpu.memory_space<vmem>>, vector<2x256xf32>
    tpu.vector_store %arg8[%c0_79, %c128_80], %163 {strides = array<i32>} : memref<10x512xf32, #tpu.memory_space<vmem>>, vector<2x256xf32>,
    %c2_81 = arith.constant 2 : index
    %c128_82 = arith.constant 128 : index
    %165 = vector.load %arg7[%c2_81, %c128_82] : memref<10x512xf32, #tpu.memory_space<vmem>>, vector<8x256xf32>
    tpu.vector_store %arg7[%c2_81, %c128_82], %119 {strides = array<i32>} : memref<10x512xf32, #tpu.memory_space<vmem>>, vector<8x256xf32>,
    %c2_83 = arith.constant 2 : index
    %c128_84 = arith.constant 128 : index
    %166 = vector.load %arg8[%c2_83, %c128_84] : memref<10x512xf32, #tpu.memory_space<vmem>>, vector<8x256xf32>
    tpu.vector_store %arg8[%c2_83, %c128_84], %123 {strides = array<i32>} : memref<10x512xf32, #tpu.memory_space<vmem>>, vector<8x256xf32>,
    %167 = vector.extract_strided_slice %119 {offsets = [6, 0], sizes = [2, 256], strides = [1, 1]} : vector<8x256xf32> to vector<2x256xf32>
    %c1_85 = arith.constant 1 : index
    %c0_86 = arith.constant 0 : index
    %c0_87 = arith.constant 0 : index
    %168 = vector.load %arg5[%c1_85, %c0_86, %c0_87] : memref<4x2x256xf32, #tpu.memory_space<vmem>>, vector<1x2x256xf32>
    %169 = vector.shape_cast %168 : vector<1x2x256xf32> to vector<2x256xf32>
    %170 = vector.shape_cast %167 : vector<2x256xf32> to vector<1x2x256xf32>
    tpu.vector_store %arg5[%c1_85, %c0_86, %c0_87], %170 {strides = array<i32>} : memref<4x2x256xf32, #tpu.memory_space<vmem>>, vector<1x2x256xf32>,
    %171 = vector.extract_strided_slice %123 {offsets = [6, 0], sizes = [2, 256], strides = [1, 1]} : vector<8x256xf32> to vector<2x256xf32>
    %c1_88 = arith.constant 1 : index
    %c0_89 = arith.constant 0 : index
    %c0_90 = arith.constant 0 : index
    %172 = vector.load %arg6[%c1_88, %c0_89, %c0_90] : memref<4x2x256xf32, #tpu.memory_space<vmem>>, vector<1x2x256xf32>
    %173 = vector.shape_cast %172 : vector<1x2x256xf32> to vector<2x256xf32>
    %174 = vector.shape_cast %171 : vector<2x256xf32> to vector<1x2x256xf32>
    tpu.vector_store %arg6[%c1_88, %c0_89, %c0_90], %174 {strides = array<i32>} : memref<4x2x256xf32, #tpu.memory_space<vmem>>, vector<1x2x256xf32>,
    %c1_91 = arith.constant 1 : index
    %c128_92 = arith.constant 128 : index
    %175 = vector.load %arg7[%c1_91, %c128_92] : memref<10x512xf32, #tpu.memory_space<vmem>>, vector<8x256xf32>
    %c0_93 = arith.constant 0 : index
    %c128_94 = arith.constant 128 : index
    %176 = vector.load %arg7[%c0_93, %c128_94] : memref<10x512xf32, #tpu.memory_space<vmem>>, vector<8x256xf32>
    %177 = arith.addf %176, %119 : vector<8x256xf32>
    %c1_95 = arith.constant 1 : index
    %c112 = arith.constant 112 : index
    %178 = vector.load %arg7[%c1_95, %c112] : memref<10x512xf32, #tpu.memory_space<vmem>>, vector<8x256xf32>
    %179 = arith.addf %177, %178 : vector<8x256xf32>
    %c1_96 = arith.constant 1 : index
    %c144 = arith.constant 144 : index
    %180 = vector.load %arg7[%c1_96, %c144] : memref<10x512xf32, #tpu.memory_space<vmem>>, vector<8x256xf32>
    %181 = arith.addf %179, %180 : vector<8x256xf32>
    %c1_97 = arith.constant 1 : index
    %c127 = arith.constant 127 : index
    %182 = vector.load %arg7[%c1_97, %c127] : memref<10x512xf32, #tpu.memory_space<vmem>>, vector<8x256xf32>
    %183 = vector.broadcast %56 : vector<1x256xf32> to vector<8x256xf32>
    %184 = arith.mulf %182, %183 : vector<8x256xf32>
    %185 = arith.addf %181, %184 : vector<8x256xf32>
    %c1_98 = arith.constant 1 : index
    %c129 = arith.constant 129 : index
    %186 = vector.load %arg7[%c1_98, %c129] : memref<10x512xf32, #tpu.memory_space<vmem>>, vector<8x256xf32>
    %187 = vector.broadcast %60 : vector<1x256xf32> to vector<8x256xf32>
    %188 = arith.mulf %186, %187 : vector<8x256xf32>
    %189 = arith.addf %185, %188 : vector<8x256xf32>
    %cst_99 = arith.constant 6.000000e+00 : f32
    %190 = vector.broadcast %cst_99 : f32 to vector<8x256xf32>
    %191 = arith.mulf %190, %175 : vector<8x256xf32>
    %192 = arith.subf %189, %191 : vector<8x256xf32>
    %193 = math.absf %192 : vector<8x256xf32>
    %c1_100 = arith.constant 1 : index
    %c128_101 = arith.constant 128 : index
    %194 = vector.load %arg8[%c1_100, %c128_101] : memref<10x512xf32, #tpu.memory_space<vmem>>, vector<8x256xf32>
    %c0_102 = arith.constant 0 : index
    %c128_103 = arith.constant 128 : index
    %195 = vector.load %arg8[%c0_102, %c128_103] : memref<10x512xf32, #tpu.memory_space<vmem>>, vector<8x256xf32>
    %196 = arith.addf %195, %123 : vector<8x256xf32>
    %c1_104 = arith.constant 1 : index
    %c112_105 = arith.constant 112 : index
    %197 = vector.load %arg8[%c1_104, %c112_105] : memref<10x512xf32, #tpu.memory_space<vmem>>, vector<8x256xf32>
    %198 = arith.addf %196, %197 : vector<8x256xf32>
    %c1_106 = arith.constant 1 : index
    %c144_107 = arith.constant 144 : index
    %199 = vector.load %arg8[%c1_106, %c144_107] : memref<10x512xf32, #tpu.memory_space<vmem>>, vector<8x256xf32>
    %200 = arith.addf %198, %199 : vector<8x256xf32>
    %c1_108 = arith.constant 1 : index
    %c127_109 = arith.constant 127 : index
    %201 = vector.load %arg8[%c1_108, %c127_109] : memref<10x512xf32, #tpu.memory_space<vmem>>, vector<8x256xf32>
    %202 = vector.broadcast %56 : vector<1x256xf32> to vector<8x256xf32>
    %203 = arith.mulf %201, %202 : vector<8x256xf32>
    %204 = arith.addf %200, %203 : vector<8x256xf32>
    %c1_110 = arith.constant 1 : index
    %c129_111 = arith.constant 129 : index
    %205 = vector.load %arg8[%c1_110, %c129_111] : memref<10x512xf32, #tpu.memory_space<vmem>>, vector<8x256xf32>
    %206 = vector.broadcast %60 : vector<1x256xf32> to vector<8x256xf32>
    %207 = arith.mulf %205, %206 : vector<8x256xf32>
    %208 = arith.addf %204, %207 : vector<8x256xf32>
    %cst_112 = arith.constant 6.000000e+00 : f32
    %209 = vector.broadcast %cst_112 : f32 to vector<8x256xf32>
    %210 = arith.mulf %209, %194 : vector<8x256xf32>
    %211 = arith.subf %208, %210 : vector<8x256xf32>
    %212 = math.absf %211 : vector<8x256xf32>
    %213 = arith.subf %193, %212 : vector<8x256xf32>
    %214 = arith.mulf %213, %213 : vector<8x256xf32>
    %215 = vector.broadcast %69 : vector<8x1xf32> to vector<8x256xf32>
    %216 = arith.mulf %214, %215 : vector<8x256xf32>
    %217 = vector.shape_cast %216 : vector<8x256xf32> to vector<1x8x256xf32>
    %cst_113 = arith.constant dense<0.000000e+00> : vector<1xf32>
    %218 = vector.multi_reduction <add>, %217, %cst_113 [1, 2] : vector<1x8x256xf32> to vector<1xf32>
    %219 = vector.shape_cast %218 : vector<1xf32> to vector<1x1x1xf32>
    %220 = vector.extract %219[0, 0, 0] : f32 from vector<1x1x1xf32>
    %cst_114 = arith.constant 0.000000e+00 : f32
    %221 = arith.addf %cst_114, %220 : f32
    %c9 = arith.constant 9 : index
    %c128_115 = arith.constant 128 : index
    %222 = vector.load %arg7[%c9, %c128_115] : memref<10x512xf32, #tpu.memory_space<vmem>>, vector<1x256xf32>
    %c8 = arith.constant 8 : index
    %c128_116 = arith.constant 128 : index
    %223 = vector.load %arg7[%c8, %c128_116] : memref<10x512xf32, #tpu.memory_space<vmem>>, vector<1x256xf32>
    %cst_117 = arith.constant 0.000000e+00 : f32
    %224 = vector.broadcast %cst_117 : f32 to vector<1x256xf32>
    %225 = arith.addf %223, %224 : vector<1x256xf32>
    %c9_118 = arith.constant 9 : index
    %c112_119 = arith.constant 112 : index
    %226 = vector.load %arg7[%c9_118, %c112_119] : memref<10x512xf32, #tpu.memory_space<vmem>>, vector<1x256xf32>
    %227 = arith.addf %225, %226 : vector<1x256xf32>
    %c9_120 = arith.constant 9 : index
    %c144_121 = arith.constant 144 : index
    %228 = vector.load %arg7[%c9_120, %c144_121] : memref<10x512xf32, #tpu.memory_space<vmem>>, vector<1x256xf32>
    %229 = arith.addf %227, %228 : vector<1x256xf32>
    %c9_122 = arith.constant 9 : index
    %c127_123 = arith.constant 127 : index
    %230 = vector.load %arg7[%c9_122, %c127_123] : memref<10x512xf32, #tpu.memory_space<vmem>>, vector<1x256xf32>
    %231 = arith.mulf %230, %56 : vector<1x256xf32>
    %232 = arith.addf %229, %231 : vector<1x256xf32>
    %c9_124 = arith.constant 9 : index
    %c129_125 = arith.constant 129 : index
    %233 = vector.load %arg7[%c9_124, %c129_125] : memref<10x512xf32, #tpu.memory_space<vmem>>, vector<1x256xf32>
    %234 = arith.mulf %233, %60 : vector<1x256xf32>
    %235 = arith.addf %232, %234 : vector<1x256xf32>
    %cst_126 = arith.constant 6.000000e+00 : f32
    %236 = vector.broadcast %cst_126 : f32 to vector<1x256xf32>
    %237 = arith.mulf %236, %222 : vector<1x256xf32>
    %238 = arith.subf %235, %237 : vector<1x256xf32>
    %239 = math.absf %238 : vector<1x256xf32>
    %c9_127 = arith.constant 9 : index
    %c128_128 = arith.constant 128 : index
    %240 = vector.load %arg8[%c9_127, %c128_128] : memref<10x512xf32, #tpu.memory_space<vmem>>, vector<1x256xf32>
    %c8_129 = arith.constant 8 : index
    %c128_130 = arith.constant 128 : index
    %241 = vector.load %arg8[%c8_129, %c128_130] : memref<10x512xf32, #tpu.memory_space<vmem>>, vector<1x256xf32>
    %cst_131 = arith.constant 0.000000e+00 : f32
    %242 = vector.broadcast %cst_131 : f32 to vector<1x256xf32>
    %243 = arith.addf %241, %242 : vector<1x256xf32>
    %c9_132 = arith.constant 9 : index
    %c112_133 = arith.constant 112 : index
    %244 = vector.load %arg8[%c9_132, %c112_133] : memref<10x512xf32, #tpu.memory_space<vmem>>, vector<1x256xf32>
    %245 = arith.addf %243, %244 : vector<1x256xf32>
    %c9_134 = arith.constant 9 : index
    %c144_135 = arith.constant 144 : index
    %246 = vector.load %arg8[%c9_134, %c144_135] : memref<10x512xf32, #tpu.memory_space<vmem>>, vector<1x256xf32>
    %247 = arith.addf %245, %246 : vector<1x256xf32>
    %c9_136 = arith.constant 9 : index
    %c127_137 = arith.constant 127 : index
    %248 = vector.load %arg8[%c9_136, %c127_137] : memref<10x512xf32, #tpu.memory_space<vmem>>, vector<1x256xf32>
    %249 = arith.mulf %248, %56 : vector<1x256xf32>
    %250 = arith.addf %247, %249 : vector<1x256xf32>
    %c9_138 = arith.constant 9 : index
    %c129_139 = arith.constant 129 : index
    %251 = vector.load %arg8[%c9_138, %c129_139] : memref<10x512xf32, #tpu.memory_space<vmem>>, vector<1x256xf32>
    %252 = arith.mulf %251, %60 : vector<1x256xf32>
    %253 = arith.addf %250, %252 : vector<1x256xf32>
    %cst_140 = arith.constant 6.000000e+00 : f32
    %254 = vector.broadcast %cst_140 : f32 to vector<1x256xf32>
    %255 = arith.mulf %254, %240 : vector<1x256xf32>
    %256 = arith.subf %253, %255 : vector<1x256xf32>
    %257 = math.absf %256 : vector<1x256xf32>
    %258 = arith.subf %239, %257 : vector<1x256xf32>
    %259 = arith.mulf %258, %258 : vector<1x256xf32>
    %260 = vector.shape_cast %259 : vector<1x256xf32> to vector<1x1x256xf32>
    %cst_141 = arith.constant dense<0.000000e+00> : vector<1xf32>
    %261 = vector.multi_reduction <add>, %260, %cst_141 [1, 2] : vector<1x1x256xf32> to vector<1xf32>
    %262 = vector.shape_cast %261 : vector<1xf32> to vector<1x1x1xf32>
    %263 = vector.extract %262[0, 0, 0] : f32 from vector<1x1x1xf32>
    %cst_142 = arith.constant 0.000000e+00 : f32
    %264 = arith.select %70, %263, %cst_142 : f32
    %265 = arith.addf %221, %264 : f32
    %c0_143 = arith.constant 0 : index
    %c2_144 = arith.constant 2 : index
    %c0_145 = arith.constant 0 : index
    %c0_146 = arith.constant 0 : index
    %266 = vector.load %arg2[%c0_143, %c2_144, %c0_145, %c0_146] : memref<1x4x8x256xf32, #tpu.memory_space<vmem>>, vector<1x1x8x256xf32>
    %267 = vector.shape_cast %266 : vector<1x1x8x256xf32> to vector<8x256xf32>
    %268 = arith.subf %267, %15 : vector<8x256xf32>
    %269 = math.exp %268 : vector<8x256xf32>
    %270 = arith.mulf %269, %35 : vector<8x256xf32>
    %c2_i32 = arith.constant 2 : i32
    %271 = vector.broadcast %c2_i32 : i32 to vector<8x256xi32>
    %272 = arith.cmpi eq, %4, %271 : vector<8x256xi32>
    %273 = arith.extui %272 : vector<8x256xi1> to vector<8x256xi32>
    %274 = arith.sitofp %273 : vector<8x256xi32> to vector<8x256xf32>
    %cst_147 = arith.constant 0.000000e+00 : f32
    %275 = vector.broadcast %cst_147 : f32 to vector<8x256xf32>
    %276 = arith.select %272, %270, %275 : vector<8x256xi1>, vector<8x256xf32>
    %277 = vector.shape_cast %276 : vector<8x256xf32> to vector<1x8x256xf32>
    %cst_148 = arith.constant dense<0.000000e+00> : vector<1xf32>
    %278 = vector.multi_reduction <add>, %277, %cst_148 [1, 2] : vector<1x8x256xf32> to vector<1xf32>
    %279 = vector.shape_cast %278 : vector<1xf32> to vector<1x1x1xf32>
    %280 = vector.extract %279[0, 0, 0] : f32 from vector<1x1x1xf32>
    %281 = vector.shape_cast %270 : vector<8x256xf32> to vector<1x8x256xf32>
    %cst_149 = arith.constant dense<0.000000e+00> : vector<1xf32>
    %282 = vector.multi_reduction <add>, %281, %cst_149 [1, 2] : vector<1x8x256xf32> to vector<1xf32>
    %283 = vector.shape_cast %282 : vector<1xf32> to vector<1x1x1xf32>
    %284 = vector.extract %283[0, 0, 0] : f32 from vector<1x1x1xf32>
    %285 = vector.shape_cast %274 : vector<8x256xf32> to vector<1x8x256xf32>
    %cst_150 = arith.constant dense<0.000000e+00> : vector<1xf32>
    %286 = vector.multi_reduction <add>, %285, %cst_150 [1, 2] : vector<1x8x256xf32> to vector<1xf32>
    %287 = vector.shape_cast %286 : vector<1xf32> to vector<1x1x1xf32>
    %288 = vector.extract %287[0, 0, 0] : f32 from vector<1x1x1xf32>
    %cst_151 = arith.constant 1.000000e+00 : f32
    %289 = vector.broadcast %cst_151 : f32 to vector<8x256xf32>
    %290 = arith.subf %289, %270 : vector<8x256xf32>
    %291 = arith.select %272, %270, %290 : vector<8x256xi1>, vector<8x256xf32>
    %cst_152 = arith.constant 2.500000e-01 : f32
    %cst_153 = arith.constant 7.500000e-01 : f32
    %292 = vector.broadcast %cst_152 : f32 to vector<8x256xf32>
    %293 = vector.broadcast %cst_153 : f32 to vector<8x256xf32>
    %294 = arith.select %272, %292, %293 : vector<8x256xi1>, vector<8x256xf32>
    %cst_154 = arith.constant 1.000000e+00 : f32
    %295 = vector.broadcast %cst_154 : f32 to vector<8x256xf32>
    %296 = arith.subf %295, %291 : vector<8x256xf32>
    %297 = arith.mulf %294, %296 : vector<8x256xf32>
    %298 = arith.mulf %297, %296 : vector<8x256xf32>
    %cst_155 = arith.constant 1.000000e-07 : f32
    %299 = vector.broadcast %cst_155 : f32 to vector<8x256xf32>
    %300 = arith.addf %291, %299 : vector<8x256xf32>
    %301 = math.log %300 : vector<8x256xf32>
    %cst_156 = arith.constant 0.000000e+00 : f32
    %302 = vector.broadcast %cst_156 : f32 to vector<8x256xf32>
    %303 = arith.subf %302, %301 : vector<8x256xf32>
    %304 = arith.mulf %298, %303 : vector<8x256xf32>
    %305 = vector.shape_cast %304 : vector<8x256xf32> to vector<1x8x256xf32>
    %cst_157 = arith.constant dense<0.000000e+00> : vector<1xf32>
    %306 = vector.multi_reduction <add>, %305, %cst_157 [1, 2] : vector<1x8x256xf32> to vector<1xf32>
    %307 = vector.shape_cast %306 : vector<1xf32> to vector<1x1x1xf32>
    %308 = vector.extract %307[0, 0, 0] : f32 from vector<1x1x1xf32>
    %309 = arith.addf %158, %308 : f32
    %c2_158 = arith.constant 2 : index
    %c0_159 = arith.constant 0 : index
    %c0_160 = arith.constant 0 : index
    %310 = vector.load %arg5[%c2_158, %c0_159, %c0_160] : memref<4x2x256xf32, #tpu.memory_space<vmem>>, vector<1x2x256xf32>
    %311 = vector.shape_cast %310 : vector<1x2x256xf32> to vector<2x256xf32>
    %c0_161 = arith.constant 0 : index
    %c128_162 = arith.constant 128 : index
    %312 = vector.load %arg7[%c0_161, %c128_162] : memref<10x512xf32, #tpu.memory_space<vmem>>, vector<2x256xf32>
    tpu.vector_store %arg7[%c0_161, %c128_162], %311 {strides = array<i32>} : memref<10x512xf32, #tpu.memory_space<vmem>>, vector<2x256xf32>,
    %c2_163 = arith.constant 2 : index
    %c0_164 = arith.constant 0 : index
    %c0_165 = arith.constant 0 : index
    %313 = vector.load %arg6[%c2_163, %c0_164, %c0_165] : memref<4x2x256xf32, #tpu.memory_space<vmem>>, vector<1x2x256xf32>
    %314 = vector.shape_cast %313 : vector<1x2x256xf32> to vector<2x256xf32>
    %c0_166 = arith.constant 0 : index
    %c128_167 = arith.constant 128 : index
    %315 = vector.load %arg8[%c0_166, %c128_167] : memref<10x512xf32, #tpu.memory_space<vmem>>, vector<2x256xf32>
    tpu.vector_store %arg8[%c0_166, %c128_167], %314 {strides = array<i32>} : memref<10x512xf32, #tpu.memory_space<vmem>>, vector<2x256xf32>,
    %c2_168 = arith.constant 2 : index
    %c128_169 = arith.constant 128 : index
    %316 = vector.load %arg7[%c2_168, %c128_169] : memref<10x512xf32, #tpu.memory_space<vmem>>, vector<8x256xf32>
    tpu.vector_store %arg7[%c2_168, %c128_169], %270 {strides = array<i32>} : memref<10x512xf32, #tpu.memory_space<vmem>>, vector<8x256xf32>,
    %c2_170 = arith.constant 2 : index
    %c128_171 = arith.constant 128 : index
    %317 = vector.load %arg8[%c2_170, %c128_171] : memref<10x512xf32, #tpu.memory_space<vmem>>, vector<8x256xf32>
    tpu.vector_store %arg8[%c2_170, %c128_171], %274 {strides = array<i32>} : memref<10x512xf32, #tpu.memory_space<vmem>>, vector<8x256xf32>,
    %318 = vector.extract_strided_slice %270 {offsets = [6, 0], sizes = [2, 256], strides = [1, 1]} : vector<8x256xf32> to vector<2x256xf32>
    %c2_172 = arith.constant 2 : index
    %c0_173 = arith.constant 0 : index
    %c0_174 = arith.constant 0 : index
    %319 = vector.load %arg5[%c2_172, %c0_173, %c0_174] : memref<4x2x256xf32, #tpu.memory_space<vmem>>, vector<1x2x256xf32>
    %320 = vector.shape_cast %319 : vector<1x2x256xf32> to vector<2x256xf32>
    %321 = vector.shape_cast %318 : vector<2x256xf32> to vector<1x2x256xf32>
    tpu.vector_store %arg5[%c2_172, %c0_173, %c0_174], %321 {strides = array<i32>} : memref<4x2x256xf32, #tpu.memory_space<vmem>>, vector<1x2x256xf32>,
    %322 = vector.extract_strided_slice %274 {offsets = [6, 0], sizes = [2, 256], strides = [1, 1]} : vector<8x256xf32> to vector<2x256xf32>
    %c2_175 = arith.constant 2 : index
    %c0_176 = arith.constant 0 : index
    %c0_177 = arith.constant 0 : index
    %323 = vector.load %arg6[%c2_175, %c0_176, %c0_177] : memref<4x2x256xf32, #tpu.memory_space<vmem>>, vector<1x2x256xf32>
    %324 = vector.shape_cast %323 : vector<1x2x256xf32> to vector<2x256xf32>
    %325 = vector.shape_cast %322 : vector<2x256xf32> to vector<1x2x256xf32>
    tpu.vector_store %arg6[%c2_175, %c0_176, %c0_177], %325 {strides = array<i32>} : memref<4x2x256xf32, #tpu.memory_space<vmem>>, vector<1x2x256xf32>,
    %c1_178 = arith.constant 1 : index
    %c128_179 = arith.constant 128 : index
    %326 = vector.load %arg7[%c1_178, %c128_179] : memref<10x512xf32, #tpu.memory_space<vmem>>, vector<8x256xf32>
    %c0_180 = arith.constant 0 : index
    %c128_181 = arith.constant 128 : index
    %327 = vector.load %arg7[%c0_180, %c128_181] : memref<10x512xf32, #tpu.memory_space<vmem>>, vector<8x256xf32>
    %328 = arith.addf %327, %270 : vector<8x256xf32>
    %c1_182 = arith.constant 1 : index
    %c112_183 = arith.constant 112 : index
    %329 = vector.load %arg7[%c1_182, %c112_183] : memref<10x512xf32, #tpu.memory_space<vmem>>, vector<8x256xf32>
    %330 = arith.addf %328, %329 : vector<8x256xf32>
    %c1_184 = arith.constant 1 : index
    %c144_185 = arith.constant 144 : index
    %331 = vector.load %arg7[%c1_184, %c144_185] : memref<10x512xf32, #tpu.memory_space<vmem>>, vector<8x256xf32>
    %332 = arith.addf %330, %331 : vector<8x256xf32>
    %c1_186 = arith.constant 1 : index
    %c127_187 = arith.constant 127 : index
    %333 = vector.load %arg7[%c1_186, %c127_187] : memref<10x512xf32, #tpu.memory_space<vmem>>, vector<8x256xf32>
    %334 = vector.broadcast %56 : vector<1x256xf32> to vector<8x256xf32>
    %335 = arith.mulf %333, %334 : vector<8x256xf32>
    %336 = arith.addf %332, %335 : vector<8x256xf32>
    %c1_188 = arith.constant 1 : index
    %c129_189 = arith.constant 129 : index
    %337 = vector.load %arg7[%c1_188, %c129_189] : memref<10x512xf32, #tpu.memory_space<vmem>>, vector<8x256xf32>
    %338 = vector.broadcast %60 : vector<1x256xf32> to vector<8x256xf32>
    %339 = arith.mulf %337, %338 : vector<8x256xf32>
    %340 = arith.addf %336, %339 : vector<8x256xf32>
    %cst_190 = arith.constant 6.000000e+00 : f32
    %341 = vector.broadcast %cst_190 : f32 to vector<8x256xf32>
    %342 = arith.mulf %341, %326 : vector<8x256xf32>
    %343 = arith.subf %340, %342 : vector<8x256xf32>
    %344 = math.absf %343 : vector<8x256xf32>
    %c1_191 = arith.constant 1 : index
    %c128_192 = arith.constant 128 : index
    %345 = vector.load %arg8[%c1_191, %c128_192] : memref<10x512xf32, #tpu.memory_space<vmem>>, vector<8x256xf32>
    %c0_193 = arith.constant 0 : index
    %c128_194 = arith.constant 128 : index
    %346 = vector.load %arg8[%c0_193, %c128_194] : memref<10x512xf32, #tpu.memory_space<vmem>>, vector<8x256xf32>
    %347 = arith.addf %346, %274 : vector<8x256xf32>
    %c1_195 = arith.constant 1 : index
    %c112_196 = arith.constant 112 : index
    %348 = vector.load %arg8[%c1_195, %c112_196] : memref<10x512xf32, #tpu.memory_space<vmem>>, vector<8x256xf32>
    %349 = arith.addf %347, %348 : vector<8x256xf32>
    %c1_197 = arith.constant 1 : index
    %c144_198 = arith.constant 144 : index
    %350 = vector.load %arg8[%c1_197, %c144_198] : memref<10x512xf32, #tpu.memory_space<vmem>>, vector<8x256xf32>
    %351 = arith.addf %349, %350 : vector<8x256xf32>
    %c1_199 = arith.constant 1 : index
    %c127_200 = arith.constant 127 : index
    %352 = vector.load %arg8[%c1_199, %c127_200] : memref<10x512xf32, #tpu.memory_space<vmem>>, vector<8x256xf32>
    %353 = vector.broadcast %56 : vector<1x256xf32> to vector<8x256xf32>
    %354 = arith.mulf %352, %353 : vector<8x256xf32>
    %355 = arith.addf %351, %354 : vector<8x256xf32>
    %c1_201 = arith.constant 1 : index
    %c129_202 = arith.constant 129 : index
    %356 = vector.load %arg8[%c1_201, %c129_202] : memref<10x512xf32, #tpu.memory_space<vmem>>, vector<8x256xf32>
    %357 = vector.broadcast %60 : vector<1x256xf32> to vector<8x256xf32>
    %358 = arith.mulf %356, %357 : vector<8x256xf32>
    %359 = arith.addf %355, %358 : vector<8x256xf32>
    %cst_203 = arith.constant 6.000000e+00 : f32
    %360 = vector.broadcast %cst_203 : f32 to vector<8x256xf32>
    %361 = arith.mulf %360, %345 : vector<8x256xf32>
    %362 = arith.subf %359, %361 : vector<8x256xf32>
    %363 = math.absf %362 : vector<8x256xf32>
    %364 = arith.subf %344, %363 : vector<8x256xf32>
    %365 = arith.mulf %364, %364 : vector<8x256xf32>
    %366 = vector.broadcast %69 : vector<8x1xf32> to vector<8x256xf32>
    %367 = arith.mulf %365, %366 : vector<8x256xf32>
    %368 = vector.shape_cast %367 : vector<8x256xf32> to vector<1x8x256xf32>
    %cst_204 = arith.constant dense<0.000000e+00> : vector<1xf32>
    %369 = vector.multi_reduction <add>, %368, %cst_204 [1, 2] : vector<1x8x256xf32> to vector<1xf32>
    %370 = vector.shape_cast %369 : vector<1xf32> to vector<1x1x1xf32>
    %371 = vector.extract %370[0, 0, 0] : f32 from vector<1x1x1xf32>
    %372 = arith.addf %265, %371 : f32
    %c9_205 = arith.constant 9 : index
    %c128_206 = arith.constant 128 : index
    %373 = vector.load %arg7[%c9_205, %c128_206] : memref<10x512xf32, #tpu.memory_space<vmem>>, vector<1x256xf32>
    %c8_207 = arith.constant 8 : index
    %c128_208 = arith.constant 128 : index
    %374 = vector.load %arg7[%c8_207, %c128_208] : memref<10x512xf32, #tpu.memory_space<vmem>>, vector<1x256xf32>
    %cst_209 = arith.constant 0.000000e+00 : f32
    %375 = vector.broadcast %cst_209 : f32 to vector<1x256xf32>
    %376 = arith.addf %374, %375 : vector<1x256xf32>
    %c9_210 = arith.constant 9 : index
    %c112_211 = arith.constant 112 : index
    %377 = vector.load %arg7[%c9_210, %c112_211] : memref<10x512xf32, #tpu.memory_space<vmem>>, vector<1x256xf32>
    %378 = arith.addf %376, %377 : vector<1x256xf32>
    %c9_212 = arith.constant 9 : index
    %c144_213 = arith.constant 144 : index
    %379 = vector.load %arg7[%c9_212, %c144_213] : memref<10x512xf32, #tpu.memory_space<vmem>>, vector<1x256xf32>
    %380 = arith.addf %378, %379 : vector<1x256xf32>
    %c9_214 = arith.constant 9 : index
    %c127_215 = arith.constant 127 : index
    %381 = vector.load %arg7[%c9_214, %c127_215] : memref<10x512xf32, #tpu.memory_space<vmem>>, vector<1x256xf32>
    %382 = arith.mulf %381, %56 : vector<1x256xf32>
    %383 = arith.addf %380, %382 : vector<1x256xf32>
    %c9_216 = arith.constant 9 : index
    %c129_217 = arith.constant 129 : index
    %384 = vector.load %arg7[%c9_216, %c129_217] : memref<10x512xf32, #tpu.memory_space<vmem>>, vector<1x256xf32>
    %385 = arith.mulf %384, %60 : vector<1x256xf32>
    %386 = arith.addf %383, %385 : vector<1x256xf32>
    %cst_218 = arith.constant 6.000000e+00 : f32
    %387 = vector.broadcast %cst_218 : f32 to vector<1x256xf32>
    %388 = arith.mulf %387, %373 : vector<1x256xf32>
    %389 = arith.subf %386, %388 : vector<1x256xf32>
    %390 = math.absf %389 : vector<1x256xf32>
    %c9_219 = arith.constant 9 : index
    %c128_220 = arith.constant 128 : index
    %391 = vector.load %arg8[%c9_219, %c128_220] : memref<10x512xf32, #tpu.memory_space<vmem>>, vector<1x256xf32>
    %c8_221 = arith.constant 8 : index
    %c128_222 = arith.constant 128 : index
    %392 = vector.load %arg8[%c8_221, %c128_222] : memref<10x512xf32, #tpu.memory_space<vmem>>, vector<1x256xf32>
    %cst_223 = arith.constant 0.000000e+00 : f32
    %393 = vector.broadcast %cst_223 : f32 to vector<1x256xf32>
    %394 = arith.addf %392, %393 : vector<1x256xf32>
    %c9_224 = arith.constant 9 : index
    %c112_225 = arith.constant 112 : index
    %395 = vector.load %arg8[%c9_224, %c112_225] : memref<10x512xf32, #tpu.memory_space<vmem>>, vector<1x256xf32>
    %396 = arith.addf %394, %395 : vector<1x256xf32>
    %c9_226 = arith.constant 9 : index
    %c144_227 = arith.constant 144 : index
    %397 = vector.load %arg8[%c9_226, %c144_227] : memref<10x512xf32, #tpu.memory_space<vmem>>, vector<1x256xf32>
    %398 = arith.addf %396, %397 : vector<1x256xf32>
    %c9_228 = arith.constant 9 : index
    %c127_229 = arith.constant 127 : index
    %399 = vector.load %arg8[%c9_228, %c127_229] : memref<10x512xf32, #tpu.memory_space<vmem>>, vector<1x256xf32>
    %400 = arith.mulf %399, %56 : vector<1x256xf32>
    %401 = arith.addf %398, %400 : vector<1x256xf32>
    %c9_230 = arith.constant 9 : index
    %c129_231 = arith.constant 129 : index
    %402 = vector.load %arg8[%c9_230, %c129_231] : memref<10x512xf32, #tpu.memory_space<vmem>>, vector<1x256xf32>
    %403 = arith.mulf %402, %60 : vector<1x256xf32>
    %404 = arith.addf %401, %403 : vector<1x256xf32>
    %cst_232 = arith.constant 6.000000e+00 : f32
    %405 = vector.broadcast %cst_232 : f32 to vector<1x256xf32>
    %406 = arith.mulf %405, %391 : vector<1x256xf32>
    %407 = arith.subf %404, %406 : vector<1x256xf32>
    %408 = math.absf %407 : vector<1x256xf32>
    %409 = arith.subf %390, %408 : vector<1x256xf32>
    %410 = arith.mulf %409, %409 : vector<1x256xf32>
    %411 = vector.shape_cast %410 : vector<1x256xf32> to vector<1x1x256xf32>
    %cst_233 = arith.constant dense<0.000000e+00> : vector<1xf32>
    %412 = vector.multi_reduction <add>, %411, %cst_233 [1, 2] : vector<1x1x256xf32> to vector<1xf32>
    %413 = vector.shape_cast %412 : vector<1xf32> to vector<1x1x1xf32>
    %414 = vector.extract %413[0, 0, 0] : f32 from vector<1x1x1xf32>
    %cst_234 = arith.constant 0.000000e+00 : f32
    %415 = arith.select %70, %414, %cst_234 : f32
    %416 = arith.addf %372, %415 : f32
    %c0_235 = arith.constant 0 : index
    %c3_236 = arith.constant 3 : index
    %c0_237 = arith.constant 0 : index
    %c0_238 = arith.constant 0 : index
    %417 = vector.load %arg2[%c0_235, %c3_236, %c0_237, %c0_238] : memref<1x4x8x256xf32, #tpu.memory_space<vmem>>, vector<1x1x8x256xf32>
    %418 = vector.shape_cast %417 : vector<1x1x8x256xf32> to vector<8x256xf32>
    %419 = arith.subf %418, %15 : vector<8x256xf32>
    %420 = math.exp %419 : vector<8x256xf32>
    %421 = arith.mulf %420, %35 : vector<8x256xf32>
    %c3_i32 = arith.constant 3 : i32
    %422 = vector.broadcast %c3_i32 : i32 to vector<8x256xi32>
    %423 = arith.cmpi eq, %4, %422 : vector<8x256xi32>
    %424 = arith.extui %423 : vector<8x256xi1> to vector<8x256xi32>
    %425 = arith.sitofp %424 : vector<8x256xi32> to vector<8x256xf32>
    %cst_239 = arith.constant 0.000000e+00 : f32
    %426 = vector.broadcast %cst_239 : f32 to vector<8x256xf32>
    %427 = arith.select %423, %421, %426 : vector<8x256xi1>, vector<8x256xf32>
    %428 = vector.shape_cast %427 : vector<8x256xf32> to vector<1x8x256xf32>
    %cst_240 = arith.constant dense<0.000000e+00> : vector<1xf32>
    %429 = vector.multi_reduction <add>, %428, %cst_240 [1, 2] : vector<1x8x256xf32> to vector<1xf32>
    %430 = vector.shape_cast %429 : vector<1xf32> to vector<1x1x1xf32>
    %431 = vector.extract %430[0, 0, 0] : f32 from vector<1x1x1xf32>
    %432 = vector.shape_cast %421 : vector<8x256xf32> to vector<1x8x256xf32>
    %cst_241 = arith.constant dense<0.000000e+00> : vector<1xf32>
    %433 = vector.multi_reduction <add>, %432, %cst_241 [1, 2] : vector<1x8x256xf32> to vector<1xf32>
    %434 = vector.shape_cast %433 : vector<1xf32> to vector<1x1x1xf32>
    %435 = vector.extract %434[0, 0, 0] : f32 from vector<1x1x1xf32>
    %436 = vector.shape_cast %425 : vector<8x256xf32> to vector<1x8x256xf32>
    %cst_242 = arith.constant dense<0.000000e+00> : vector<1xf32>
    %437 = vector.multi_reduction <add>, %436, %cst_242 [1, 2] : vector<1x8x256xf32> to vector<1xf32>
    %438 = vector.shape_cast %437 : vector<1xf32> to vector<1x1x1xf32>
    %439 = vector.extract %438[0, 0, 0] : f32 from vector<1x1x1xf32>
    %cst_243 = arith.constant 1.000000e+00 : f32
    %440 = vector.broadcast %cst_243 : f32 to vector<8x256xf32>
    %441 = arith.subf %440, %421 : vector<8x256xf32>
    %442 = arith.select %423, %421, %441 : vector<8x256xi1>, vector<8x256xf32>
    %cst_244 = arith.constant 2.500000e-01 : f32
    %cst_245 = arith.constant 7.500000e-01 : f32
    %443 = vector.broadcast %cst_244 : f32 to vector<8x256xf32>
    %444 = vector.broadcast %cst_245 : f32 to vector<8x256xf32>
    %445 = arith.select %423, %443, %444 : vector<8x256xi1>, vector<8x256xf32>
    %cst_246 = arith.constant 1.000000e+00 : f32
    %446 = vector.broadcast %cst_246 : f32 to vector<8x256xf32>
    %447 = arith.subf %446, %442 : vector<8x256xf32>
    %448 = arith.mulf %445, %447 : vector<8x256xf32>
    %449 = arith.mulf %448, %447 : vector<8x256xf32>
    %cst_247 = arith.constant 1.000000e-07 : f32
    %450 = vector.broadcast %cst_247 : f32 to vector<8x256xf32>
    %451 = arith.addf %442, %450 : vector<8x256xf32>
    %452 = math.log %451 : vector<8x256xf32>
    %cst_248 = arith.constant 0.000000e+00 : f32
    %453 = vector.broadcast %cst_248 : f32 to vector<8x256xf32>
    %454 = arith.subf %453, %452 : vector<8x256xf32>
    %455 = arith.mulf %449, %454 : vector<8x256xf32>
    %456 = vector.shape_cast %455 : vector<8x256xf32> to vector<1x8x256xf32>
    %cst_249 = arith.constant dense<0.000000e+00> : vector<1xf32>
    %457 = vector.multi_reduction <add>, %456, %cst_249 [1, 2] : vector<1x8x256xf32> to vector<1xf32>
    %458 = vector.shape_cast %457 : vector<1xf32> to vector<1x1x1xf32>
    %459 = vector.extract %458[0, 0, 0] : f32 from vector<1x1x1xf32>
    %460 = arith.addf %309, %459 : f32
    %c3_250 = arith.constant 3 : index
    %c0_251 = arith.constant 0 : index
    %c0_252 = arith.constant 0 : index
    %461 = vector.load %arg5[%c3_250, %c0_251, %c0_252] : memref<4x2x256xf32, #tpu.memory_space<vmem>>, vector<1x2x256xf32>
    %462 = vector.shape_cast %461 : vector<1x2x256xf32> to vector<2x256xf32>
    %c0_253 = arith.constant 0 : index
    %c128_254 = arith.constant 128 : index
    %463 = vector.load %arg7[%c0_253, %c128_254] : memref<10x512xf32, #tpu.memory_space<vmem>>, vector<2x256xf32>
    tpu.vector_store %arg7[%c0_253, %c128_254], %462 {strides = array<i32>} : memref<10x512xf32, #tpu.memory_space<vmem>>, vector<2x256xf32>,
    %c3_255 = arith.constant 3 : index
    %c0_256 = arith.constant 0 : index
    %c0_257 = arith.constant 0 : index
    %464 = vector.load %arg6[%c3_255, %c0_256, %c0_257] : memref<4x2x256xf32, #tpu.memory_space<vmem>>, vector<1x2x256xf32>
    %465 = vector.shape_cast %464 : vector<1x2x256xf32> to vector<2x256xf32>
    %c0_258 = arith.constant 0 : index
    %c128_259 = arith.constant 128 : index
    %466 = vector.load %arg8[%c0_258, %c128_259] : memref<10x512xf32, #tpu.memory_space<vmem>>, vector<2x256xf32>
    tpu.vector_store %arg8[%c0_258, %c128_259], %465 {strides = array<i32>} : memref<10x512xf32, #tpu.memory_space<vmem>>, vector<2x256xf32>,
    %c2_260 = arith.constant 2 : index
    %c128_261 = arith.constant 128 : index
    %467 = vector.load %arg7[%c2_260, %c128_261] : memref<10x512xf32, #tpu.memory_space<vmem>>, vector<8x256xf32>
    tpu.vector_store %arg7[%c2_260, %c128_261], %421 {strides = array<i32>} : memref<10x512xf32, #tpu.memory_space<vmem>>, vector<8x256xf32>,
    %c2_262 = arith.constant 2 : index
    %c128_263 = arith.constant 128 : index
    %468 = vector.load %arg8[%c2_262, %c128_263] : memref<10x512xf32, #tpu.memory_space<vmem>>, vector<8x256xf32>
    tpu.vector_store %arg8[%c2_262, %c128_263], %425 {strides = array<i32>} : memref<10x512xf32, #tpu.memory_space<vmem>>, vector<8x256xf32>,
    %469 = vector.extract_strided_slice %421 {offsets = [6, 0], sizes = [2, 256], strides = [1, 1]} : vector<8x256xf32> to vector<2x256xf32>
    %c3_264 = arith.constant 3 : index
    %c0_265 = arith.constant 0 : index
    %c0_266 = arith.constant 0 : index
    %470 = vector.load %arg5[%c3_264, %c0_265, %c0_266] : memref<4x2x256xf32, #tpu.memory_space<vmem>>, vector<1x2x256xf32>
    %471 = vector.shape_cast %470 : vector<1x2x256xf32> to vector<2x256xf32>
    %472 = vector.shape_cast %469 : vector<2x256xf32> to vector<1x2x256xf32>
    tpu.vector_store %arg5[%c3_264, %c0_265, %c0_266], %472 {strides = array<i32>} : memref<4x2x256xf32, #tpu.memory_space<vmem>>, vector<1x2x256xf32>,
    %473 = vector.extract_strided_slice %425 {offsets = [6, 0], sizes = [2, 256], strides = [1, 1]} : vector<8x256xf32> to vector<2x256xf32>
    %c3_267 = arith.constant 3 : index
    %c0_268 = arith.constant 0 : index
    %c0_269 = arith.constant 0 : index
    %474 = vector.load %arg6[%c3_267, %c0_268, %c0_269] : memref<4x2x256xf32, #tpu.memory_space<vmem>>, vector<1x2x256xf32>
    %475 = vector.shape_cast %474 : vector<1x2x256xf32> to vector<2x256xf32>
    %476 = vector.shape_cast %473 : vector<2x256xf32> to vector<1x2x256xf32>
    tpu.vector_store %arg6[%c3_267, %c0_268, %c0_269], %476 {strides = array<i32>} : memref<4x2x256xf32, #tpu.memory_space<vmem>>, vector<1x2x256xf32>,
    %c1_270 = arith.constant 1 : index
    %c128_271 = arith.constant 128 : index
    %477 = vector.load %arg7[%c1_270, %c128_271] : memref<10x512xf32, #tpu.memory_space<vmem>>, vector<8x256xf32>
    %c0_272 = arith.constant 0 : index
    %c128_273 = arith.constant 128 : index
    %478 = vector.load %arg7[%c0_272, %c128_273] : memref<10x512xf32, #tpu.memory_space<vmem>>, vector<8x256xf32>
    %479 = arith.addf %478, %421 : vector<8x256xf32>
    %c1_274 = arith.constant 1 : index
    %c112_275 = arith.constant 112 : index
    %480 = vector.load %arg7[%c1_274, %c112_275] : memref<10x512xf32, #tpu.memory_space<vmem>>, vector<8x256xf32>
    %481 = arith.addf %479, %480 : vector<8x256xf32>
    %c1_276 = arith.constant 1 : index
    %c144_277 = arith.constant 144 : index
    %482 = vector.load %arg7[%c1_276, %c144_277] : memref<10x512xf32, #tpu.memory_space<vmem>>, vector<8x256xf32>
    %483 = arith.addf %481, %482 : vector<8x256xf32>
    %c1_278 = arith.constant 1 : index
    %c127_279 = arith.constant 127 : index
    %484 = vector.load %arg7[%c1_278, %c127_279] : memref<10x512xf32, #tpu.memory_space<vmem>>, vector<8x256xf32>
    %485 = vector.broadcast %56 : vector<1x256xf32> to vector<8x256xf32>
    %486 = arith.mulf %484, %485 : vector<8x256xf32>
    %487 = arith.addf %483, %486 : vector<8x256xf32>
    %c1_280 = arith.constant 1 : index
    %c129_281 = arith.constant 129 : index
    %488 = vector.load %arg7[%c1_280, %c129_281] : memref<10x512xf32, #tpu.memory_space<vmem>>, vector<8x256xf32>
    %489 = vector.broadcast %60 : vector<1x256xf32> to vector<8x256xf32>
    %490 = arith.mulf %488, %489 : vector<8x256xf32>
    %491 = arith.addf %487, %490 : vector<8x256xf32>
    %cst_282 = arith.constant 6.000000e+00 : f32
    %492 = vector.broadcast %cst_282 : f32 to vector<8x256xf32>
    %493 = arith.mulf %492, %477 : vector<8x256xf32>
    %494 = arith.subf %491, %493 : vector<8x256xf32>
    %495 = math.absf %494 : vector<8x256xf32>
    %c1_283 = arith.constant 1 : index
    %c128_284 = arith.constant 128 : index
    %496 = vector.load %arg8[%c1_283, %c128_284] : memref<10x512xf32, #tpu.memory_space<vmem>>, vector<8x256xf32>
    %c0_285 = arith.constant 0 : index
    %c128_286 = arith.constant 128 : index
    %497 = vector.load %arg8[%c0_285, %c128_286] : memref<10x512xf32, #tpu.memory_space<vmem>>, vector<8x256xf32>
    %498 = arith.addf %497, %425 : vector<8x256xf32>
    %c1_287 = arith.constant 1 : index
    %c112_288 = arith.constant 112 : index
    %499 = vector.load %arg8[%c1_287, %c112_288] : memref<10x512xf32, #tpu.memory_space<vmem>>, vector<8x256xf32>
    %500 = arith.addf %498, %499 : vector<8x256xf32>
    %c1_289 = arith.constant 1 : index
    %c144_290 = arith.constant 144 : index
    %501 = vector.load %arg8[%c1_289, %c144_290] : memref<10x512xf32, #tpu.memory_space<vmem>>, vector<8x256xf32>
    %502 = arith.addf %500, %501 : vector<8x256xf32>
    %c1_291 = arith.constant 1 : index
    %c127_292 = arith.constant 127 : index
    %503 = vector.load %arg8[%c1_291, %c127_292] : memref<10x512xf32, #tpu.memory_space<vmem>>, vector<8x256xf32>
    %504 = vector.broadcast %56 : vector<1x256xf32> to vector<8x256xf32>
    %505 = arith.mulf %503, %504 : vector<8x256xf32>
    %506 = arith.addf %502, %505 : vector<8x256xf32>
    %c1_293 = arith.constant 1 : index
    %c129_294 = arith.constant 129 : index
    %507 = vector.load %arg8[%c1_293, %c129_294] : memref<10x512xf32, #tpu.memory_space<vmem>>, vector<8x256xf32>
    %508 = vector.broadcast %60 : vector<1x256xf32> to vector<8x256xf32>
    %509 = arith.mulf %507, %508 : vector<8x256xf32>
    %510 = arith.addf %506, %509 : vector<8x256xf32>
    %cst_295 = arith.constant 6.000000e+00 : f32
    %511 = vector.broadcast %cst_295 : f32 to vector<8x256xf32>
    %512 = arith.mulf %511, %496 : vector<8x256xf32>
    %513 = arith.subf %510, %512 : vector<8x256xf32>
    %514 = math.absf %513 : vector<8x256xf32>
    %515 = arith.subf %495, %514 : vector<8x256xf32>
    %516 = arith.mulf %515, %515 : vector<8x256xf32>
    %517 = vector.broadcast %69 : vector<8x1xf32> to vector<8x256xf32>
    %518 = arith.mulf %516, %517 : vector<8x256xf32>
    %519 = vector.shape_cast %518 : vector<8x256xf32> to vector<1x8x256xf32>
    %cst_296 = arith.constant dense<0.000000e+00> : vector<1xf32>
    %520 = vector.multi_reduction <add>, %519, %cst_296 [1, 2] : vector<1x8x256xf32> to vector<1xf32>
    %521 = vector.shape_cast %520 : vector<1xf32> to vector<1x1x1xf32>
    %522 = vector.extract %521[0, 0, 0] : f32 from vector<1x1x1xf32>
    %523 = arith.addf %416, %522 : f32
    %c9_297 = arith.constant 9 : index
    %c128_298 = arith.constant 128 : index
    %524 = vector.load %arg7[%c9_297, %c128_298] : memref<10x512xf32, #tpu.memory_space<vmem>>, vector<1x256xf32>
    %c8_299 = arith.constant 8 : index
    %c128_300 = arith.constant 128 : index
    %525 = vector.load %arg7[%c8_299, %c128_300] : memref<10x512xf32, #tpu.memory_space<vmem>>, vector<1x256xf32>
    %cst_301 = arith.constant 0.000000e+00 : f32
    %526 = vector.broadcast %cst_301 : f32 to vector<1x256xf32>
    %527 = arith.addf %525, %526 : vector<1x256xf32>
    %c9_302 = arith.constant 9 : index
    %c112_303 = arith.constant 112 : index
    %528 = vector.load %arg7[%c9_302, %c112_303] : memref<10x512xf32, #tpu.memory_space<vmem>>, vector<1x256xf32>
    %529 = arith.addf %527, %528 : vector<1x256xf32>
    %c9_304 = arith.constant 9 : index
    %c144_305 = arith.constant 144 : index
    %530 = vector.load %arg7[%c9_304, %c144_305] : memref<10x512xf32, #tpu.memory_space<vmem>>, vector<1x256xf32>
    %531 = arith.addf %529, %530 : vector<1x256xf32>
    %c9_306 = arith.constant 9 : index
    %c127_307 = arith.constant 127 : index
    %532 = vector.load %arg7[%c9_306, %c127_307] : memref<10x512xf32, #tpu.memory_space<vmem>>, vector<1x256xf32>
    %533 = arith.mulf %532, %56 : vector<1x256xf32>
    %534 = arith.addf %531, %533 : vector<1x256xf32>
    %c9_308 = arith.constant 9 : index
    %c129_309 = arith.constant 129 : index
    %535 = vector.load %arg7[%c9_308, %c129_309] : memref<10x512xf32, #tpu.memory_space<vmem>>, vector<1x256xf32>
    %536 = arith.mulf %535, %60 : vector<1x256xf32>
    %537 = arith.addf %534, %536 : vector<1x256xf32>
    %cst_310 = arith.constant 6.000000e+00 : f32
    %538 = vector.broadcast %cst_310 : f32 to vector<1x256xf32>
    %539 = arith.mulf %538, %524 : vector<1x256xf32>
    %540 = arith.subf %537, %539 : vector<1x256xf32>
    %541 = math.absf %540 : vector<1x256xf32>
    %c9_311 = arith.constant 9 : index
    %c128_312 = arith.constant 128 : index
    %542 = vector.load %arg8[%c9_311, %c128_312] : memref<10x512xf32, #tpu.memory_space<vmem>>, vector<1x256xf32>
    %c8_313 = arith.constant 8 : index
    %c128_314 = arith.constant 128 : index
    %543 = vector.load %arg8[%c8_313, %c128_314] : memref<10x512xf32, #tpu.memory_space<vmem>>, vector<1x256xf32>
    %cst_315 = arith.constant 0.000000e+00 : f32
    %544 = vector.broadcast %cst_315 : f32 to vector<1x256xf32>
    %545 = arith.addf %543, %544 : vector<1x256xf32>
    %c9_316 = arith.constant 9 : index
    %c112_317 = arith.constant 112 : index
    %546 = vector.load %arg8[%c9_316, %c112_317] : memref<10x512xf32, #tpu.memory_space<vmem>>, vector<1x256xf32>
    %547 = arith.addf %545, %546 : vector<1x256xf32>
    %c9_318 = arith.constant 9 : index
    %c144_319 = arith.constant 144 : index
    %548 = vector.load %arg8[%c9_318, %c144_319] : memref<10x512xf32, #tpu.memory_space<vmem>>, vector<1x256xf32>
    %549 = arith.addf %547, %548 : vector<1x256xf32>
    %c9_320 = arith.constant 9 : index
    %c127_321 = arith.constant 127 : index
    %550 = vector.load %arg8[%c9_320, %c127_321] : memref<10x512xf32, #tpu.memory_space<vmem>>, vector<1x256xf32>
    %551 = arith.mulf %550, %56 : vector<1x256xf32>
    %552 = arith.addf %549, %551 : vector<1x256xf32>
    %c9_322 = arith.constant 9 : index
    %c129_323 = arith.constant 129 : index
    %553 = vector.load %arg8[%c9_322, %c129_323] : memref<10x512xf32, #tpu.memory_space<vmem>>, vector<1x256xf32>
    %554 = arith.mulf %553, %60 : vector<1x256xf32>
    %555 = arith.addf %552, %554 : vector<1x256xf32>
    %cst_324 = arith.constant 6.000000e+00 : f32
    %556 = vector.broadcast %cst_324 : f32 to vector<1x256xf32>
    %557 = arith.mulf %556, %542 : vector<1x256xf32>
    %558 = arith.subf %555, %557 : vector<1x256xf32>
    %559 = math.absf %558 : vector<1x256xf32>
    %560 = arith.subf %541, %559 : vector<1x256xf32>
    %561 = arith.mulf %560, %560 : vector<1x256xf32>
    %562 = vector.shape_cast %561 : vector<1x256xf32> to vector<1x1x256xf32>
    %cst_325 = arith.constant dense<0.000000e+00> : vector<1xf32>
    %563 = vector.multi_reduction <add>, %562, %cst_325 [1, 2] : vector<1x1x256xf32> to vector<1xf32>
    %564 = vector.shape_cast %563 : vector<1xf32> to vector<1x1x1xf32>
    %565 = vector.extract %564[0, 0, 0] : f32 from vector<1x1x1xf32>
    %cst_326 = arith.constant 0.000000e+00 : f32
    %566 = arith.select %70, %565, %cst_326 : f32
    %567 = arith.addf %523, %566 : f32
    %568 = tpu.iota {dimensions = array<i32: 1>} : vector<1x14xi32>
    %cst_327 = arith.constant 0.000000e+00 : f32
    %569 = vector.broadcast %cst_327 : f32 to vector<1x14xf32>
    %c0_i32_328 = arith.constant 0 : i32
    %570 = vector.broadcast %c0_i32_328 : i32 to vector<1x14xi32>
    %571 = arith.cmpi eq, %568, %570 : vector<1x14xi32>
    %cst_329 = arith.constant 0.000000e+00 : f32
    %572 = vector.broadcast %85 : f32 to vector<1x14xf32>
    %573 = vector.broadcast %cst_329 : f32 to vector<1x14xf32>
    %574 = arith.select %571, %572, %573 : vector<1x14xi1>, vector<1x14xf32>
    %575 = arith.addf %569, %574 : vector<1x14xf32>
    %c1_i32_330 = arith.constant 1 : i32
    %576 = vector.broadcast %c1_i32_330 : i32 to vector<1x14xi32>
    %577 = arith.cmpi eq, %568, %576 : vector<1x14xi32>
    %cst_331 = arith.constant 0.000000e+00 : f32
    %578 = vector.broadcast %89 : f32 to vector<1x14xf32>
    %579 = vector.broadcast %cst_331 : f32 to vector<1x14xf32>
    %580 = arith.select %577, %578, %579 : vector<1x14xi1>, vector<1x14xf32>
    %581 = arith.addf %575, %580 : vector<1x14xf32>
    %c2_i32_332 = arith.constant 2 : i32
    %582 = vector.broadcast %c2_i32_332 : i32 to vector<1x14xi32>
    %583 = arith.cmpi eq, %568, %582 : vector<1x14xi32>
    %cst_333 = arith.constant 0.000000e+00 : f32
    %584 = vector.broadcast %93 : f32 to vector<1x14xf32>
    %585 = vector.broadcast %cst_333 : f32 to vector<1x14xf32>
    %586 = arith.select %583, %584, %585 : vector<1x14xi1>, vector<1x14xf32>
    %587 = arith.addf %581, %586 : vector<1x14xf32>
    %c3_i32_334 = arith.constant 3 : i32
    %588 = vector.broadcast %c3_i32_334 : i32 to vector<1x14xi32>
    %589 = arith.cmpi eq, %568, %588 : vector<1x14xi32>
    %cst_335 = arith.constant 0.000000e+00 : f32
    %590 = vector.broadcast %129 : f32 to vector<1x14xf32>
    %591 = vector.broadcast %cst_335 : f32 to vector<1x14xf32>
    %592 = arith.select %589, %590, %591 : vector<1x14xi1>, vector<1x14xf32>
    %593 = arith.addf %587, %592 : vector<1x14xf32>
    %c4_i32 = arith.constant 4 : i32
    %594 = vector.broadcast %c4_i32 : i32 to vector<1x14xi32>
    %595 = arith.cmpi eq, %568, %594 : vector<1x14xi32>
    %cst_336 = arith.constant 0.000000e+00 : f32
    %596 = vector.broadcast %133 : f32 to vector<1x14xf32>
    %597 = vector.broadcast %cst_336 : f32 to vector<1x14xf32>
    %598 = arith.select %595, %596, %597 : vector<1x14xi1>, vector<1x14xf32>
    %599 = arith.addf %593, %598 : vector<1x14xf32>
    %c5_i32 = arith.constant 5 : i32
    %600 = vector.broadcast %c5_i32 : i32 to vector<1x14xi32>
    %601 = arith.cmpi eq, %568, %600 : vector<1x14xi32>
    %cst_337 = arith.constant 0.000000e+00 : f32
    %602 = vector.broadcast %137 : f32 to vector<1x14xf32>
    %603 = vector.broadcast %cst_337 : f32 to vector<1x14xf32>
    %604 = arith.select %601, %602, %603 : vector<1x14xi1>, vector<1x14xf32>
    %605 = arith.addf %599, %604 : vector<1x14xf32>
    %c6_i32 = arith.constant 6 : i32
    %606 = vector.broadcast %c6_i32 : i32 to vector<1x14xi32>
    %607 = arith.cmpi eq, %568, %606 : vector<1x14xi32>
    %cst_338 = arith.constant 0.000000e+00 : f32
    %608 = vector.broadcast %280 : f32 to vector<1x14xf32>
    %609 = vector.broadcast %cst_338 : f32 to vector<1x14xf32>
    %610 = arith.select %607, %608, %609 : vector<1x14xi1>, vector<1x14xf32>
    %611 = arith.addf %605, %610 : vector<1x14xf32>
    %c7_i32 = arith.constant 7 : i32
    %612 = vector.broadcast %c7_i32 : i32 to vector<1x14xi32>
    %613 = arith.cmpi eq, %568, %612 : vector<1x14xi32>
    %cst_339 = arith.constant 0.000000e+00 : f32
    %614 = vector.broadcast %284 : f32 to vector<1x14xf32>
    %615 = vector.broadcast %cst_339 : f32 to vector<1x14xf32>
    %616 = arith.select %613, %614, %615 : vector<1x14xi1>, vector<1x14xf32>
    %617 = arith.addf %611, %616 : vector<1x14xf32>
    %c8_i32_340 = arith.constant 8 : i32
    %618 = vector.broadcast %c8_i32_340 : i32 to vector<1x14xi32>
    %619 = arith.cmpi eq, %568, %618 : vector<1x14xi32>
    %cst_341 = arith.constant 0.000000e+00 : f32
    %620 = vector.broadcast %288 : f32 to vector<1x14xf32>
    %621 = vector.broadcast %cst_341 : f32 to vector<1x14xf32>
    %622 = arith.select %619, %620, %621 : vector<1x14xi1>, vector<1x14xf32>
    %623 = arith.addf %617, %622 : vector<1x14xf32>
    %c9_i32 = arith.constant 9 : i32
    %624 = vector.broadcast %c9_i32 : i32 to vector<1x14xi32>
    %625 = arith.cmpi eq, %568, %624 : vector<1x14xi32>
    %cst_342 = arith.constant 0.000000e+00 : f32
    %626 = vector.broadcast %431 : f32 to vector<1x14xf32>
    %627 = vector.broadcast %cst_342 : f32 to vector<1x14xf32>
    %628 = arith.select %625, %626, %627 : vector<1x14xi1>, vector<1x14xf32>
    %629 = arith.addf %623, %628 : vector<1x14xf32>
    %c10_i32 = arith.constant 10 : i32
    %630 = vector.broadcast %c10_i32 : i32 to vector<1x14xi32>
    %631 = arith.cmpi eq, %568, %630 : vector<1x14xi32>
    %cst_343 = arith.constant 0.000000e+00 : f32
    %632 = vector.broadcast %435 : f32 to vector<1x14xf32>
    %633 = vector.broadcast %cst_343 : f32 to vector<1x14xf32>
    %634 = arith.select %631, %632, %633 : vector<1x14xi1>, vector<1x14xf32>
    %635 = arith.addf %629, %634 : vector<1x14xf32>
    %c11_i32 = arith.constant 11 : i32
    %636 = vector.broadcast %c11_i32 : i32 to vector<1x14xi32>
    %637 = arith.cmpi eq, %568, %636 : vector<1x14xi32>
    %cst_344 = arith.constant 0.000000e+00 : f32
    %638 = vector.broadcast %439 : f32 to vector<1x14xf32>
    %639 = vector.broadcast %cst_344 : f32 to vector<1x14xf32>
    %640 = arith.select %637, %638, %639 : vector<1x14xi1>, vector<1x14xf32>
    %641 = arith.addf %635, %640 : vector<1x14xf32>
    %c12_i32 = arith.constant 12 : i32
    %642 = vector.broadcast %c12_i32 : i32 to vector<1x14xi32>
    %643 = arith.cmpi eq, %568, %642 : vector<1x14xi32>
    %cst_345 = arith.constant 0.000000e+00 : f32
    %644 = vector.broadcast %460 : f32 to vector<1x14xf32>
    %645 = vector.broadcast %cst_345 : f32 to vector<1x14xf32>
    %646 = arith.select %643, %644, %645 : vector<1x14xi1>, vector<1x14xf32>
    %647 = arith.addf %641, %646 : vector<1x14xf32>
    %c13_i32 = arith.constant 13 : i32
    %648 = vector.broadcast %c13_i32 : i32 to vector<1x14xi32>
    %649 = arith.cmpi eq, %568, %648 : vector<1x14xi32>
    %cst_346 = arith.constant 0.000000e+00 : f32
    %650 = vector.broadcast %567 : f32 to vector<1x14xf32>
    %651 = vector.broadcast %cst_346 : f32 to vector<1x14xf32>
    %652 = arith.select %649, %650, %651 : vector<1x14xi1>, vector<1x14xf32>
    %653 = arith.addf %647, %652 : vector<1x14xf32>
    %c0_347 = arith.constant 0 : index
    %c0_348 = arith.constant 0 : index
    %c0_349 = arith.constant 0 : index
    %c0_350 = arith.constant 0 : index
    %654 = vector.load %arg4[%c0_347, %c0_348, %c0_349, %c0_350] : memref<1x1x1x14xf32, #tpu.memory_space<vmem>>, vector<1x1x1x14xf32>
    %655 = vector.shape_cast %654 : vector<1x1x1x14xf32> to vector<1x14xf32>
    %656 = vector.shape_cast %653 : vector<1x14xf32> to vector<1x1x1x14xf32>
    tpu.vector_store %arg4[%c0_347, %c0_348, %c0_349, %c0_350], %656 {strides = array<i32>} : memref<1x1x1x14xf32, #tpu.memory_space<vmem>>, vector<1x1x1x14xf32>,
    return
  }
  func.func @transform_0(%arg0: i32, %arg1: i32) -> (i32, i32, i32, i32) {
    %c0_i32 = arith.constant 0 : i32
    %c0_i32_0 = arith.constant 0 : i32
    %c0_i32_1 = arith.constant 0 : i32
    return %arg0, %c0_i32, %arg1, %c0_i32_0 : i32, i32, i32, i32
  }
  func.func @transform_1(%arg0: i32, %arg1: i32) -> (i32, i32, i32) {
    %c0_i32 = arith.constant 0 : i32
    %c0_i32_0 = arith.constant 0 : i32
    return %arg0, %arg1, %c0_i32 : i32, i32, i32
  }
  func.func @transform_2(%arg0: i32, %arg1: i32) -> (i32, i32, i32, i32) {
    %c0_i32 = arith.constant 0 : i32
    %c0_i32_0 = arith.constant 0 : i32
    %c0_i32_1 = arith.constant 0 : i32
    return %arg0, %arg1, %c0_i32, %c0_i32_0 : i32, i32, i32, i32
  }
}

</mosaic_0001>

<llo_original>
// kernel: combined_loss.1
$region0: #{combined_loss.1}
  #allocation0 [shape = 'u32[]', space=smem, size = 0x4, offset = 0x4, fixed_abs, tag = 'smem constant byte address 0x4 - core index']
  #allocation1 [shape = 'u32[72,128]{1,0:T(1,128)}', space=vmem, size = 0x9000, scoped, tag = 'internal scratch']
  #allocation2 [shape = 'f32[4,2,256]{2,1,0:T(2,128)}', space=vmem, size = 0x2000, scoped, tag = 'scratch operand']
  #allocation3 [shape = 'f32[4,2,256]{2,1,0:T(2,128)}', space=vmem, size = 0x2000, scoped, tag = 'scratch operand']
  #allocation4 [shape = 'f32[10,512]{1,0:T(8,128)}', space=vmem, size = 0x8000, scoped, tag = 'scratch operand']
  #allocation5 [shape = 'f32[10,512]{1,0:T(8,128)}', space=vmem, size = 0x8000, scoped, tag = 'scratch operand']
  %s0 = inlined_call_operand.vmem [shape: f32[2,4,16,256], index: 0, kind: input, shape index: {}]
  %s1 = inlined_call_operand.vmem [shape: s32[2,16,256], index: 1, kind: input, shape index: {}]
  %s2 = inlined_call_operand.vmem [shape: f32[2,2,1,14], index: 2, kind: output, shape index: {}]
  %s3 = sld [smem:[#allocation0]]
  $region68: #{combined_loss.1} parent=0
    _
  %s5 = ssub.s32 1, %s3
  %s6 = scalar_select 0, %s5, %s3
  $region1: #{combined_loss.1} parent=0
    #allocation6 [shape = 'u8[65536]{0}', space=vmem, size = 0x10000, scoped, tag = 'input window, operand 0']
    loop: start=0, step=1, limit=6
    $region2: #{combined_loss.1} parent=1 // loop_pre_header
      _
    $region3: #{combined_loss.1} parent=1 // loop_header
      %s8 = sphi 0, %s12
      %p9 = scmp.ge.s32.totalorder %s8, 6
      %s15 = sphi 0, %s27
      %s16 = sphi 0, %s23
      %s17 = sphi 0, %s15
      %s18 = sphi 0, %s16
      %s19 = sphi 0, %s17
      %s20 = sphi 0, %s18
      %s32 = sphi 0, %s34
      %s35 = sphi 0, %s32
      %s36 = sphi 0, %s35
      %s52 = sphi 0, %s36
      %s60 = sphi 0, %s62
      %s63 = sphi 0, %s60
      %s64 = sphi 0, %s63
      %s80 = sphi 0, %s64
      %s88 = sphi 0, %s90
      %s91 = sphi 0, %s88
      %s92 = sphi 0, %s91
      %s108 = sphi 0, %s92
    $region4: #{combined_loss.1} parent=1 // loop_header_branch
      %11 = sbr.rel (%p9) target = $region8
    $region5: #{combined_loss.1} parent=1 // loop_body
      %s13 = ssub.s32 %s8, 1
      %s14 = ssub.s32 %s8, 2
      %s21 = sadd.s32 1, %s16
      %p22 = scmp.ge.s32.totalorder %s21, 2
      %s23 = scalar_select %p22, 0, %s21
      %s24 = sadd.s32 1, %s15
      %s25 = scalar_select %p22, %s24, %s15
      %p26 = scmp.ge.s32.totalorder %s25, 2
      %s27 = scalar_select %p26, 0, %s25
      %s28 = ssub.s32 %s15, %s27
      %s29 = ssub.s32 %s16, %s23
      %s30 = sor.u32 %s28, %s29
      %p31 = scmp.eq.s32.totalorder %s30, 0
      %s33 = sadd.s32 %s32, 1
      %s34 = scalar_select %p31, %s32, %s33
      %p37 = pneg %p31
      %p38 = scmp.eq.s32.totalorder %s8, 3
      %p39 = por %p37, %p38
      %p40 = scmp.ne.s32.totalorder %s32, %s35
      %p41 = scmp.eq.s32.totalorder %s8, 0
      %p42 = por %p40, %p41
      %p43 = scmp.ne.s32.totalorder %s32, %s35
      %p44 = scmp.eq.s32.totalorder %s13, 3
      %p45 = por %p43, %p44
      %p46 = scmp.ne.s32.totalorder %s35, %s36
      %p47 = scmp.eq.s32.totalorder %s13, 0
      %p48 = por %p46, %p47
      %p49 = scmp.ne.s32.totalorder %s35, %s36
      %p50 = scmp.eq.s32.totalorder %s14, 3
      %p51 = por %p49, %p50
      %p53 = scmp.ne.s32.totalorder %s36, %s52
      %p54 = scmp.eq.s32.totalorder %s14, 0
      %p55 = por %p53, %p54
      %s56 = ssub.s32 %s15, %s27
      %s57 = ssub.s32 %s16, %s23
      %s58 = sor.u32 %s56, %s57
      %p59 = scmp.eq.s32.totalorder %s58, 0
      %s61 = sadd.s32 %s60, 1
      %s62 = scalar_select %p59, %s60, %s61
      %p65 = pneg %p59
      %p66 = scmp.eq.s32.totalorder %s8, 3
      %p67 = por %p65, %p66
      %p68 = scmp.ne.s32.totalorder %s60, %s63
      %p69 = scmp.eq.s32.totalorder %s8, 0
      %p70 = por %p68, %p69
      %p71 = scmp.ne.s32.totalorder %s60, %s63
      %p72 = scmp.eq.s32.totalorder %s13, 3
      %p73 = por %p71, %p72
      %p74 = scmp.ne.s32.totalorder %s63, %s64
      %p75 = scmp.eq.s32.totalorder %s13, 0
      %p76 = por %p74, %p75
      %p77 = scmp.ne.s32.totalorder %s63, %s64
      %p78 = scmp.eq.s32.totalorder %s14, 3
      %p79 = por %p77, %p78
      %p81 = scmp.ne.s32.totalorder %s64, %s80
      %p82 = scmp.eq.s32.totalorder %s14, 0
      %p83 = por %p81, %p82
      %s84 = ssub.s32 %s15, %s27
      %s85 = ssub.s32 %s16, %s23
      %s86 = sor.u32 %s84, %s85
      %p87 = scmp.eq.s32.totalorder %s86, 0
      %s89 = sadd.s32 %s88, 1
      %s90 = scalar_select %p87, %s88, %s89
      %p93 = pneg %p87
      %p94 = scmp.eq.s32.totalorder %s8, 3
      %p95 = por %p93, %p94
      %p96 = scmp.ne.s32.totalorder %s88, %s91
      %p97 = scmp.eq.s32.totalorder %s8, 0
      %p98 = por %p96, %p97
      %p99 = scmp.ne.s32.totalorder %s88, %s91
      %p100 = scmp.eq.s32.totalorder %s13, 3
      %p101 = por %p99, %p100
      %p102 = scmp.ne.s32.totalorder %s91, %s92
      %p103 = scmp.eq.s32.totalorder %s13, 0
      %p104 = por %p102, %p103
      %p105 = scmp.ne.s32.totalorder %s91, %s92
      %p106 = scmp.eq.s32.totalorder %s14, 3
      %p107 = por %p105, %p106
      %p109 = scmp.ne.s32.totalorder %s92, %s108
      %p110 = scmp.eq.s32.totalorder %s14, 0
      %p111 = por %p109, %p110
      %p112 = scmp.le.s32.totalorder 1, %s8
      %p113 = scmp.lt.s32.totalorder %s8, 5
      %p114 = pnand %p112, %p113
      %p115 = pneg %p114
      // Predicated region
      $region9: #{combined_loss.1} parent=5 // pred_check
        _
      $region10: #{combined_loss.1} parent=5 // pred_check_branch
        %117 = sbr.rel (%p114) target = $region12
      $region11: #{combined_loss.1} parent=5 // pred_region
        %s118 = ssub.s32 %s8, 1
      $region12: #{combined_loss.1} parent=5 // pred_fallthru
        _
      %p119 = scmp.lt.s32.totalorder %s8, 4
      // Predicated region
      $region13: #{combined_loss.1} parent=5 // pred_check
        %p120 = pneg %p119
      $region14: #{combined_loss.1} parent=5 // pred_check_branch
        %122 = sbr.rel (%p120) target = $region16
      $region15: #{combined_loss.1} parent=5 // pred_region
        // Predicated region
        $region17: #{combined_loss.1} parent=15 // pred_check
          %p123 = pneg %p42
        $region18: #{combined_loss.1} parent=15 // pred_check_branch
          %125 = sbr.rel (%p123) target = $region20
        $region19: #{combined_loss.1} parent=15 // pred_region
          %s126 = sand.u32 %s32, 1
          %s127 = sand.u32 %s32, 1
          %s128 = smul.addr %s127, 64
          %s129 = scalar_lea.vmem [#allocation6], %s128
          %s130 = smul.addr %s16, 2
          %s131 = smul.addr %s15, 16
          %s132 = sadd.s32 %s130, %s131
          %s133 = smul.addr %s132, 8
          %s134 = scalar_lea.vmem %s0, %s133
          // Predicated region
          $region21: #{combined_loss.1} parent=19 // pred_check
            _
          $region22: #{combined_loss.1} parent=19 // pred_check_branch
            %136 = sbr.rel (0) target = $region24
          $region23: #{combined_loss.1} parent=19 // pred_region
            // Predicated region
            $region25: #{combined_loss.1} parent=23 // pred_check
              _
            $region26: #{combined_loss.1} parent=23 // pred_check_branch
              %138 = sbr.rel (0) target = $region28
            $region27: #{combined_loss.1} parent=23 // pred_region
              loop: start=0, step=1, limit=1
              $region29: #{combined_loss.1} parent=27 // loop_pre_header
                _
              $region30: #{combined_loss.1} parent=27 // loop_header
                %s140 = sphi 0, %s144
                %p141 = scmp.ge.s32.totalorder %s140, 1
                %s145 = sphi %s134, %s134
                %s146 = sphi %s129, %s129
              $region31: #{combined_loss.1} parent=27 // loop_header_branch
                %143 = sbr.rel (%p141) target = $region35
              $region32: #{combined_loss.1} parent=27 // loop_body
                %v147 = vld [vmem:[%s145] sm:$0xff]
                %148 = vst [vmem:[%s146] sm:$0xff] %v147
                %v149 = vld [vmem:[%s145 + $0x8] sm:$0xff]
                %150 = vst [vmem:[%s146 + $0x8] sm:$0xff] %v149
                %v151 = vld [vmem:[%s145 + $0x20] sm:$0xff]
                %152 = vst [vmem:[%s146 + $0x10] sm:$0xff] %v151
                %v153 = vld [vmem:[%s145 + $0x28] sm:$0xff]
                %154 = vst [vmem:[%s146 + $0x18] sm:$0xff] %v153
                %v155 = vld [vmem:[%s145 + $0x40] sm:$0xff]
                %156 = vst [vmem:[%s146 + $0x20] sm:$0xff] %v155
                %v157 = vld [vmem:[%s145 + $0x48] sm:$0xff]
                %158 = vst [vmem:[%s146 + $0x28] sm:$0xff] %v157
                %v159 = vld [vmem:[%s145 + $0x60] sm:$0xff]
                %160 = vst [vmem:[%s146 + $0x30] sm:$0xff] %v159
                %v161 = vld [vmem:[%s145 + $0x68] sm:$0xff]
                %162 = vst [vmem:[%s146 + $0x38] sm:$0xff] %v161
              $region33: #{combined_loss.1} parent=27 // loop_footer
                %s144 = sadd.s32 1, %s140
              $region34: #{combined_loss.1} parent=27 // loop_footer_branch
                %139 = sbr.rel target = $region30
              $region35: #{combined_loss.1} parent=27 // loop_exit
                _
            $region28: #{combined_loss.1} parent=23 // pred_fallthru
              _
            // Predicated region
            $region36: #{combined_loss.1} parent=23 // pred_check
              _
            $region37: #{combined_loss.1} parent=23 // pred_check_branch
              %164 = sbr.rel target = $region39
            $region38: #{combined_loss.1} parent=23 // pred_region
              _
            $region39: #{combined_loss.1} parent=23 // pred_fallthru
              _
          $region24: #{combined_loss.1} parent=19 // pred_fallthru
            _
          %165 = vnop
        $region20: #{combined_loss.1} parent=15 // pred_fallthru
          _
        // Predicated region
        $region40: #{combined_loss.1} parent=15 // pred_check
          %p166 = pneg %p70
        $region41: #{combined_loss.1} parent=15 // pred_check_branch
          %168 = sbr.rel (%p166) target = $region43
        $region42: #{combined_loss.1} parent=15 // pred_region
          %p169 = scmp.lt.s32.totalorder %s15, 1
          %s170 = scalar_select %p169, %s15, 1
          %p171 = scmp.lt.s32.totalorder %s16, 1
          %s172 = scalar_select %p171, %s16, 1
          %s173 = smul.addr %s172, 2
          %s174 = smul.addr %s170, 4
          %s175 = sadd.s32 %s173, %s174
          %s176 = smul.addr %s175, 8
          %s177 = scalar_lea.vmem %s1, %s176
        $region43: #{combined_loss.1} parent=15 // pred_fallthru
          _
      $region16: #{combined_loss.1} parent=5 // pred_fallthru
        _
      %p178 = scmp.le.s32.totalorder 1, %s8
      %p179 = scmp.lt.s32.totalorder %s8, 5
      %p180 = pnand %p178, %p179
      %p181 = pneg %p180
      // Predicated region
      $region44: #{combined_loss.1} parent=5 // pred_check
        _
      $region45: #{combined_loss.1} parent=5 // pred_check_branch
        %183 = sbr.rel (%p180) target = $region47
      $region46: #{combined_loss.1} parent=5 // pred_region
        %s184 = ssub.s32 %s8, 1
        %s185 = sand.u32 %s35, 1
        %s186 = sand.u32 %s35, 1
        %s187 = smul.addr %s186, 64
        %s188 = scalar_lea.vmem [#allocation6], %s187
        // Predicated region
        $region48: #{combined_loss.1} parent=46 // pred_check
          %p189 = pneg %p48
        $region49: #{combined_loss.1} parent=46 // pred_check_branch
          %191 = sbr.rel (%p189) target = $region51
        $region50: #{combined_loss.1} parent=46 // pred_region
          _
        $region51: #{combined_loss.1} parent=46 // pred_fallthru
          _
        %s192 = sand.u32 %s35, 1
        %s193 = sand.u32 %s35, 1
        %s194 = smul.addr %s193, 64
        %s195 = scalar_lea.vmem [#allocation6], %s194
        %p196 = pneg %p48
        %p197 = pneg %p45
        %p198 = scmp.lt.s32.totalorder %s17, 1
        %s199 = scalar_select %p198, %s17, 1
        %p200 = scmp.lt.s32.totalorder %s18, 1
        %s201 = scalar_select %p200, %s18, 1
        %s202 = smul.addr %s201, 2
        %s203 = smul.addr %s199, 4
        %s204 = sadd.s32 %s202, %s203
        %s205 = smul.addr %s204, 8
        %s206 = scalar_lea.vmem %s1, %s205
        %p207 = pneg %p76
        %p208 = pneg %p73
        %p209 = pneg %p104
        %p210 = pneg %p101
        %p211 = scmp.lt.s32.totalorder %s17, 1
        %s212 = scalar_select %p211, %s17, 1
        %p213 = scmp.lt.s32.totalorder %s18, 1
        %s214 = scalar_select %p213, %s18, 1
        %s215 = smul.addr %s212, 2
        %s216 = sadd.s32 %s214, %s215
        %s217 = scalar_lea.vmem %s2, %s216
        %p218 = scmp.lt.s32.totalorder %s17, 1
        %s219 = scalar_select %p218, %s17, 1
        %p220 = scmp.lt.s32.totalorder %s18, 1
        %s221 = scalar_select %p220, %s18, 1
        %s222 = smul.addr %s221, 2
        %s223 = smul.addr %s219, 4
        %s224 = sadd.s32 %s222, %s223
        %s225 = smul.addr %s224, 8
        %s226 = scalar_lea.vmem %s1, %s225
        %p227 = scmp.lt.s32.totalorder %s17, 1
        %s228 = scalar_select %p227, %s17, 1
        %p229 = scmp.lt.s32.totalorder %s18, 1
        %s230 = scalar_select %p229, %s18, 1
        %s231 = smul.addr %s228, 2
        %s232 = sadd.s32 %s230, %s231
        %s233 = scalar_lea.vmem %s2, %s232
        %p234 = scmp.eq.s32.totalorder %s18, 0
        // Predicated region
        $region52: #{combined_loss.1} parent=46 // pred_check
          %p235 = pneg %p234
        $region53: #{combined_loss.1} parent=46 // pred_check_branch
          %237 = sbr.rel (%p235) target = $region55
        $region54: #{combined_loss.1} parent=46 // pred_region
          %238 = vst [vmem:[#allocation2] sm:$0xf] 0.0
          %239 = vst [vmem:[#allocation2 + $0x4] sm:$0xf] 0.0
          %240 = vst [vmem:[#allocation2 + $0x8] sm:$0xf] 0.0
          %241 = vst [vmem:[#allocation2 + $0xc] sm:$0xf] 0.0
          %242 = vst [vmem:[#allocation3] sm:$0xf] 0.0
          %243 = vst [vmem:[#allocation3 + $0x4] sm:$0xf] 0.0
          %244 = vst [vmem:[#allocation3 + $0x8] sm:$0xf] 0.0
          %245 = vst [vmem:[#allocation3 + $0xc] sm:$0xf] 0.0
          %246 = vst [vmem:[#allocation4] sm:$0xff] 0.0
          %247 = vst [vmem:[#allocation4 + $0x8] sm:$0xff] 0.0
          %248 = vst [vmem:[#allocation4 + $0x10] sm:$0xff] 0.0
          %249 = vst [vmem:[#allocation4 + $0x18] sm:$0xff] 0.0
          %250 = vst [vmem:[#allocation4 + $0x20] sm:$0x3] 0.0
          %251 = vst [vmem:[#allocation4 + $0x28] sm:$0x3] 0.0
          %252 = vst [vmem:[#allocation4 + $0x30] sm:$0x3] 0.0
          %253 = vst [vmem:[#allocation4 + $0x38] sm:$0x3] 0.0
          %254 = vst [vmem:[#allocation5] sm:$0xff] 0.0
          %255 = vst [vmem:[#allocation5 + $0x8] sm:$0xff] 0.0
          %256 = vst [vmem:[#allocation5 + $0x10] sm:$0xff] 0.0
          %257 = vst [vmem:[#allocation5 + $0x18] sm:$0xff] 0.0
          %258 = vst [vmem:[#allocation5 + $0x20] sm:$0x3] 0.0
          %259 = vst [vmem:[#allocation5 + $0x28] sm:$0x3] 0.0
          %260 = vst [vmem:[#allocation5 + $0x30] sm:$0x3] 0.0
          %261 = vst [vmem:[#allocation5 + $0x38] sm:$0x3] 0.0
        $region55: #{combined_loss.1} parent=46 // pred_fallthru
          _
        %v262 = vld [vmem:[%s226] sm:$0xff]
        %v263 = vld [vmem:[%s226 + $0x8] sm:$0xff]
        %v264 = vld [vmem:[%s188] sm:$0xff]
        %v265 = vld [vmem:[%s188 + $0x8] sm:$0xff]
        %s266 = scalar_lea.vmem %s188, 16 [#allocation6]
        %v267 = vld [vmem:[%s266] sm:$0xff]
        %v268 = vld [vmem:[%s266 + $0x8] sm:$0xff]
        %v269 = vmax.f32 %v264, %v267
        %v270 = vmax.f32 %v265, %v268
        %s271 = scalar_lea.vmem %s188, 32 [#allocation6]
        %v272 = vld [vmem:[%s271] sm:$0xff]
        %v273 = vld [vmem:[%s271 + $0x8] sm:$0xff]
        %v274 = vmax.f32 %v269, %v272
        %v275 = vmax.f32 %v270, %v273
        %s276 = scalar_lea.vmem %s188, 48 [#allocation6]
        %v277 = vld [vmem:[%s276] sm:$0xff]
        %v278 = vld [vmem:[%s276 + $0x8] sm:$0xff]
        %v279 = vmax.f32 %v274, %v277
        %v280 = vmax.f32 %v275, %v278
        %v281 = vsub.f32 %v264, %v279
        %v282 = vsub.f32 %v265, %v280
        %v283 = vmul.f32 %v281, 1.442695
        %v284 = vpow.pop %v283
        %v285 = vmul.f32 %v282, 1.442695
        %v286 = vpow.pop %v285
        %v287 = vsub.f32 %v267, %v279
        %v288 = vsub.f32 %v268, %v280
        %v289 = vmul.f32 %v287, 1.442695
        %v290 = vpow.pop %v289
        %v291 = vmul.f32 %v288, 1.442695
        %v292 = vpow.pop %v291
        %v293 = vadd.f32 %v284, %v290
        %v294 = vadd.f32 %v286, %v292
        %v295 = vsub.f32 %v272, %v279
        %v296 = vsub.f32 %v273, %v280
        %v297 = vmul.f32 %v295, 1.442695
        %v298 = vpow.pop %v297
        %v299 = vmul.f32 %v296, 1.442695
        %v300 = vpow.pop %v299
        %v301 = vadd.f32 %v293, %v298
        %v302 = vadd.f32 %v294, %v300
        %v303 = vsub.f32 %v277, %v279
        %v304 = vsub.f32 %v278, %v280
        %v305 = vmul.f32 %v303, 1.442695
        %v306 = vpow.pop %v305
        %v307 = vmul.f32 %v304, 1.442695
        %v308 = vpow.pop %v307
        %v309 = vadd.f32 %v301, %v306
        %v310 = vadd.f32 %v302, %v308
        %v311 = vrcp.pop %v309
        %v312 = vrcp.pop %v310
        %v313 = vlaneseq
        %v314 = vand.u32 %v313, 127
        %v315 = vadd.s32 %v314, 128
        %vm316 = vcmp.lt.s32.totalorder %v314, 0
        %v317 = vsub.s32 0, %v314
        %v318 = vsel %vm316, %v317, %v314
        %v319 = vshrl.u32 %v318, 4
        %v320 = vand.u32 %v318, 15
        %v321 = vsub.s32 0, %v320
        %v322 = vsel %vm316, %v321, %v320
        %vm323 = vcmp.lt.s32.totalorder %v315, 0
        %v324 = vsub.s32 0, %v315
        %v325 = vsel %vm323, %v324, %v315
        %v326 = vshrl.u32 %v325, 4
        %v327 = vand.u32 %v325, 15
        %v328 = vsub.s32 0, %v327
        %v329 = vsel %vm323, %v328, %v327
        %vm330 = vcmp.ne.s32.totalorder %v322, 0
        %vm331 = vcmp.ne.s32.totalorder %v329, 0
        %vm332 = vcmp.lt.s32.totalorder %v322, 0
        %vm333 = vcmp.lt.s32.totalorder %v329, 0
        %vm334 = vmand %vm332, %vm330
        %vm335 = vmand %vm333, %vm331
        %v336 = vadd.s32 %v322, 16
        %v337 = vadd.s32 %v329, 16
        %v338 = vsel %vm334, %v336, %v322
        %v339 = vsel %vm335, %v337, %v329
        %vm340 = vcmp.gt.s32.totalorder %v338, 0
        %vm341 = vcmp.gt.s32.totalorder %v339, 0
        %v342 = vsel %vm340, 1, 0
        %v343 = vsel %vm341, 1, 0
        %v344 = vcvt.s32.f32 %v342
        %v345 = vcvt.s32.f32 %v343
        %vm346 = vcmp.lt.s32.totalorder %v338, 15
        %vm347 = vcmp.lt.s32.totalorder %v339, 15
        %v348 = vsel %vm346, 1, 0
        %v349 = vsel %vm347, 1, 0
        %v350 = vcvt.s32.f32 %v348
        %v351 = vcvt.s32.f32 %v349
        %s352 = smul.u32 %s18, 8
        %v353 = vlaneseq
        %v354 = vshrl.u32 %v353, 7
        %s355 = ssub.s32 %s352, 1
        %v356 = vstv %s355
        %v357 = vadd.s32 %v356, %v354
        %vm358 = vcmp.ge.s32.totalorder %v357, 0
        %v359 = vsel %vm358, 1, 0
        %v360 = vcvt.s32.f32 %v359
        %p361 = scmp.eq.s32.totalorder %s18, 1
        %v362 = vmul.f32 %v284, %v311
        %v363 = vmul.f32 %v286, %v312
        %vm364 = vcmp.eq.s32.totalorder %v262, 0
        %vm365 = vcmp.eq.s32.totalorder %v263, 0
        %v366 = vsel %vm364, 1, 0
        %v367 = vsel %vm365, 1, 0
        %v368 = vcvt.s32.f32 %v366
        %v369 = vcvt.s32.f32 %v367
        %v370 = vsel %vm364, %v362, 0.0
        %v371 = vsel %vm365, %v363, 0.0
        %v372 = vadd.f32 %v370, %v371
        %373 = vadd.xlane.f32.xlu0 %v372
        %v374 = vpop.xlane.xlu0 %373
        %v375 = vrot.slane %v374, 4
        %v376 = vadd.f32 %v374, %v375
        %v377 = vrot.slane %v376, 2
        %v378 = vadd.f32 %v376, %v377
        %v379 = vrot.slane %v378, 1
        %v380 = vadd.f32 %v378, %v379
        %s381 = vtos %v380
        %v382 = vadd.f32 %v362, %v363
        %383 = vadd.xlane.f32.xlu0 %v382
        %v384 = vpop.xlane.xlu0 %383
        %v385 = vrot.slane %v384, 4
        %v386 = vadd.f32 %v384, %v385
        %v387 = vrot.slane %v386, 2
        %v388 = vadd.f32 %v386, %v387
        %v389 = vrot.slane %v388, 1
        %v390 = vadd.f32 %v388, %v389
        %s391 = vtos %v390
        %v392 = vadd.f32 %v368, %v369
        %393 = vadd.xlane.f32.xlu0 %v392
        %v394 = vpop.xlane.xlu0 %393
        %v395 = vrot.slane %v394, 4
        %v396 = vadd.f32 %v394, %v395
        %v397 = vrot.slane %v396, 2
        %v398 = vadd.f32 %v396, %v397
        %v399 = vrot.slane %v398, 1
        %v400 = vadd.f32 %v398, %v399
        %s401 = vtos %v400
        %v402 = vsub.f32 1.0, %v362
        %v403 = vsub.f32 1.0, %v363
        %v404 = vsel %vm364, %v362, %v402
        %v405 = vsel %vm365, %v363, %v403
        %v406 = vsel %vm364, 0.25, 0.75
        %v407 = vsel %vm365, 0.25, 0.75
        %v408 = vsub.f32 1.0, %v404
        %v409 = vsub.f32 1.0, %v405
        %v410 = vmul.f32 %v406, %v408
        %v411 = vmul.f32 %v407, %v409
        %v412 = vmul.f32 %v410, %v408
        %v413 = vmul.f32 %v411, %v409
        %v414 = vadd.f32 %v404, 1e-07
        %v415 = vadd.f32 %v405, 1e-07
        %v416 = vlog2.pop %v414
        %v417 = vmul.f32 %v416, 0.6931472
        %v418 = vlog2.pop %v415
        %v419 = vmul.f32 %v418, 0.6931472
        %v420 = vsub.f32 0.0, %v417
        %v421 = vsub.f32 0.0, %v419
        %v422 = vmul.f32 %v412, %v420
        %v423 = vmul.f32 %v413, %v421
        %v424 = vadd.f32 %v422, %v423
        %425 = vadd.xlane.f32.xlu0 %v424
        %v426 = vpop.xlane.xlu0 %425
        %v427 = vrot.slane %v426, 4
        %v428 = vadd.f32 %v426, %v427
        %v429 = vrot.slane %v428, 2
        %v430 = vadd.f32 %v428, %v429
        %v431 = vrot.slane %v430, 1
        %v432 = vadd.f32 %v430, %v431
        %s433 = vtos %v432
        %s434 = sadd.f32 %s433, 0.0
        %v435 = vmul.f32 %v290, %v311
        %v436 = vmul.f32 %v292, %v312
        %vm437 = vcmp.eq.s32.totalorder %v262, 1
        %vm438 = vcmp.eq.s32.totalorder %v263, 1
        %v439 = vsel %vm437, 1, 0
        %v440 = vsel %vm438, 1, 0
        %v441 = vcvt.s32.f32 %v439
        %v442 = vcvt.s32.f32 %v440
        %v443 = vsel %vm437, %v435, 0.0
        %v444 = vsel %vm438, %v436, 0.0
        %v445 = vadd.f32 %v443, %v444
        %446 = vadd.xlane.f32.xlu0 %v445
        %v447 = vpop.xlane.xlu0 %446
        %v448 = vrot.slane %v447, 4
        %v449 = vadd.f32 %v447, %v448
        %v450 = vrot.slane %v449, 2
        %v451 = vadd.f32 %v449, %v450
        %v452 = vrot.slane %v451, 1
        %v453 = vadd.f32 %v451, %v452
        %s454 = vtos %v453
        %v455 = vadd.f32 %v435, %v436
        %456 = vadd.xlane.f32.xlu0 %v455
        %v457 = vpop.xlane.xlu0 %456
        %v458 = vrot.slane %v457, 4
        %v459 = vadd.f32 %v457, %v458
        %v460 = vrot.slane %v459, 2
        %v461 = vadd.f32 %v459, %v460
        %v462 = vrot.slane %v461, 1
        %v463 = vadd.f32 %v461, %v462
        %s464 = vtos %v463
        %v465 = vadd.f32 %v441, %v442
        %466 = vadd.xlane.f32.xlu0 %v465
        %v467 = vpop.xlane.xlu0 %466
        %v468 = vrot.slane %v467, 4
        %v469 = vadd.f32 %v467, %v468
        %v470 = vrot.slane %v469, 2
        %v471 = vadd.f32 %v469, %v470
        %v472 = vrot.slane %v471, 1
        %v473 = vadd.f32 %v471, %v472
        %s474 = vtos %v473
        %v475 = vsub.f32 1.0, %v435
        %v476 = vsub.f32 1.0, %v436
        %v477 = vsel %vm437, %v435, %v475
        %v478 = vsel %vm438, %v436, %v476
        %v479 = vsel %vm437, 0.25, 0.75
        %v480 = vsel %vm438, 0.25, 0.75
        %v481 = vsub.f32 1.0, %v477
        %v482 = vsub.f32 1.0, %v478
        %v483 = vmul.f32 %v479, %v481
        %v484 = vmul.f32 %v480, %v482
        %v485 = vmul.f32 %v483, %v481
        %v486 = vmul.f32 %v484, %v482
        %v487 = vadd.f32 %v477, 1e-07
        %v488 = vadd.f32 %v478, 1e-07
        %v489 = vlog2.pop %v487
        %v490 = vmul.f32 %v489, 0.6931472
        %v491 = vlog2.pop %v488
        %v492 = vmul.f32 %v491, 0.6931472
        %v493 = vsub.f32 0.0, %v490
        %v494 = vsub.f32 0.0, %v492
        %v495 = vmul.f32 %v485, %v493
        %v496 = vmul.f32 %v486, %v494
        %v497 = vadd.f32 %v495, %v496
        %498 = vadd.xlane.f32.xlu0 %v497
        %v499 = vpop.xlane.xlu0 %498
        %v500 = vrot.slane %v499, 4
        %v501 = vadd.f32 %v499, %v500
        %v502 = vrot.slane %v501, 2
        %v503 = vadd.f32 %v501, %v502
        %v504 = vrot.slane %v503, 1
        %v505 = vadd.f32 %v503, %v504
        %s506 = vtos %v505
        %s507 = sadd.f32 %s434, %s506
        %s508 = scalar_lea.vmem [#allocation2], 4
        %v509 = vld [vmem:[%s508] sm:$0xf]
        %511 = vst [vmem:[#allocation1] ss:$4 sm:$0xff] %v509
        %v512 = vld.sshfl [vmem:[#allocation1] sm:$0xff pattern:$0x73625140]
        %v513 = vld.sshfl [vmem:[#allocation1 + $0x8] sm:$0xff pattern:$0x73625140]
        %516 = vst [vmem:[#allocation4 + $0x8] sm:$0x3] %v512
        %517 = vst [vmem:[#allocation4 + $0x10] sm:$0x3] %v513
        %s518 = scalar_lea.vmem [#allocation3], 4
        %v519 = vld [vmem:[%s518] sm:$0xf]
        %521 = vst [vmem:[#allocation1] ss:$4 sm:$0xff] %v519
        %v522 = vld.sshfl [vmem:[#allocation1] sm:$0xff pattern:$0x73625140]
        %v523 = vld.sshfl [vmem:[#allocation1 + $0x8] sm:$0xff pattern:$0x73625140]
        %526 = vst [vmem:[#allocation5 + $0x8] sm:$0x3] %v522
        %527 = vst [vmem:[#allocation5 + $0x10] sm:$0x3] %v523
        %v530 = vrot.slane %v435, 6
        %v531 = vrot.slane %v436, 6
        %534 = vst [vmem:[#allocation4 + $0x8] sm:$0xfc] %v530
        %535 = vst [vmem:[#allocation4 + $0x10] sm:$0xfc] %v531
        %536 = vst [vmem:[#allocation4 + $0x28] sm:$0x3] %v530
        %537 = vst [vmem:[#allocation4 + $0x30] sm:$0x3] %v531
        %v540 = vrot.slane %v441, 6
        %v541 = vrot.slane %v442, 6
        %544 = vst [vmem:[#allocation5 + $0x8] sm:$0xfc] %v540
        %545 = vst [vmem:[#allocation5 + $0x10] sm:$0xfc] %v541
        %546 = vst [vmem:[#allocation5 + $0x28] sm:$0x3] %v540
        %547 = vst [vmem:[#allocation5 + $0x30] sm:$0x3] %v541
        %548 = vst.sshfl [vmem:[#allocation1] sm:$0xff pattern:$0x73625140] %v435
        %549 = vst.sshfl [vmem:[#allocation1 + $0x8] sm:$0xff pattern:$0x73625140] %v436
        %s550 = scalar_lea.vmem [#allocation1], 3
        %v551 = vld [vmem:[%s550] ss:$4 sm:$0xff]
        %553 = vst [vmem:[%s508] sm:$0xf] %v551
        %554 = vst.sshfl [vmem:[#allocation1] sm:$0xff pattern:$0x73625140] %v441
        %555 = vst.sshfl [vmem:[#allocation1 + $0x8] sm:$0xff pattern:$0x73625140] %v442
        %s556 = scalar_lea.vmem [#allocation1], 3
        %v557 = vld [vmem:[%s556] ss:$4 sm:$0xff]
        %559 = vst [vmem:[%s518] sm:$0xf] %v557
        %v560 = vld [vmem:[#allocation4 + $0x8] sm:$0xfe]
        %v561 = vld [vmem:[#allocation4 + $0x10] sm:$0xfe]
        %v562 = vld [vmem:[#allocation4 + $0x28] sm:$0x1]
        %v563 = vld [vmem:[#allocation4 + $0x30] sm:$0x1]
        %v564 = vld [vmem:[#allocation4 + $0x8] sm:$0xff]
        %v565 = vld [vmem:[#allocation4 + $0x10] sm:$0xff]
        %v566 = vadd.f32 %v564, %v435
        %v567 = vadd.f32 %v565, %v436
        %v568 = vld [vmem:[#allocation4] sm:$0xfe]
        %v569 = vld [vmem:[#allocation4 + $0x20] sm:$0x1]
        %vm576 = vcmask 1046528
        %v577 = vrot.slane %v568, 1
        %v578 = vrot.slane %v569, 1
        %v579 = vsel %vm576, %v577, %v578
        %v580 = vrot.slane %v560, 1
        %v581 = vrot.slane %v562, 1
        %v582 = vsel %vm576, %v580, %v581
        %v583 = vrot.slane %v561, 1
        %v584 = vrot.slane %v563, 1
        %v585 = vsel %vm576, %v583, %v584
        %586 = vrot.lane.b32.xlu0 %v579, 16
        %v587 = vpop.permute.xlu0 %586
        %588 = vrot.lane.b32.xlu0 %v582, 16
        %v589 = vpop.permute.xlu0 %588
        %590 = vrot.lane.b32.xlu0 %v585, 16
        %v591 = vpop.permute.xlu0 %590
        %vm592 = vcmask 130048
        %v593 = vsel %vm592, %v587, %v589
        %v594 = vsel %vm592, %v589, %v591
        %v597 = vadd.f32 %v566, %v593
        %v598 = vadd.f32 %v567, %v594
        %v599 = vld [vmem:[#allocation4 + $0x18] sm:$0xfe]
        %v600 = vld [vmem:[#allocation4 + $0x38] sm:$0x1]
        %v603 = vrot.slane %v599, 1
        %v604 = vrot.slane %v600, 1
        %v605 = vsel %vm576, %v603, %v604
        %606 = vrot.lane.b32.xlu0 %v582, 112
        %v607 = vpop.permute.xlu0 %606
        %608 = vrot.lane.b32.xlu0 %v585, 112
        %v609 = vpop.permute.xlu0 %608
        %610 = vrot.lane.b32.xlu0 %v605, 112
        %v611 = vpop.permute.xlu0 %610
        %vm612 = vcmask 916480
        %v613 = vsel %vm612, %v607, %v609
        %v614 = vsel %vm612, %v609, %v611
        %v617 = vadd.f32 %v597, %v613
        %v618 = vadd.f32 %v598, %v614
        %621 = vrot.lane.b32.xlu0 %v344, 127
        %v622 = vpop.permute.xlu0 %621
        %623 = vrot.lane.b32.xlu0 %v345, 127
        %v624 = vpop.permute.xlu0 %623
        %vm625 = vcmask 1039360
        %v626 = vsel %vm625, %v622, %v624
        %v630 = vmul.f32 %v568, %v622
        %v631 = vmul.f32 %v560, %v626
        %v632 = vmul.f32 %v561, %v624
        %v633 = vmul.f32 %v569, %v622
        %v634 = vmul.f32 %v562, %v626
        %v635 = vmul.f32 %v563, %v624
        %v642 = vrot.slane %v630, 1
        %v643 = vrot.slane %v633, 1
        %v644 = vsel %vm576, %v642, %v643
        %v645 = vrot.slane %v631, 1
        %v646 = vrot.slane %v634, 1
        %v647 = vsel %vm576, %v645, %v646
        %v648 = vrot.slane %v632, 1
        %v649 = vrot.slane %v635, 1
        %v650 = vsel %vm576, %v648, %v649
        %651 = vrot.lane.b32.xlu0 %v644, 1
        %v652 = vpop.permute.xlu0 %651
        %653 = vrot.lane.b32.xlu0 %v647, 1
        %v654 = vpop.permute.xlu0 %653
        %655 = vrot.lane.b32.xlu0 %v650, 1
        %v656 = vpop.permute.xlu0 %655
        %vm657 = vcmask 7168
        %v658 = vsel %vm657, %v652, %v654
        %v659 = vsel %vm657, %v654, %v656
        %v662 = vadd.f32 %v617, %v658
        %v663 = vadd.f32 %v618, %v659
        %666 = vrot.lane.b32.xlu0 %v350, 1
        %v667 = vpop.permute.xlu0 %666
        %668 = vrot.lane.b32.xlu0 %v351, 1
        %v669 = vpop.permute.xlu0 %668
        %v670 = vsel %vm657, %v667, %v669
        %v674 = vmul.f32 %v560, %v667
        %v675 = vmul.f32 %v561, %v670
        %v676 = vmul.f32 %v599, %v669
        %v677 = vmul.f32 %v562, %v667
        %v678 = vmul.f32 %v563, %v670
        %v679 = vmul.f32 %v600, %v669
        %v686 = vrot.slane %v674, 1
        %v687 = vrot.slane %v677, 1
        %v688 = vsel %vm576, %v686, %v687
        %v689 = vrot.slane %v675, 1
        %v690 = vrot.slane %v678, 1
        %v691 = vsel %vm576, %v689, %v690
        %v692 = vrot.slane %v676, 1
        %v693 = vrot.slane %v679, 1
        %v694 = vsel %vm576, %v692, %v693
        %695 = vrot.lane.b32.xlu0 %v688, 127
        %v696 = vpop.permute.xlu0 %695
        %697 = vrot.lane.b32.xlu0 %v691, 127
        %v698 = vpop.permute.xlu0 %697
        %699 = vrot.lane.b32.xlu0 %v694, 127
        %v700 = vpop.permute.xlu0 %699
        %v701 = vsel %vm625, %v696, %v698
        %v702 = vsel %vm625, %v698, %v700
        %v705 = vadd.f32 %v662, %v701
        %v706 = vadd.f32 %v663, %v702
        %v707 = vmul.f32 %v560, 6.0
        %v708 = vmul.f32 %v561, 6.0
        %v709 = vmul.f32 %v562, 6.0
        %v710 = vmul.f32 %v563, 6.0
        %v715 = vrot.slane %v707, 1
        %v716 = vrot.slane %v709, 1
        %v717 = vsel %vm576, %v715, %v716
        %v718 = vrot.slane %v708, 1
        %v719 = vrot.slane %v710, 1
        %v720 = vsel %vm576, %v718, %v719
        %v723 = vsub.f32 %v705, %v717
        %v724 = vsub.f32 %v706, %v720
        %v725 = vand.u32 2147483647, %v723
        %v726 = vand.u32 2147483647, %v724
        %v727 = vld [vmem:[#allocation5 + $0x8] sm:$0xfe]
        %v728 = vld [vmem:[#allocation5 + $0x10] sm:$0xfe]
        %v729 = vld [vmem:[#allocation5 + $0x28] sm:$0x1]
        %v730 = vld [vmem:[#allocation5 + $0x30] sm:$0x1]
        %v731 = vld [vmem:[#allocation5 + $0x8] sm:$0xff]
        %v732 = vld [vmem:[#allocation5 + $0x10] sm:$0xff]
        %v733 = vadd.f32 %v731, %v441
        %v734 = vadd.f32 %v732, %v442
        %v735 = vld [vmem:[#allocation5] sm:$0xfe]
        %v736 = vld [vmem:[#allocation5 + $0x20] sm:$0x1]
        %v743 = vrot.slane %v735, 1
        %v744 = vrot.slane %v736, 1
        %v745 = vsel %vm576, %v743, %v744
        %v746 = vrot.slane %v727, 1
        %v747 = vrot.slane %v729, 1
        %v748 = vsel %vm576, %v746, %v747
        %v749 = vrot.slane %v728, 1
        %v750 = vrot.slane %v730, 1
        %v751 = vsel %vm576, %v749, %v750
        %752 = vrot.lane.b32.xlu0 %v745, 16
        %v753 = vpop.permute.xlu0 %752
        %754 = vrot.lane.b32.xlu0 %v748, 16
        %v755 = vpop.permute.xlu0 %754
        %756 = vrot.lane.b32.xlu0 %v751, 16
        %v757 = vpop.permute.xlu0 %756
        %v758 = vsel %vm592, %v753, %v755
        %v759 = vsel %vm592, %v755, %v757
        %v762 = vadd.f32 %v733, %v758
        %v763 = vadd.f32 %v734, %v759
        %v764 = vld [vmem:[#allocation5 + $0x18] sm:$0xfe]
        %v765 = vld [vmem:[#allocation5 + $0x38] sm:$0x1]
        %v768 = vrot.slane %v764, 1
        %v769 = vrot.slane %v765, 1
        %v770 = vsel %vm576, %v768, %v769
        %771 = vrot.lane.b32.xlu0 %v748, 112
        %v772 = vpop.permute.xlu0 %771
        %773 = vrot.lane.b32.xlu0 %v751, 112
        %v774 = vpop.permute.xlu0 %773
        %775 = vrot.lane.b32.xlu0 %v770, 112
        %v776 = vpop.permute.xlu0 %775
        %v777 = vsel %vm612, %v772, %v774
        %v778 = vsel %vm612, %v774, %v776
        %v781 = vadd.f32 %v762, %v777
        %v782 = vadd.f32 %v763, %v778
        %v783 = vmul.f32 %v735, %v622
        %v784 = vmul.f32 %v727, %v626
        %v785 = vmul.f32 %v728, %v624
        %v786 = vmul.f32 %v736, %v622
        %v787 = vmul.f32 %v729, %v626
        %v788 = vmul.f32 %v730, %v624
        %v795 = vrot.slane %v783, 1
        %v796 = vrot.slane %v786, 1
        %v797 = vsel %vm576, %v795, %v796
        %v798 = vrot.slane %v784, 1
        %v799 = vrot.slane %v787, 1
        %v800 = vsel %vm576, %v798, %v799
        %v801 = vrot.slane %v785, 1
        %v802 = vrot.slane %v788, 1
        %v803 = vsel %vm576, %v801, %v802
        %804 = vrot.lane.b32.xlu0 %v797, 1
        %v805 = vpop.permute.xlu0 %804
        %806 = vrot.lane.b32.xlu0 %v800, 1
        %v807 = vpop.permute.xlu0 %806
        %808 = vrot.lane.b32.xlu0 %v803, 1
        %v809 = vpop.permute.xlu0 %808
        %v810 = vsel %vm657, %v805, %v807
        %v811 = vsel %vm657, %v807, %v809
        %v814 = vadd.f32 %v781, %v810
        %v815 = vadd.f32 %v782, %v811
        %v816 = vmul.f32 %v727, %v667
        %v817 = vmul.f32 %v728, %v670
        %v818 = vmul.f32 %v764, %v669
        %v819 = vmul.f32 %v729, %v667
        %v820 = vmul.f32 %v730, %v670
        %v821 = vmul.f32 %v765, %v669
        %v828 = vrot.slane %v816, 1
        %v829 = vrot.slane %v819, 1
        %v830 = vsel %vm576, %v828, %v829
        %v831 = vrot.slane %v817, 1
        %v832 = vrot.slane %v820, 1
        %v833 = vsel %vm576, %v831, %v832
        %v834 = vrot.slane %v818, 1
        %v835 = vrot.slane %v821, 1
        %v836 = vsel %vm576, %v834, %v835
        %837 = vrot.lane.b32.xlu0 %v830, 127
        %v838 = vpop.permute.xlu0 %837
        %839 = vrot.lane.b32.xlu0 %v833, 127
        %v840 = vpop.permute.xlu0 %839
        %841 = vrot.lane.b32.xlu0 %v836, 127
        %v842 = vpop.permute.xlu0 %841
        %v843 = vsel %vm625, %v838, %v840
        %v844 = vsel %vm625, %v840, %v842
        %v847 = vadd.f32 %v814, %v843
        %v848 = vadd.f32 %v815, %v844
        %v849 = vmul.f32 %v727, 6.0
        %v850 = vmul.f32 %v728, 6.0
        %v851 = vmul.f32 %v729, 6.0
        %v852 = vmul.f32 %v730, 6.0
        %v857 = vrot.slane %v849, 1
        %v858 = vrot.slane %v851, 1
        %v859 = vsel %vm576, %v857, %v858
        %v860 = vrot.slane %v850, 1
        %v861 = vrot.slane %v852, 1
        %v862 = vsel %vm576, %v860, %v861
        %v865 = vsub.f32 %v847, %v859
        %v866 = vsub.f32 %v848, %v862
        %v867 = vand.u32 2147483647, %v865
        %v868 = vand.u32 2147483647, %v866
        %v869 = vsub.f32 %v725, %v867
        %v870 = vsub.f32 %v726, %v868
        %v871 = vmul.f32 %v869, %v869
        %v872 = vmul.f32 %v870, %v870
        %v873 = vmul.f32 %v871, %v360
        %v874 = vmul.f32 %v872, %v360
        %v875 = vadd.f32 %v873, %v874
        %876 = vadd.xlane.f32.xlu0 %v875
        %v877 = vpop.xlane.xlu0 %876
        %v878 = vrot.slane %v877, 4
        %v879 = vadd.f32 %v877, %v878
        %v880 = vrot.slane %v879, 2
        %v881 = vadd.f32 %v879, %v880
        %v882 = vrot.slane %v881, 1
        %v883 = vadd.f32 %v881, %v882
        %s884 = vtos %v883
        %s885 = sadd.f32 %s884, 0.0
        %s886 = scalar_lea.vmem [#allocation4], 41
        %v887 = vld [vmem:[%s886] ss:$8 sm:$0x3]
        %s888 = scalar_lea.vmem [#allocation4], 40
        %v889 = vld [vmem:[%s888] ss:$8 sm:$0x3]
        %v890 = vadd.f32 %v889, 0.0
        %s891 = scalar_lea.vmem [#allocation4], 33
        %v892 = vld [vmem:[%s891] ss:$8 sm:$0x7]
        %894 = vrot.lane.b32.xlu0 %v892, 16
        %v895 = vpop.permute.xlu0 %894
        %v896 = vrot.slane %v895, 1
        %v897 = vsel %vm592, %v895, %v896
        %v899 = vadd.f32 %v890, %v897
        %v900 = vld [vmem:[%s886] ss:$8 sm:$0x7]
        %902 = vrot.lane.b32.xlu0 %v900, 112
        %v903 = vpop.permute.xlu0 %902
        %v904 = vrot.slane %v903, 1
        %v905 = vsel %vm612, %v903, %v904
        %v907 = vadd.f32 %v899, %v905
        %v908 = vrot.slane %v345, 7
        %vm909 = vcmask 1040384
        %v910 = vsel %vm909, %v344, %v908
        %911 = vrot.lane.b32.xlu0 %v910, 127
        %v912 = vpop.permute.xlu0 %911
        %v913 = vrot.slane %v912, 7
        %v914 = vsel %vm625, %v913, %v912
        %v916 = vmul.f32 %v892, %v914
        %918 = vrot.lane.b32.xlu0 %v916, 1
        %v919 = vpop.permute.xlu0 %918
        %v920 = vrot.slane %v919, 1
        %v921 = vsel %vm657, %v919, %v920
        %v923 = vadd.f32 %v907, %v921
        %v924 = vrot.slane %v351, 7
        %v925 = vsel %vm909, %v350, %v924
        %926 = vrot.lane.b32.xlu0 %v925, 1
        %v927 = vpop.permute.xlu0 %926
        %v928 = vrot.slane %v927, 7
        %v929 = vsel %vm657, %v928, %v927
        %v931 = vmul.f32 %v900, %v929
        %933 = vrot.lane.b32.xlu0 %v931, 127
        %v934 = vpop.permute.xlu0 %933
        %v935 = vrot.slane %v934, 1
        %v936 = vsel %vm625, %v934, %v935
        %v938 = vadd.f32 %v923, %v936
        %v939 = vmul.f32 %v887, 6.0
        %v940 = vsub.f32 %v938, %v939
        %v941 = vand.u32 2147483647, %v940
        %s942 = scalar_lea.vmem [#allocation5], 41
        %v943 = vld [vmem:[%s942] ss:$8 sm:$0x3]
        %s944 = scalar_lea.vmem [#allocation5], 40
        %v945 = vld [vmem:[%s944] ss:$8 sm:$0x3]
        %v946 = vadd.f32 %v945, 0.0
        %s947 = scalar_lea.vmem [#allocation5], 33
        %v948 = vld [vmem:[%s947] ss:$8 sm:$0x7]
        %950 = vrot.lane.b32.xlu0 %v948, 16
        %v951 = vpop.permute.xlu0 %950
        %v952 = vrot.slane %v951, 1
        %v953 = vsel %vm592, %v951, %v952
        %v955 = vadd.f32 %v946, %v953
        %v956 = vld [vmem:[%s942] ss:$8 sm:$0x7]
        %958 = vrot.lane.b32.xlu0 %v956, 112
        %v959 = vpop.permute.xlu0 %958
        %v960 = vrot.slane %v959, 1
        %v961 = vsel %vm612, %v959, %v960
        %v963 = vadd.f32 %v955, %v961
        %v964 = vmul.f32 %v948, %v914
        %966 = vrot.lane.b32.xlu0 %v964, 1
        %v967 = vpop.permute.xlu0 %966
        %v968 = vrot.slane %v967, 1
        %v969 = vsel %vm657, %v967, %v968
        %v971 = vadd.f32 %v963, %v969
        %v972 = vmul.f32 %v956, %v929
        %974 = vrot.lane.b32.xlu0 %v972, 127
        %v975 = vpop.permute.xlu0 %974
        %v976 = vrot.slane %v975, 1
        %v977 = vsel %vm625, %v975, %v976
        %v979 = vadd.f32 %v971, %v977
        %v980 = vmul.f32 %v943, 6.0
        %v981 = vsub.f32 %v979, %v980
        %v982 = vand.u32 2147483647, %v981
        %v983 = vsub.f32 %v941, %v982
        %v984 = vmul.f32 %v983, %v983
        %v986 = vperm.slane %v984, 0
        %v987 = vperm.slane %v984, 1
        %v990 = vsel %vm909, %v986, 0.0
        %v991 = vsel %vm909, %v987, 0.0
        %v992 = vadd.f32 %v990, %v991
        %993 = vadd.xlane.f32.xlu0 %v992
        %v994 = vpop.xlane.xlu0 %993
        %v995 = vrot.slane %v994, 4
        %v996 = vadd.f32 %v994, %v995
        %v997 = vrot.slane %v996, 2
        %v998 = vadd.f32 %v996, %v997
        %v999 = vrot.slane %v998, 1
        %v1000 = vadd.f32 %v998, %v999
        %s1001 = vtos %v1000
        %s1002 = scalar_select %p361, %s1001, 0.0
        %s1003 = sadd.f32 %s885, %s1002
        %v1004 = vld [vmem:[%s271] sm:$0xff]
        %v1005 = vld [vmem:[%s271 + $0x8] sm:$0xff]
        %v1006 = vsub.f32 %v1004, %v279
        %v1007 = vsub.f32 %v1005, %v280
        %v1008 = vmul.f32 %v1006, 1.442695
        %v1009 = vpow.pop %v1008
        %v1010 = vmul.f32 %v1007, 1.442695
        %v1011 = vpow.pop %v1010
        %v1012 = vmul.f32 %v1009, %v311
        %v1013 = vmul.f32 %v1011, %v312
        %vm1014 = vcmp.eq.s32.totalorder %v262, 2
        %vm1015 = vcmp.eq.s32.totalorder %v263, 2
        %v1016 = vsel %vm1014, 1, 0
        %v1017 = vsel %vm1015, 1, 0
        %v1018 = vcvt.s32.f32 %v1016
        %v1019 = vcvt.s32.f32 %v1017
        %v1020 = vsel %vm1014, %v1012, 0.0
        %v1021 = vsel %vm1015, %v1013, 0.0
        %v1022 = vadd.f32 %v1020, %v1021
        %1023 = vadd.xlane.f32.xlu0 %v1022
        %v1024 = vpop.xlane.xlu0 %1023
        %v1025 = vrot.slane %v1024, 4
        %v1026 = vadd.f32 %v1024, %v1025
        %v1027 = vrot.slane %v1026, 2
        %v1028 = vadd.f32 %v1026, %v1027
        %v1029 = vrot.slane %v1028, 1
        %v1030 = vadd.f32 %v1028, %v1029
        %s1031 = vtos %v1030
        %v1032 = vadd.f32 %v1012, %v1013
        %1033 = vadd.xlane.f32.xlu0 %v1032
        %v1034 = vpop.xlane.xlu0 %1033
        %v1035 = vrot.slane %v1034, 4
        %v1036 = vadd.f32 %v1034, %v1035
        %v1037 = vrot.slane %v1036, 2
        %v1038 = vadd.f32 %v1036, %v1037
        %v1039 = vrot.slane %v1038, 1
        %v1040 = vadd.f32 %v1038, %v1039
        %s1041 = vtos %v1040
        %v1042 = vadd.f32 %v1018, %v1019
        %1043 = vadd.xlane.f32.xlu0 %v1042
        %v1044 = vpop.xlane.xlu0 %1043
        %v1045 = vrot.slane %v1044, 4
        %v1046 = vadd.f32 %v1044, %v1045
        %v1047 = vrot.slane %v1046, 2
        %v1048 = vadd.f32 %v1046, %v1047
        %v1049 = vrot.slane %v1048, 1
        %v1050 = vadd.f32 %v1048, %v1049
        %s1051 = vtos %v1050
        %v1052 = vsub.f32 1.0, %v1012
        %v1053 = vsub.f32 1.0, %v1013
        %v1054 = vsel %vm1014, %v1012, %v1052
        %v1055 = vsel %vm1015, %v1013, %v1053
        %v1056 = vsel %vm1014, 0.25, 0.75
        %v1057 = vsel %vm1015, 0.25, 0.75
        %v1058 = vsub.f32 1.0, %v1054
        %v1059 = vsub.f32 1.0, %v1055
        %v1060 = vmul.f32 %v1056, %v1058
        %v1061 = vmul.f32 %v1057, %v1059
        %v1062 = vmul.f32 %v1060, %v1058
        %v1063 = vmul.f32 %v1061, %v1059
        %v1064 = vadd.f32 %v1054, 1e-07
        %v1065 = vadd.f32 %v1055, 1e-07
        %v1066 = vlog2.pop %v1064
        %v1067 = vmul.f32 %v1066, 0.6931472
        %v1068 = vlog2.pop %v1065
        %v1069 = vmul.f32 %v1068, 0.6931472
        %v1070 = vsub.f32 0.0, %v1067
        %v1071 = vsub.f32 0.0, %v1069
        %v1072 = vmul.f32 %v1062, %v1070
        %v1073 = vmul.f32 %v1063, %v1071
        %v1074 = vadd.f32 %v1072, %v1073
        %1075 = vadd.xlane.f32.xlu0 %v1074
        %v1076 = vpop.xlane.xlu0 %1075
        %v1077 = vrot.slane %v1076, 4
        %v1078 = vadd.f32 %v1076, %v1077
        %v1079 = vrot.slane %v1078, 2
        %v1080 = vadd.f32 %v1078, %v1079
        %v1081 = vrot.slane %v1080, 1
        %v1082 = vadd.f32 %v1080, %v1081
        %s1083 = vtos %v1082
        %s1084 = sadd.f32 %s507, %s1083
        %s1085 = scalar_lea.vmem [#allocation2], 8
        %v1086 = vld [vmem:[%s1085] sm:$0xf]
        %1088 = vst [vmem:[#allocation1] ss:$4 sm:$0xff] %v1086
        %v1089 = vld.sshfl [vmem:[#allocation1] sm:$0xff pattern:$0x73625140]
        %v1090 = vld.sshfl [vmem:[#allocation1 + $0x8] sm:$0xff pattern:$0x73625140]
        %1093 = vst [vmem:[#allocation4 + $0x8] sm:$0x3] %v1089
        %1094 = vst [vmem:[#allocation4 + $0x10] sm:$0x3] %v1090
        %s1095 = scalar_lea.vmem [#allocation3], 8
        %v1096 = vld [vmem:[%s1095] sm:$0xf]
        %1098 = vst [vmem:[#allocation1] ss:$4 sm:$0xff] %v1096
        %v1099 = vld.sshfl [vmem:[#allocation1] sm:$0xff pattern:$0x73625140]
        %v1100 = vld.sshfl [vmem:[#allocation1 + $0x8] sm:$0xff pattern:$0x73625140]
        %1103 = vst [vmem:[#allocation5 + $0x8] sm:$0x3] %v1099
        %1104 = vst [vmem:[#allocation5 + $0x10] sm:$0x3] %v1100
        %v1107 = vrot.slane %v1012, 6
        %v1108 = vrot.slane %v1013, 6
        %1111 = vst [vmem:[#allocation4 + $0x8] sm:$0xfc] %v1107
        %1112 = vst [vmem:[#allocation4 + $0x10] sm:$0xfc] %v1108
        %1113 = vst [vmem:[#allocation4 + $0x28] sm:$0x3] %v1107
        %1114 = vst [vmem:[#allocation4 + $0x30] sm:$0x3] %v1108
        %v1117 = vrot.slane %v1018, 6
        %v1118 = vrot.slane %v1019, 6
        %1121 = vst [vmem:[#allocation5 + $0x8] sm:$0xfc] %v1117
        %1122 = vst [vmem:[#allocation5 + $0x10] sm:$0xfc] %v1118
        %1123 = vst [vmem:[#allocation5 + $0x28] sm:$0x3] %v1117
        %1124 = vst [vmem:[#allocation5 + $0x30] sm:$0x3] %v1118
        %1125 = vst.sshfl [vmem:[#allocation1] sm:$0xff pattern:$0x73625140] %v1012
        %1126 = vst.sshfl [vmem:[#allocation1 + $0x8] sm:$0xff pattern:$0x73625140] %v1013
        %s1127 = scalar_lea.vmem [#allocation1], 3
        %v1128 = vld [vmem:[%s1127] ss:$4 sm:$0xff]
        %1130 = vst [vmem:[%s1085] sm:$0xf] %v1128
        %1131 = vst.sshfl [vmem:[#allocation1] sm:$0xff pattern:$0x73625140] %v1018
        %1132 = vst.sshfl [vmem:[#allocation1 + $0x8] sm:$0xff pattern:$0x73625140] %v1019
        %s1133 = scalar_lea.vmem [#allocation1], 3
        %v1134 = vld [vmem:[%s1133] ss:$4 sm:$0xff]
        %1136 = vst [vmem:[%s1095] sm:$0xf] %v1134
        %v1137 = vld [vmem:[#allocation4 + $0x8] sm:$0xfe]
        %v1138 = vld [vmem:[#allocation4 + $0x10] sm:$0xfe]
        %v1139 = vld [vmem:[#allocation4 + $0x28] sm:$0x1]
        %v1140 = vld [vmem:[#allocation4 + $0x30] sm:$0x1]
        %v1141 = vld [vmem:[#allocation4 + $0x8] sm:$0xff]
        %v1142 = vld [vmem:[#allocation4 + $0x10] sm:$0xff]
        %v1143 = vadd.f32 %v1141, %v1012
        %v1144 = vadd.f32 %v1142, %v1013
        %v1145 = vld [vmem:[#allocation4] sm:$0xfe]
        %v1146 = vld [vmem:[#allocation4 + $0x20] sm:$0x1]
        %v1153 = vrot.slane %v1145, 1
        %v1154 = vrot.slane %v1146, 1
        %v1155 = vsel %vm576, %v1153, %v1154
        %v1156 = vrot.slane %v1137, 1
        %v1157 = vrot.slane %v1139, 1
        %v1158 = vsel %vm576, %v1156, %v1157
        %v1159 = vrot.slane %v1138, 1
        %v1160 = vrot.slane %v1140, 1
        %v1161 = vsel %vm576, %v1159, %v1160
        %1162 = vrot.lane.b32.xlu0 %v1155, 16
        %v1163 = vpop.permute.xlu0 %1162
        %1164 = vrot.lane.b32.xlu0 %v1158, 16
        %v1165 = vpop.permute.xlu0 %1164
        %1166 = vrot.lane.b32.xlu0 %v1161, 16
        %v1167 = vpop.permute.xlu0 %1166
        %v1168 = vsel %vm592, %v1163, %v1165
        %v1169 = vsel %vm592, %v1165, %v1167
        %v1172 = vadd.f32 %v1143, %v1168
        %v1173 = vadd.f32 %v1144, %v1169
        %v1174 = vld [vmem:[#allocation4 + $0x18] sm:$0xfe]
        %v1175 = vld [vmem:[#allocation4 + $0x38] sm:$0x1]
        %v1178 = vrot.slane %v1174, 1
        %v1179 = vrot.slane %v1175, 1
        %v1180 = vsel %vm576, %v1178, %v1179
        %1181 = vrot.lane.b32.xlu0 %v1158, 112
        %v1182 = vpop.permute.xlu0 %1181
        %1183 = vrot.lane.b32.xlu0 %v1161, 112
        %v1184 = vpop.permute.xlu0 %1183
        %1185 = vrot.lane.b32.xlu0 %v1180, 112
        %v1186 = vpop.permute.xlu0 %1185
        %v1187 = vsel %vm612, %v1182, %v1184
        %v1188 = vsel %vm612, %v1184, %v1186
        %v1191 = vadd.f32 %v1172, %v1187
        %v1192 = vadd.f32 %v1173, %v1188
        %v1193 = vmul.f32 %v1145, %v622
        %v1194 = vmul.f32 %v1137, %v626
        %v1195 = vmul.f32 %v1138, %v624
        %v1196 = vmul.f32 %v1146, %v622
        %v1197 = vmul.f32 %v1139, %v626
        %v1198 = vmul.f32 %v1140, %v624
        %v1205 = vrot.slane %v1193, 1
        %v1206 = vrot.slane %v1196, 1
        %v1207 = vsel %vm576, %v1205, %v1206
        %v1208 = vrot.slane %v1194, 1
        %v1209 = vrot.slane %v1197, 1
        %v1210 = vsel %vm576, %v1208, %v1209
        %v1211 = vrot.slane %v1195, 1
        %v1212 = vrot.slane %v1198, 1
        %v1213 = vsel %vm576, %v1211, %v1212
        %1214 = vrot.lane.b32.xlu0 %v1207, 1
        %v1215 = vpop.permute.xlu0 %1214
        %1216 = vrot.lane.b32.xlu0 %v1210, 1
        %v1217 = vpop.permute.xlu0 %1216
        %1218 = vrot.lane.b32.xlu0 %v1213, 1
        %v1219 = vpop.permute.xlu0 %1218
        %v1220 = vsel %vm657, %v1215, %v1217
        %v1221 = vsel %vm657, %v1217, %v1219
        %v1224 = vadd.f32 %v1191, %v1220
        %v1225 = vadd.f32 %v1192, %v1221
        %v1226 = vmul.f32 %v1137, %v667
        %v1227 = vmul.f32 %v1138, %v670
        %v1228 = vmul.f32 %v1174, %v669
        %v1229 = vmul.f32 %v1139, %v667
        %v1230 = vmul.f32 %v1140, %v670
        %v1231 = vmul.f32 %v1175, %v669
        %v1238 = vrot.slane %v1226, 1
        %v1239 = vrot.slane %v1229, 1
        %v1240 = vsel %vm576, %v1238, %v1239
        %v1241 = vrot.slane %v1227, 1
        %v1242 = vrot.slane %v1230, 1
        %v1243 = vsel %vm576, %v1241, %v1242
        %v1244 = vrot.slane %v1228, 1
        %v1245 = vrot.slane %v1231, 1
        %v1246 = vsel %vm576, %v1244, %v1245
        %1247 = vrot.lane.b32.xlu0 %v1240, 127
        %v1248 = vpop.permute.xlu0 %1247
        %1249 = vrot.lane.b32.xlu0 %v1243, 127
        %v1250 = vpop.permute.xlu0 %1249
        %1251 = vrot.lane.b32.xlu0 %v1246, 127
        %v1252 = vpop.permute.xlu0 %1251
        %v1253 = vsel %vm625, %v1248, %v1250
        %v1254 = vsel %vm625, %v1250, %v1252
        %v1257 = vadd.f32 %v1224, %v1253
        %v1258 = vadd.f32 %v1225, %v1254
        %v1259 = vmul.f32 %v1137, 6.0
        %v1260 = vmul.f32 %v1138, 6.0
        %v1261 = vmul.f32 %v1139, 6.0
        %v1262 = vmul.f32 %v1140, 6.0
        %v1267 = vrot.slane %v1259, 1
        %v1268 = vrot.slane %v1261, 1
        %v1269 = vsel %vm576, %v1267, %v1268
        %v1270 = vrot.slane %v1260, 1
        %v1271 = vrot.slane %v1262, 1
        %v1272 = vsel %vm576, %v1270, %v1271
        %v1275 = vsub.f32 %v1257, %v1269
        %v1276 = vsub.f32 %v1258, %v1272
        %v1277 = vand.u32 2147483647, %v1275
        %v1278 = vand.u32 2147483647, %v1276
        %v1279 = vld [vmem:[#allocation5 + $0x8] sm:$0xfe]
        %v1280 = vld [vmem:[#allocation5 + $0x10] sm:$0xfe]
        %v1281 = vld [vmem:[#allocation5 + $0x28] sm:$0x1]
        %v1282 = vld [vmem:[#allocation5 + $0x30] sm:$0x1]
        %v1283 = vld [vmem:[#allocation5 + $0x8] sm:$0xff]
        %v1284 = vld [vmem:[#allocation5 + $0x10] sm:$0xff]
        %v1285 = vadd.f32 %v1283, %v1018
        %v1286 = vadd.f32 %v1284, %v1019
        %v1287 = vld [vmem:[#allocation5] sm:$0xfe]
        %v1288 = vld [vmem:[#allocation5 + $0x20] sm:$0x1]
        %v1295 = vrot.slane %v1287, 1
        %v1296 = vrot.slane %v1288, 1
        %v1297 = vsel %vm576, %v1295, %v1296
        %v1298 = vrot.slane %v1279, 1
        %v1299 = vrot.slane %v1281, 1
        %v1300 = vsel %vm576, %v1298, %v1299
        %v1301 = vrot.slane %v1280, 1
        %v1302 = vrot.slane %v1282, 1
        %v1303 = vsel %vm576, %v1301, %v1302
        %1304 = vrot.lane.b32.xlu0 %v1297, 16
        %v1305 = vpop.permute.xlu0 %1304
        %1306 = vrot.lane.b32.xlu0 %v1300, 16
        %v1307 = vpop.permute.xlu0 %1306
        %1308 = vrot.lane.b32.xlu0 %v1303, 16
        %v1309 = vpop.permute.xlu0 %1308
        %v1310 = vsel %vm592, %v1305, %v1307
        %v1311 = vsel %vm592, %v1307, %v1309
        %v1314 = vadd.f32 %v1285, %v1310
        %v1315 = vadd.f32 %v1286, %v1311
        %v1316 = vld [vmem:[#allocation5 + $0x18] sm:$0xfe]
        %v1317 = vld [vmem:[#allocation5 + $0x38] sm:$0x1]
        %v1320 = vrot.slane %v1316, 1
        %v1321 = vrot.slane %v1317, 1
        %v1322 = vsel %vm576, %v1320, %v1321
        %1323 = vrot.lane.b32.xlu0 %v1300, 112
        %v1324 = vpop.permute.xlu0 %1323
        %1325 = vrot.lane.b32.xlu0 %v1303, 112
        %v1326 = vpop.permute.xlu0 %1325
        %1327 = vrot.lane.b32.xlu0 %v1322, 112
        %v1328 = vpop.permute.xlu0 %1327
        %v1329 = vsel %vm612, %v1324, %v1326
        %v1330 = vsel %vm612, %v1326, %v1328
        %v1333 = vadd.f32 %v1314, %v1329
        %v1334 = vadd.f32 %v1315, %v1330
        %v1335 = vmul.f32 %v1287, %v622
        %v1336 = vmul.f32 %v1279, %v626
        %v1337 = vmul.f32 %v1280, %v624
        %v1338 = vmul.f32 %v1288, %v622
        %v1339 = vmul.f32 %v1281, %v626
        %v1340 = vmul.f32 %v1282, %v624
        %v1347 = vrot.slane %v1335, 1
        %v1348 = vrot.slane %v1338, 1
        %v1349 = vsel %vm576, %v1347, %v1348
        %v1350 = vrot.slane %v1336, 1
        %v1351 = vrot.slane %v1339, 1
        %v1352 = vsel %vm576, %v1350, %v1351
        %v1353 = vrot.slane %v1337, 1
        %v1354 = vrot.slane %v1340, 1
        %v1355 = vsel %vm576, %v1353, %v1354
        %1356 = vrot.lane.b32.xlu0 %v1349, 1
        %v1357 = vpop.permute.xlu0 %1356
        %1358 = vrot.lane.b32.xlu0 %v1352, 1
        %v1359 = vpop.permute.xlu0 %1358
        %1360 = vrot.lane.b32.xlu0 %v1355, 1
        %v1361 = vpop.permute.xlu0 %1360
        %v1362 = vsel %vm657, %v1357, %v1359
        %v1363 = vsel %vm657, %v1359, %v1361
        %v1366 = vadd.f32 %v1333, %v1362
        %v1367 = vadd.f32 %v1334, %v1363
        %v1368 = vmul.f32 %v1279, %v667
        %v1369 = vmul.f32 %v1280, %v670
        %v1370 = vmul.f32 %v1316, %v669
        %v1371 = vmul.f32 %v1281, %v667
        %v1372 = vmul.f32 %v1282, %v670
        %v1373 = vmul.f32 %v1317, %v669
        %v1380 = vrot.slane %v1368, 1
        %v1381 = vrot.slane %v1371, 1
        %v1382 = vsel %vm576, %v1380, %v1381
        %v1383 = vrot.slane %v1369, 1
        %v1384 = vrot.slane %v1372, 1
        %v1385 = vsel %vm576, %v1383, %v1384
        %v1386 = vrot.slane %v1370, 1
        %v1387 = vrot.slane %v1373, 1
        %v1388 = vsel %vm576, %v1386, %v1387
        %1389 = vrot.lane.b32.xlu0 %v1382, 127
        %v1390 = vpop.permute.xlu0 %1389
        %1391 = vrot.lane.b32.xlu0 %v1385, 127
        %v1392 = vpop.permute.xlu0 %1391
        %1393 = vrot.lane.b32.xlu0 %v1388, 127
        %v1394 = vpop.permute.xlu0 %1393
        %v1395 = vsel %vm625, %v1390, %v1392
        %v1396 = vsel %vm625, %v1392, %v1394
        %v1399 = vadd.f32 %v1366, %v1395
        %v1400 = vadd.f32 %v1367, %v1396
        %v1401 = vmul.f32 %v1279, 6.0
        %v1402 = vmul.f32 %v1280, 6.0
        %v1403 = vmul.f32 %v1281, 6.0
        %v1404 = vmul.f32 %v1282, 6.0
        %v1409 = vrot.slane %v1401, 1
        %v1410 = vrot.slane %v1403, 1
        %v1411 = vsel %vm576, %v1409, %v1410
        %v1412 = vrot.slane %v1402, 1
        %v1413 = vrot.slane %v1404, 1
        %v1414 = vsel %vm576, %v1412, %v1413
        %v1417 = vsub.f32 %v1399, %v1411
        %v1418 = vsub.f32 %v1400, %v1414
        %v1419 = vand.u32 2147483647, %v1417
        %v1420 = vand.u32 2147483647, %v1418
        %v1421 = vsub.f32 %v1277, %v1419
        %v1422 = vsub.f32 %v1278, %v1420
        %v1423 = vmul.f32 %v1421, %v1421
        %v1424 = vmul.f32 %v1422, %v1422
        %v1425 = vmul.f32 %v1423, %v360
        %v1426 = vmul.f32 %v1424, %v360
        %v1427 = vadd.f32 %v1425, %v1426
        %1428 = vadd.xlane.f32.xlu0 %v1427
        %v1429 = vpop.xlane.xlu0 %1428
        %v1430 = vrot.slane %v1429, 4
        %v1431 = vadd.f32 %v1429, %v1430
        %v1432 = vrot.slane %v1431, 2
        %v1433 = vadd.f32 %v1431, %v1432
        %v1434 = vrot.slane %v1433, 1
        %v1435 = vadd.f32 %v1433, %v1434
        %s1436 = vtos %v1435
        %s1437 = sadd.f32 %s1003, %s1436
        %v1438 = vld [vmem:[%s886] ss:$8 sm:$0x3]
        %v1439 = vld [vmem:[%s888] ss:$8 sm:$0x3]
        %v1440 = vadd.f32 %v1439, 0.0
        %v1441 = vld [vmem:[%s891] ss:$8 sm:$0x7]
        %1443 = vrot.lane.b32.xlu0 %v1441, 16
        %v1444 = vpop.permute.xlu0 %1443
        %v1445 = vrot.slane %v1444, 1
        %v1446 = vsel %vm592, %v1444, %v1445
        %v1448 = vadd.f32 %v1440, %v1446
        %v1449 = vld [vmem:[%s886] ss:$8 sm:$0x7]
        %1451 = vrot.lane.b32.xlu0 %v1449, 112
        %v1452 = vpop.permute.xlu0 %1451
        %v1453 = vrot.slane %v1452, 1
        %v1454 = vsel %vm612, %v1452, %v1453
        %v1456 = vadd.f32 %v1448, %v1454
        %v1457 = vmul.f32 %v1441, %v914
        %1459 = vrot.lane.b32.xlu0 %v1457, 1
        %v1460 = vpop.permute.xlu0 %1459
        %v1461 = vrot.slane %v1460, 1
        %v1462 = vsel %vm657, %v1460, %v1461
        %v1464 = vadd.f32 %v1456, %v1462
        %v1465 = vmul.f32 %v1449, %v929
        %1467 = vrot.lane.b32.xlu0 %v1465, 127
        %v1468 = vpop.permute.xlu0 %1467
        %v1469 = vrot.slane %v1468, 1
        %v1470 = vsel %vm625, %v1468, %v1469
        %v1472 = vadd.f32 %v1464, %v1470
        %v1473 = vmul.f32 %v1438, 6.0
        %v1474 = vsub.f32 %v1472, %v1473
        %v1475 = vand.u32 2147483647, %v1474
        %v1476 = vld [vmem:[%s942] ss:$8 sm:$0x3]
        %v1477 = vld [vmem:[%s944] ss:$8 sm:$0x3]
        %v1478 = vadd.f32 %v1477, 0.0
        %v1479 = vld [vmem:[%s947] ss:$8 sm:$0x7]
        %1481 = vrot.lane.b32.xlu0 %v1479, 16
        %v1482 = vpop.permute.xlu0 %1481
        %v1483 = vrot.slane %v1482, 1
        %v1484 = vsel %vm592, %v1482, %v1483
        %v1486 = vadd.f32 %v1478, %v1484
        %v1487 = vld [vmem:[%s942] ss:$8 sm:$0x7]
        %1489 = vrot.lane.b32.xlu0 %v1487, 112
        %v1490 = vpop.permute.xlu0 %1489
        %v1491 = vrot.slane %v1490, 1
        %v1492 = vsel %vm612, %v1490, %v1491
        %v1494 = vadd.f32 %v1486, %v1492
        %v1495 = vmul.f32 %v1479, %v914
        %1497 = vrot.lane.b32.xlu0 %v1495, 1
        %v1498 = vpop.permute.xlu0 %1497
        %v1499 = vrot.slane %v1498, 1
        %v1500 = vsel %vm657, %v1498, %v1499
        %v1502 = vadd.f32 %v1494, %v1500
        %v1503 = vmul.f32 %v1487, %v929
        %1505 = vrot.lane.b32.xlu0 %v1503, 127
        %v1506 = vpop.permute.xlu0 %1505
        %v1507 = vrot.slane %v1506, 1
        %v1508 = vsel %vm625, %v1506, %v1507
        %v1510 = vadd.f32 %v1502, %v1508
        %v1511 = vmul.f32 %v1476, 6.0
        %v1512 = vsub.f32 %v1510, %v1511
        %v1513 = vand.u32 2147483647, %v1512
        %v1514 = vsub.f32 %v1475, %v1513
        %v1515 = vmul.f32 %v1514, %v1514
        %v1517 = vperm.slane %v1515, 0
        %v1518 = vperm.slane %v1515, 1
        %v1521 = vsel %vm909, %v1517, 0.0
        %v1522 = vsel %vm909, %v1518, 0.0
        %v1523 = vadd.f32 %v1521, %v1522
        %1524 = vadd.xlane.f32.xlu0 %v1523
        %v1525 = vpop.xlane.xlu0 %1524
        %v1526 = vrot.slane %v1525, 4
        %v1527 = vadd.f32 %v1525, %v1526
        %v1528 = vrot.slane %v1527, 2
        %v1529 = vadd.f32 %v1527, %v1528
        %v1530 = vrot.slane %v1529, 1
        %v1531 = vadd.f32 %v1529, %v1530
        %s1532 = vtos %v1531
        %s1533 = scalar_select %p361, %s1532, 0.0
        %s1534 = sadd.f32 %s1437, %s1533
        %v1535 = vld [vmem:[%s276] sm:$0xff]
        %v1536 = vld [vmem:[%s276 + $0x8] sm:$0xff]
        %v1537 = vsub.f32 %v1535, %v279
        %v1538 = vsub.f32 %v1536, %v280
        %v1539 = vmul.f32 %v1537, 1.442695
        %v1540 = vpow.pop %v1539
        %v1541 = vmul.f32 %v1538, 1.442695
        %v1542 = vpow.pop %v1541
        %v1543 = vmul.f32 %v1540, %v311
        %v1544 = vmul.f32 %v1542, %v312
        %vm1545 = vcmp.eq.s32.totalorder %v262, 3
        %vm1546 = vcmp.eq.s32.totalorder %v263, 3
        %v1547 = vsel %vm1545, 1, 0
        %v1548 = vsel %vm1546, 1, 0
        %v1549 = vcvt.s32.f32 %v1547
        %v1550 = vcvt.s32.f32 %v1548
        %v1551 = vsel %vm1545, %v1543, 0.0
        %v1552 = vsel %vm1546, %v1544, 0.0
        %v1553 = vadd.f32 %v1551, %v1552
        %1554 = vadd.xlane.f32.xlu0 %v1553
        %v1555 = vpop.xlane.xlu0 %1554
        %v1556 = vrot.slane %v1555, 4
        %v1557 = vadd.f32 %v1555, %v1556
        %v1558 = vrot.slane %v1557, 2
        %v1559 = vadd.f32 %v1557, %v1558
        %v1560 = vrot.slane %v1559, 1
        %v1561 = vadd.f32 %v1559, %v1560
        %s1562 = vtos %v1561
        %v1563 = vadd.f32 %v1543, %v1544
        %1564 = vadd.xlane.f32.xlu0 %v1563
        %v1565 = vpop.xlane.xlu0 %1564
        %v1566 = vrot.slane %v1565, 4
        %v1567 = vadd.f32 %v1565, %v1566
        %v1568 = vrot.slane %v1567, 2
        %v1569 = vadd.f32 %v1567, %v1568
        %v1570 = vrot.slane %v1569, 1
        %v1571 = vadd.f32 %v1569, %v1570
        %s1572 = vtos %v1571
        %v1573 = vadd.f32 %v1549, %v1550
        %1574 = vadd.xlane.f32.xlu0 %v1573
        %v1575 = vpop.xlane.xlu0 %1574
        %v1576 = vrot.slane %v1575, 4
        %v1577 = vadd.f32 %v1575, %v1576
        %v1578 = vrot.slane %v1577, 2
        %v1579 = vadd.f32 %v1577, %v1578
        %v1580 = vrot.slane %v1579, 1
        %v1581 = vadd.f32 %v1579, %v1580
        %s1582 = vtos %v1581
        %v1583 = vsub.f32 1.0, %v1543
        %v1584 = vsub.f32 1.0, %v1544
        %v1585 = vsel %vm1545, %v1543, %v1583
        %v1586 = vsel %vm1546, %v1544, %v1584
        %v1587 = vsel %vm1545, 0.25, 0.75
        %v1588 = vsel %vm1546, 0.25, 0.75
        %v1589 = vsub.f32 1.0, %v1585
        %v1590 = vsub.f32 1.0, %v1586
        %v1591 = vmul.f32 %v1587, %v1589
        %v1592 = vmul.f32 %v1588, %v1590
        %v1593 = vmul.f32 %v1591, %v1589
        %v1594 = vmul.f32 %v1592, %v1590
        %v1595 = vadd.f32 %v1585, 1e-07
        %v1596 = vadd.f32 %v1586, 1e-07
        %v1597 = vlog2.pop %v1595
        %v1598 = vmul.f32 %v1597, 0.6931472
        %v1599 = vlog2.pop %v1596
        %v1600 = vmul.f32 %v1599, 0.6931472
        %v1601 = vsub.f32 0.0, %v1598
        %v1602 = vsub.f32 0.0, %v1600
        %v1603 = vmul.f32 %v1593, %v1601
        %v1604 = vmul.f32 %v1594, %v1602
        %v1605 = vadd.f32 %v1603, %v1604
        %1606 = vadd.xlane.f32.xlu0 %v1605
        %v1607 = vpop.xlane.xlu0 %1606
        %v1608 = vrot.slane %v1607, 4
        %v1609 = vadd.f32 %v1607, %v1608
        %v1610 = vrot.slane %v1609, 2
        %v1611 = vadd.f32 %v1609, %v1610
        %v1612 = vrot.slane %v1611, 1
        %v1613 = vadd.f32 %v1611, %v1612
        %s1614 = vtos %v1613
        %s1615 = sadd.f32 %s1084, %s1614
        %s1616 = scalar_lea.vmem [#allocation2], 12
        %v1617 = vld [vmem:[%s1616] sm:$0xf]
        %1619 = vst [vmem:[#allocation1] ss:$4 sm:$0xff] %v1617
        %v1620 = vld.sshfl [vmem:[#allocation1] sm:$0xff pattern:$0x73625140]
        %v1621 = vld.sshfl [vmem:[#allocation1 + $0x8] sm:$0xff pattern:$0x73625140]
        %1624 = vst [vmem:[#allocation4 + $0x8] sm:$0x3] %v1620
        %1625 = vst [vmem:[#allocation4 + $0x10] sm:$0x3] %v1621
        %s1626 = scalar_lea.vmem [#allocation3], 12
        %v1627 = vld [vmem:[%s1626] sm:$0xf]
        %1629 = vst [vmem:[#allocation1] ss:$4 sm:$0xff] %v1627
        %v1630 = vld.sshfl [vmem:[#allocation1] sm:$0xff pattern:$0x73625140]
        %v1631 = vld.sshfl [vmem:[#allocation1 + $0x8] sm:$0xff pattern:$0x73625140]
        %1634 = vst [vmem:[#allocation5 + $0x8] sm:$0x3] %v1630
        %1635 = vst [vmem:[#allocation5 + $0x10] sm:$0x3] %v1631
        %v1638 = vrot.slane %v1543, 6
        %v1639 = vrot.slane %v1544, 6
        %1642 = vst [vmem:[#allocation4 + $0x8] sm:$0xfc] %v1638
        %1643 = vst [vmem:[#allocation4 + $0x10] sm:$0xfc] %v1639
        %1644 = vst [vmem:[#allocation4 + $0x28] sm:$0x3] %v1638
        %1645 = vst [vmem:[#allocation4 + $0x30] sm:$0x3] %v1639
        %v1648 = vrot.slane %v1549, 6
        %v1649 = vrot.slane %v1550, 6
        %1652 = vst [vmem:[#allocation5 + $0x8] sm:$0xfc] %v1648
        %1653 = vst [vmem:[#allocation5 + $0x10] sm:$0xfc] %v1649
        %1654 = vst [vmem:[#allocation5 + $0x28] sm:$0x3] %v1648
        %1655 = vst [vmem:[#allocation5 + $0x30] sm:$0x3] %v1649
        %1656 = vst.sshfl [vmem:[#allocation1] sm:$0xff pattern:$0x73625140] %v1543
        %1657 = vst.sshfl [vmem:[#allocation1 + $0x8] sm:$0xff pattern:$0x73625140] %v1544
        %s1658 = scalar_lea.vmem [#allocation1], 3
        %v1659 = vld [vmem:[%s1658] ss:$4 sm:$0xff]
        %1661 = vst [vmem:[%s1616] sm:$0xf] %v1659
        %1662 = vst.sshfl [vmem:[#allocation1] sm:$0xff pattern:$0x73625140] %v1549
        %1663 = vst.sshfl [vmem:[#allocation1 + $0x8] sm:$0xff pattern:$0x73625140] %v1550
        %s1664 = scalar_lea.vmem [#allocation1], 3
        %v1665 = vld [vmem:[%s1664] ss:$4 sm:$0xff]
        %1667 = vst [vmem:[%s1626] sm:$0xf] %v1665
        %v1668 = vld [vmem:[#allocation4 + $0x8] sm:$0xfe]
        %v1669 = vld [vmem:[#allocation4 + $0x10] sm:$0xfe]
        %v1670 = vld [vmem:[#allocation4 + $0x28] sm:$0x1]
        %v1671 = vld [vmem:[#allocation4 + $0x30] sm:$0x1]
        %v1672 = vld [vmem:[#allocation4 + $0x8] sm:$0xff]
        %v1673 = vld [vmem:[#allocation4 + $0x10] sm:$0xff]
        %v1674 = vadd.f32 %v1672, %v1543
        %v1675 = vadd.f32 %v1673, %v1544
        %v1676 = vld [vmem:[#allocation4] sm:$0xfe]
        %v1677 = vld [vmem:[#allocation4 + $0x20] sm:$0x1]
        %v1684 = vrot.slane %v1676, 1
        %v1685 = vrot.slane %v1677, 1
        %v1686 = vsel %vm576, %v1684, %v1685
        %v1687 = vrot.slane %v1668, 1
        %v1688 = vrot.slane %v1670, 1
        %v1689 = vsel %vm576, %v1687, %v1688
        %v1690 = vrot.slane %v1669, 1
        %v1691 = vrot.slane %v1671, 1
        %v1692 = vsel %vm576, %v1690, %v1691
        %1693 = vrot.lane.b32.xlu0 %v1686, 16
        %v1694 = vpop.permute.xlu0 %1693
        %1695 = vrot.lane.b32.xlu0 %v1689, 16
        %v1696 = vpop.permute.xlu0 %1695
        %1697 = vrot.lane.b32.xlu0 %v1692, 16
        %v1698 = vpop.permute.xlu0 %1697
        %v1699 = vsel %vm592, %v1694, %v1696
        %v1700 = vsel %vm592, %v1696, %v1698
        %v1703 = vadd.f32 %v1674, %v1699
        %v1704 = vadd.f32 %v1675, %v1700
        %v1705 = vld [vmem:[#allocation4 + $0x18] sm:$0xfe]
        %v1706 = vld [vmem:[#allocation4 + $0x38] sm:$0x1]
        %v1709 = vrot.slane %v1705, 1
        %v1710 = vrot.slane %v1706, 1
        %v1711 = vsel %vm576, %v1709, %v1710
        %1712 = vrot.lane.b32.xlu0 %v1689, 112
        %v1713 = vpop.permute.xlu0 %1712
        %1714 = vrot.lane.b32.xlu0 %v1692, 112
        %v1715 = vpop.permute.xlu0 %1714
        %1716 = vrot.lane.b32.xlu0 %v1711, 112
        %v1717 = vpop.permute.xlu0 %1716
        %v1718 = vsel %vm612, %v1713, %v1715
        %v1719 = vsel %vm612, %v1715, %v1717
        %v1722 = vadd.f32 %v1703, %v1718
        %v1723 = vadd.f32 %v1704, %v1719
        %v1724 = vmul.f32 %v1676, %v622
        %v1725 = vmul.f32 %v1668, %v626
        %v1726 = vmul.f32 %v1669, %v624
        %v1727 = vmul.f32 %v1677, %v622
        %v1728 = vmul.f32 %v1670, %v626
        %v1729 = vmul.f32 %v1671, %v624
        %v1736 = vrot.slane %v1724, 1
        %v1737 = vrot.slane %v1727, 1
        %v1738 = vsel %vm576, %v1736, %v1737
        %v1739 = vrot.slane %v1725, 1
        %v1740 = vrot.slane %v1728, 1
        %v1741 = vsel %vm576, %v1739, %v1740
        %v1742 = vrot.slane %v1726, 1
        %v1743 = vrot.slane %v1729, 1
        %v1744 = vsel %vm576, %v1742, %v1743
        %1745 = vrot.lane.b32.xlu0 %v1738, 1
        %v1746 = vpop.permute.xlu0 %1745
        %1747 = vrot.lane.b32.xlu0 %v1741, 1
        %v1748 = vpop.permute.xlu0 %1747
        %1749 = vrot.lane.b32.xlu0 %v1744, 1
        %v1750 = vpop.permute.xlu0 %1749
        %v1751 = vsel %vm657, %v1746, %v1748
        %v1752 = vsel %vm657, %v1748, %v1750
        %v1755 = vadd.f32 %v1722, %v1751
        %v1756 = vadd.f32 %v1723, %v1752
        %v1757 = vmul.f32 %v1668, %v667
        %v1758 = vmul.f32 %v1669, %v670
        %v1759 = vmul.f32 %v1705, %v669
        %v1760 = vmul.f32 %v1670, %v667
        %v1761 = vmul.f32 %v1671, %v670
        %v1762 = vmul.f32 %v1706, %v669
        %v1769 = vrot.slane %v1757, 1
        %v1770 = vrot.slane %v1760, 1
        %v1771 = vsel %vm576, %v1769, %v1770
        %v1772 = vrot.slane %v1758, 1
        %v1773 = vrot.slane %v1761, 1
        %v1774 = vsel %vm576, %v1772, %v1773
        %v1775 = vrot.slane %v1759, 1
        %v1776 = vrot.slane %v1762, 1
        %v1777 = vsel %vm576, %v1775, %v1776
        %1778 = vrot.lane.b32.xlu0 %v1771, 127
        %v1779 = vpop.permute.xlu0 %1778
        %1780 = vrot.lane.b32.xlu0 %v1774, 127
        %v1781 = vpop.permute.xlu0 %1780
        %1782 = vrot.lane.b32.xlu0 %v1777, 127
        %v1783 = vpop.permute.xlu0 %1782
        %v1784 = vsel %vm625, %v1779, %v1781
        %v1785 = vsel %vm625, %v1781, %v1783
        %v1788 = vadd.f32 %v1755, %v1784
        %v1789 = vadd.f32 %v1756, %v1785
        %v1790 = vmul.f32 %v1668, 6.0
        %v1791 = vmul.f32 %v1669, 6.0
        %v1792 = vmul.f32 %v1670, 6.0
        %v1793 = vmul.f32 %v1671, 6.0
        %v1798 = vrot.slane %v1790, 1
        %v1799 = vrot.slane %v1792, 1
        %v1800 = vsel %vm576, %v1798, %v1799
        %v1801 = vrot.slane %v1791, 1
        %v1802 = vrot.slane %v1793, 1
        %v1803 = vsel %vm576, %v1801, %v1802
        %v1806 = vsub.f32 %v1788, %v1800
        %v1807 = vsub.f32 %v1789, %v1803
        %v1808 = vand.u32 2147483647, %v1806
        %v1809 = vand.u32 2147483647, %v1807
        %v1810 = vld [vmem:[#allocation5 + $0x8] sm:$0xfe]
        %v1811 = vld [vmem:[#allocation5 + $0x10] sm:$0xfe]
        %v1812 = vld [vmem:[#allocation5 + $0x28] sm:$0x1]
        %v1813 = vld [vmem:[#allocation5 + $0x30] sm:$0x1]
        %v1814 = vld [vmem:[#allocation5 + $0x8] sm:$0xff]
        %v1815 = vld [vmem:[#allocation5 + $0x10] sm:$0xff]
        %v1816 = vadd.f32 %v1814, %v1549
        %v1817 = vadd.f32 %v1815, %v1550
        %v1818 = vld [vmem:[#allocation5] sm:$0xfe]
        %v1819 = vld [vmem:[#allocation5 + $0x20] sm:$0x1]
        %v1826 = vrot.slane %v1818, 1
        %v1827 = vrot.slane %v1819, 1
        %v1828 = vsel %vm576, %v1826, %v1827
        %v1829 = vrot.slane %v1810, 1
        %v1830 = vrot.slane %v1812, 1
        %v1831 = vsel %vm576, %v1829, %v1830
        %v1832 = vrot.slane %v1811, 1
        %v1833 = vrot.slane %v1813, 1
        %v1834 = vsel %vm576, %v1832, %v1833
        %1835 = vrot.lane.b32.xlu0 %v1828, 16
        %v1836 = vpop.permute.xlu0 %1835
        %1837 = vrot.lane.b32.xlu0 %v1831, 16
        %v1838 = vpop.permute.xlu0 %1837
        %1839 = vrot.lane.b32.xlu0 %v1834, 16
        %v1840 = vpop.permute.xlu0 %1839
        %v1841 = vsel %vm592, %v1836, %v1838
        %v1842 = vsel %vm592, %v1838, %v1840
        %v1845 = vadd.f32 %v1816, %v1841
        %v1846 = vadd.f32 %v1817, %v1842
        %v1847 = vld [vmem:[#allocation5 + $0x18] sm:$0xfe]
        %v1848 = vld [vmem:[#allocation5 + $0x38] sm:$0x1]
        %v1851 = vrot.slane %v1847, 1
        %v1852 = vrot.slane %v1848, 1
        %v1853 = vsel %vm576, %v1851, %v1852
        %1854 = vrot.lane.b32.xlu0 %v1831, 112
        %v1855 = vpop.permute.xlu0 %1854
        %1856 = vrot.lane.b32.xlu0 %v1834, 112
        %v1857 = vpop.permute.xlu0 %1856
        %1858 = vrot.lane.b32.xlu0 %v1853, 112
        %v1859 = vpop.permute.xlu0 %1858
        %v1860 = vsel %vm612, %v1855, %v1857
        %v1861 = vsel %vm612, %v1857, %v1859
        %v1864 = vadd.f32 %v1845, %v1860
        %v1865 = vadd.f32 %v1846, %v1861
        %v1866 = vmul.f32 %v1818, %v622
        %v1867 = vmul.f32 %v1810, %v626
        %v1868 = vmul.f32 %v1811, %v624
        %v1869 = vmul.f32 %v1819, %v622
        %v1870 = vmul.f32 %v1812, %v626
        %v1871 = vmul.f32 %v1813, %v624
        %v1878 = vrot.slane %v1866, 1
        %v1879 = vrot.slane %v1869, 1
        %v1880 = vsel %vm576, %v1878, %v1879
        %v1881 = vrot.slane %v1867, 1
        %v1882 = vrot.slane %v1870, 1
        %v1883 = vsel %vm576, %v1881, %v1882
        %v1884 = vrot.slane %v1868, 1
        %v1885 = vrot.slane %v1871, 1
        %v1886 = vsel %vm576, %v1884, %v1885
        %1887 = vrot.lane.b32.xlu0 %v1880, 1
        %v1888 = vpop.permute.xlu0 %1887
        %1889 = vrot.lane.b32.xlu0 %v1883, 1
        %v1890 = vpop.permute.xlu0 %1889
        %1891 = vrot.lane.b32.xlu0 %v1886, 1
        %v1892 = vpop.permute.xlu0 %1891
        %v1893 = vsel %vm657, %v1888, %v1890
        %v1894 = vsel %vm657, %v1890, %v1892
        %v1897 = vadd.f32 %v1864, %v1893
        %v1898 = vadd.f32 %v1865, %v1894
        %v1899 = vmul.f32 %v1810, %v667
        %v1900 = vmul.f32 %v1811, %v670
        %v1901 = vmul.f32 %v1847, %v669
        %v1902 = vmul.f32 %v1812, %v667
        %v1903 = vmul.f32 %v1813, %v670
        %v1904 = vmul.f32 %v1848, %v669
        %v1911 = vrot.slane %v1899, 1
        %v1912 = vrot.slane %v1902, 1
        %v1913 = vsel %vm576, %v1911, %v1912
        %v1914 = vrot.slane %v1900, 1
        %v1915 = vrot.slane %v1903, 1
        %v1916 = vsel %vm576, %v1914, %v1915
        %v1917 = vrot.slane %v1901, 1
        %v1918 = vrot.slane %v1904, 1
        %v1919 = vsel %vm576, %v1917, %v1918
        %1920 = vrot.lane.b32.xlu0 %v1913, 127
        %v1921 = vpop.permute.xlu0 %1920
        %1922 = vrot.lane.b32.xlu0 %v1916, 127
        %v1923 = vpop.permute.xlu0 %1922
        %1924 = vrot.lane.b32.xlu0 %v1919, 127
        %v1925 = vpop.permute.xlu0 %1924
        %v1926 = vsel %vm625, %v1921, %v1923
        %v1927 = vsel %vm625, %v1923, %v1925
        %v1930 = vadd.f32 %v1897, %v1926
        %v1931 = vadd.f32 %v1898, %v1927
        %v1932 = vmul.f32 %v1810, 6.0
        %v1933 = vmul.f32 %v1811, 6.0
        %v1934 = vmul.f32 %v1812, 6.0
        %v1935 = vmul.f32 %v1813, 6.0
        %v1940 = vrot.slane %v1932, 1
        %v1941 = vrot.slane %v1934, 1
        %v1942 = vsel %vm576, %v1940, %v1941
        %v1943 = vrot.slane %v1933, 1
        %v1944 = vrot.slane %v1935, 1
        %v1945 = vsel %vm576, %v1943, %v1944
        %v1948 = vsub.f32 %v1930, %v1942
        %v1949 = vsub.f32 %v1931, %v1945
        %v1950 = vand.u32 2147483647, %v1948
        %v1951 = vand.u32 2147483647, %v1949
        %v1952 = vsub.f32 %v1808, %v1950
        %v1953 = vsub.f32 %v1809, %v1951
        %v1954 = vmul.f32 %v1952, %v1952
        %v1955 = vmul.f32 %v1953, %v1953
        %v1956 = vmul.f32 %v1954, %v360
        %v1957 = vmul.f32 %v1955, %v360
        %v1958 = vadd.f32 %v1956, %v1957
        %1959 = vadd.xlane.f32.xlu0 %v1958
        %v1960 = vpop.xlane.xlu0 %1959
        %v1961 = vrot.slane %v1960, 4
        %v1962 = vadd.f32 %v1960, %v1961
        %v1963 = vrot.slane %v1962, 2
        %v1964 = vadd.f32 %v1962, %v1963
        %v1965 = vrot.slane %v1964, 1
        %v1966 = vadd.f32 %v1964, %v1965
        %s1967 = vtos %v1966
        %s1968 = sadd.f32 %s1534, %s1967
        %v1969 = vld [vmem:[%s886] ss:$8 sm:$0x3]
        %v1970 = vld [vmem:[%s888] ss:$8 sm:$0x3]
        %v1971 = vadd.f32 %v1970, 0.0
        %v1972 = vld [vmem:[%s891] ss:$8 sm:$0x7]
        %1974 = vrot.lane.b32.xlu0 %v1972, 16
        %v1975 = vpop.permute.xlu0 %1974
        %v1976 = vrot.slane %v1975, 1
        %v1977 = vsel %vm592, %v1975, %v1976
        %v1979 = vadd.f32 %v1971, %v1977
        %v1980 = vld [vmem:[%s886] ss:$8 sm:$0x7]
        %1982 = vrot.lane.b32.xlu0 %v1980, 112
        %v1983 = vpop.permute.xlu0 %1982
        %v1984 = vrot.slane %v1983, 1
        %v1985 = vsel %vm612, %v1983, %v1984
        %v1987 = vadd.f32 %v1979, %v1985
        %v1988 = vmul.f32 %v1972, %v914
        %1990 = vrot.lane.b32.xlu0 %v1988, 1
        %v1991 = vpop.permute.xlu0 %1990
        %v1992 = vrot.slane %v1991, 1
        %v1993 = vsel %vm657, %v1991, %v1992
        %v1995 = vadd.f32 %v1987, %v1993
        %v1996 = vmul.f32 %v1980, %v929
        %1998 = vrot.lane.b32.xlu0 %v1996, 127
        %v1999 = vpop.permute.xlu0 %1998
        %v2000 = vrot.slane %v1999, 1
        %v2001 = vsel %vm625, %v1999, %v2000
        %v2003 = vadd.f32 %v1995, %v2001
        %v2004 = vmul.f32 %v1969, 6.0
        %v2005 = vsub.f32 %v2003, %v2004
        %v2006 = vand.u32 2147483647, %v2005
        %v2007 = vld [vmem:[%s942] ss:$8 sm:$0x3]
        %v2008 = vld [vmem:[%s944] ss:$8 sm:$0x3]
        %v2009 = vadd.f32 %v2008, 0.0
        %v2010 = vld [vmem:[%s947] ss:$8 sm:$0x7]
        %2012 = vrot.lane.b32.xlu0 %v2010, 16
        %v2013 = vpop.permute.xlu0 %2012
        %v2014 = vrot.slane %v2013, 1
        %v2015 = vsel %vm592, %v2013, %v2014
        %v2017 = vadd.f32 %v2009, %v2015
        %v2018 = vld [vmem:[%s942] ss:$8 sm:$0x7]
        %2020 = vrot.lane.b32.xlu0 %v2018, 112
        %v2021 = vpop.permute.xlu0 %2020
        %v2022 = vrot.slane %v2021, 1
        %v2023 = vsel %vm612, %v2021, %v2022
        %v2025 = vadd.f32 %v2017, %v2023
        %v2026 = vmul.f32 %v2010, %v914
        %2028 = vrot.lane.b32.xlu0 %v2026, 1
        %v2029 = vpop.permute.xlu0 %2028
        %v2030 = vrot.slane %v2029, 1
        %v2031 = vsel %vm657, %v2029, %v2030
        %v2033 = vadd.f32 %v2025, %v2031
        %v2034 = vmul.f32 %v2018, %v929
        %2036 = vrot.lane.b32.xlu0 %v2034, 127
        %v2037 = vpop.permute.xlu0 %2036
        %v2038 = vrot.slane %v2037, 1
        %v2039 = vsel %vm625, %v2037, %v2038
        %v2041 = vadd.f32 %v2033, %v2039
        %v2042 = vmul.f32 %v2007, 6.0
        %v2043 = vsub.f32 %v2041, %v2042
        %v2044 = vand.u32 2147483647, %v2043
        %v2045 = vsub.f32 %v2006, %v2044
        %v2046 = vmul.f32 %v2045, %v2045
        %v2048 = vperm.slane %v2046, 0
        %v2049 = vperm.slane %v2046, 1
        %v2052 = vsel %vm909, %v2048, 0.0
        %v2053 = vsel %vm909, %v2049, 0.0
        %v2054 = vadd.f32 %v2052, %v2053
        %2055 = vadd.xlane.f32.xlu0 %v2054
        %v2056 = vpop.xlane.xlu0 %2055
        %v2057 = vrot.slane %v2056, 4
        %v2058 = vadd.f32 %v2056, %v2057
        %v2059 = vrot.slane %v2058, 2
        %v2060 = vadd.f32 %v2058, %v2059
        %v2061 = vrot.slane %v2060, 1
        %v2062 = vadd.f32 %v2060, %v2061
        %s2063 = vtos %v2062
        %s2064 = scalar_select %p361, %s2063, 0.0
        %s2065 = sadd.f32 %s1968, %s2064
        %vm2066 = vcmp.eq.s32.totalorder %v314, 0
        %v2067 = vstv %s381
        %v2068 = vsel %vm2066, %v2067, 0.0
        %v2069 = vadd.f32 %v2068, 0.0
        %vm2070 = vcmp.eq.s32.totalorder %v314, 1
        %v2071 = vstv %s391
        %v2072 = vsel %vm2070, %v2071, 0.0
        %v2073 = vadd.f32 %v2069, %v2072
        %vm2074 = vcmp.eq.s32.totalorder %v314, 2
        %v2075 = vstv %s401
        %v2076 = vsel %vm2074, %v2075, 0.0
        %v2077 = vadd.f32 %v2073, %v2076
        %vm2078 = vcmp.eq.s32.totalorder %v314, 3
        %v2079 = vstv %s454
        %v2080 = vsel %vm2078, %v2079, 0.0
        %v2081 = vadd.f32 %v2077, %v2080
        %vm2082 = vcmp.eq.s32.totalorder %v314, 4
        %v2083 = vstv %s464
        %v2084 = vsel %vm2082, %v2083, 0.0
        %v2085 = vadd.f32 %v2081, %v2084
        %vm2086 = vcmp.eq.s32.totalorder %v314, 5
        %v2087 = vstv %s474
        %v2088 = vsel %vm2086, %v2087, 0.0
        %v2089 = vadd.f32 %v2085, %v2088
        %vm2090 = vcmp.eq.s32.totalorder %v314, 6
        %v2091 = vstv %s1031
        %v2092 = vsel %vm2090, %v2091, 0.0
        %v2093 = vadd.f32 %v2089, %v2092
        %vm2094 = vcmp.eq.s32.totalorder %v314, 7
        %v2095 = vstv %s1041
        %v2096 = vsel %vm2094, %v2095, 0.0
        %v2097 = vadd.f32 %v2093, %v2096
        %vm2098 = vcmp.eq.s32.totalorder %v314, 8
        %v2099 = vstv %s1051
        %v2100 = vsel %vm2098, %v2099, 0.0
        %v2101 = vadd.f32 %v2097, %v2100
        %vm2102 = vcmp.eq.s32.totalorder %v314, 9
        %v2103 = vstv %s1562
        %v2104 = vsel %vm2102, %v2103, 0.0
        %v2105 = vadd.f32 %v2101, %v2104
        %vm2106 = vcmp.eq.s32.totalorder %v314, 10
        %v2107 = vstv %s1572
        %v2108 = vsel %vm2106, %v2107, 0.0
        %v2109 = vadd.f32 %v2105, %v2108
        %vm2110 = vcmp.eq.s32.totalorder %v314, 11
        %v2111 = vstv %s1582
        %v2112 = vsel %vm2110, %v2111, 0.0
        %v2113 = vadd.f32 %v2109, %v2112
        %vm2114 = vcmp.eq.s32.totalorder %v314, 12
        %v2115 = vstv %s1615
        %v2116 = vsel %vm2114, %v2115, 0.0
        %v2117 = vadd.f32 %v2113, %v2116
        %vm2118 = vcmp.eq.s32.totalorder %v314, 13
        %v2119 = vstv %s2065
        %v2120 = vsel %vm2118, %v2119, 0.0
        %v2121 = vadd.f32 %v2117, %v2120
        %vm2122 = vcmask 106496
        %2123 = vst.msk [vmem:[%s233] sm:$0x1] %vm2122, %v2121
        %p2124 = scmp.lt.s32.totalorder %s17, 1
        %s2125 = scalar_select %p2124, %s17, 1
        %p2126 = scmp.lt.s32.totalorder %s18, 1
        %s2127 = scalar_select %p2126, %s18, 1
        %s2128 = smul.addr %s2125, 2
        %s2129 = sadd.s32 %s2127, %s2128
        %s2130 = scalar_lea.vmem %s2, %s2129
        // Predicated region
        $region56: #{combined_loss.1} parent=46 // pred_check
          %p2131 = pneg %p101
        $region57: #{combined_loss.1} parent=46 // pred_check_branch
          %2133 = sbr.rel (%p2131) target = $region59
        $region58: #{combined_loss.1} parent=46 // pred_region
          _
        $region59: #{combined_loss.1} parent=46 // pred_fallthru
          _
      $region47: #{combined_loss.1} parent=5 // pred_fallthru
        _
      %p2134 = scmp.le.s32.totalorder 2, %s8
      // Predicated region
      $region60: #{combined_loss.1} parent=5 // pred_check
        %p2135 = pneg %p2134
      $region61: #{combined_loss.1} parent=5 // pred_check_branch
        %2137 = sbr.rel (%p2135) target = $region63
      $region62: #{combined_loss.1} parent=5 // pred_region
        %s2138 = ssub.s32 %s8, 2
        // Predicated region
        $region64: #{combined_loss.1} parent=62 // pred_check
          %p2139 = pneg %p107
        $region65: #{combined_loss.1} parent=62 // pred_check_branch
          %2141 = sbr.rel (%p2139) target = $region67
        $region66: #{combined_loss.1} parent=62 // pred_region
          %p2142 = scmp.lt.s32.totalorder %s19, 1
          %s2143 = scalar_select %p2142, %s19, 1
          %p2144 = scmp.lt.s32.totalorder %s20, 1
          %s2145 = scalar_select %p2144, %s20, 1
          %s2146 = smul.addr %s2143, 2
          %s2147 = sadd.s32 %s2145, %s2146
          %s2148 = scalar_lea.vmem %s2, %s2147
        $region67: #{combined_loss.1} parent=62 // pred_fallthru
          _
      $region63: #{combined_loss.1} parent=5 // pred_fallthru
        _
    $region6: #{combined_loss.1} parent=1 // loop_footer
      %s12 = sadd.s32 1, %s8
    $region7: #{combined_loss.1} parent=1 // loop_footer_branch
      %7 = sbr.rel target = $region3
    $region8: #{combined_loss.1} parent=1 // loop_exit
      _

</llo_original>
